<compile_context>
chip_gen: v5e
topology: v5e:2x2
jax: 0.10.0
libtpu: 0.0.40
codegen_flags: <defaults>
</compile_context>

<pallas_src>
import functools

import jax
import jax.numpy as jnp
from jax.experimental import pallas as pl
from jax.experimental.pallas import tpu as pltpu


# ----------------------------------------------------------------------------
# Fused Pallas kernel: conv -> feat linear -> GRU -> fc, all VMEM-resident.
# ----------------------------------------------------------------------------
def _rollout_encoder_kernel(
        patches_ref,   # (C*9*N, HW)      bf16  im2col patches, rows (k, n) k-major
        w2_ref,        # (Cout*N, C*9*N)  bf16  block-diagonal conv weight, rows (co, n)
        convb_ref,     # (Cout*N, 1)      f32   per-row conv bias
        featw_ref,     # (Cout*HW, FEAT)  bf16  feature Linear weight (original row order)
        featb_ref,     # (1, FEAT)        f32
        rew_ref,       # (K*Bp, R)        f32   zero-padded rewards, row t*Bp + b
        ppad_ref,      # (K*Bp, N)        f32   row-padding matrix (aligned GRU slabs)
        wihx_ref,      # (FEAT, 3*HID)    f32   GRU W_ih rows for the feature part
        wihr_ref,      # (R,    3*HID)    f32   GRU W_ih rows for the reward part
        bih_ref,       # (1, 3*HID)       f32   b_ih + [b_hr, b_hz, 0]
        whh_ref,       # (HID, 3*HID)     f32
        bhn_ref,       # (1, HID)         f32   b_hn (must stay inside r*(...))
        fcw_ref,       # (HID, EMBED)     f32
        fcb_ref,       # (1, EMBED)       f32
        out_ref,       # (B, EMBED)       f32
        *, n_img, c_out, hid, k_steps, batch, bp):
    f32 = jnp.float32
    bf16 = jnp.bfloat16

    # --- Conv2d(C, Cout, 3, padding=1) + ReLU ------------------------------------
    # Block-diagonal weight => output rows ordered (co, n): every later channel
    # extraction is a contiguous, sublane-tile-aligned row block.
    y = jnp.dot(w2_ref[...], patches_ref[...], preferred_element_type=f32)
    y = jnp.maximum(y + convb_ref[...], 0.0).astype(bf16)      # (Cout*N, HW)

    # --- NCHW flatten: lane-concat the per-channel row blocks ---------------------
    yt = jnp.concatenate(
        [y[co * n_img:(co + 1) * n_img, :] for co in range(c_out)],
        axis=1)                                                # (N, Cout*HW)

    # --- feature Linear + ReLU: one K = Cout*HW MXU matmul -------------------------
    feats = jnp.dot(yt, featw_ref[...], preferred_element_type=f32)
    feats = jnp.maximum(feats + featb_ref[...], 0.0)           # (N, FEAT)

    # --- pad rows so every GRU step reads an 8-row aligned slab --------------------
    feats_pad = jnp.dot(ppad_ref[...], feats, preferred_element_type=f32)  # (K*Bp, FEAT)

    # --- GRU input projection hoisted out of the recurrence (h-independent) --------
    gi_pad = (jnp.dot(feats_pad, wihx_ref[...], preferred_element_type=f32)
              + jnp.dot(rew_ref[...], wihr_ref[...], preferred_element_type=f32)
              + bih_ref[...])                                  # (K*Bp, 3*HID)

    # --- GRU recurrence over the reversed rollout (PyTorch gate order [r|z|n]) -----
    whh = whh_ref[...]
    bhn = jnp.broadcast_to(bhn_ref[...], (bp, hid))            # hoisted broadcast
    h = jnp.zeros((bp, hid), f32)
    for s in range(k_steps):                                   # statically unrolled (K=8)
        t = k_steps - 1 - s                                    # reversed time order
        gi = gi_pad[t * bp:(t + 1) * bp, :]                    # aligned (Bp, 3*HID) slab
        gh = jnp.dot(h, whh, preferred_element_type=f32)
        r = jax.nn.sigmoid(gi[:, 0 * hid:1 * hid] + gh[:, 0 * hid:1 * hid])
        z = jax.nn.sigmoid(gi[:, 1 * hid:2 * hid] + gh[:, 1 * hid:2 * hid])
        n = jnp.tanh(gi[:, 2 * hid:3 * hid] + r * (gh[:, 2 * hid:3 * hid] + bhn))
        h = (1.0 - z) * n + z * h

    # --- fc_rollout_embeddings fused into the epilogue ----------------------------
    out = jnp.dot(h, fcw_ref[...], preferred_element_type=f32) + fcb_ref[...]
    out_ref[...] = out[:batch, :].astype(out_ref.dtype)


# ----------------------------------------------------------------------------
# Host wrapper: data staging (im2col, weight re-layout) + single pallas_call.
# ----------------------------------------------------------------------------
@functools.partial(jax.jit, static_argnums=(3, 4))
def rollout_encoder_forward(states, rewards, params, nbr_states_to_encode, input_shape):
    """
    states : (rollout_length, batch, C, H, W)  float32
    rewards: (rollout_length, batch, reward_size) float32
    returns: (batch, embedding_size)
    """
    C, H, W = input_shape
    K = nbr_states_to_encode
    B = states.shape[1]
    N = K * B
    HW = H * W
    Bp = ((B + 7) // 8) * 8                 # padded per-step batch (sublane aligned)

    f32 = jnp.float32
    bf16 = jnp.bfloat16

    conv_w = params["conv_w"]               # (Cout, C, 3, 3)
    c_out = conv_w.shape[0]
    feat_dim = params["feat_w"].shape[1]
    hid = params["gru_whh"].shape[0]
    embed = params["fc_w"].shape[1]

    # ---- im2col: transpose the 64 KB source BEFORE the 9x expansion --------------
    s2e = states[-K:].reshape(N, C, H, W).astype(f32)          # row n = t*B + b
    s2e = jnp.transpose(s2e, (1, 0, 2, 3))                     # (C, N, H, W)
    xp = jnp.pad(s2e, ((0, 0), (0, 0), (1, 1), (1, 1)))
    cols = [xp[:, :, kh:kh + H, kw:kw + W] for kh in range(3) for kw in range(3)]
    pat = jnp.stack(cols, axis=1)                              # (C, 9, N, H, W)
    patches = pat.reshape(C * 9 * N, HW).astype(bf16)          # rows k*N + n

    # ---- block-diagonal conv weight: rows (co, n), cols (k, n') -------------------
    convw_flat = conv_w.reshape(c_out, C * 9).astype(f32)
    eye_n = jnp.eye(N, dtype=f32)
    w2 = (convw_flat[:, None, :, None] * eye_n[None, :, None, :]
          ).reshape(c_out * N, C * 9 * N).astype(bf16)
    convb2 = jnp.repeat(params["conv_b"].astype(f32), N).reshape(c_out * N, 1)

    featw = params["feat_w"].astype(bf16)                      # (Cout*HW, FEAT), (co,p) rows
    featb = params["feat_b"].reshape(1, feat_dim).astype(f32)

    # ---- rewards zero-padded to Bp rows per step ----------------------------------
    rew = rewards[-K:].astype(f32)                             # (K, B, R)
    R = rew.shape[-1]
    rew_pad = jnp.pad(rew, ((0, 0), (0, Bp - B), (0, 0))).reshape(K * Bp, R)

    # ---- row-padding matrix: (K*Bp, N), row t*Bp+b picks image t*B+b (b<B) --------
    r_idx = jnp.arange(K * Bp)
    t_idx = r_idx // Bp
    b_idx = r_idx % Bp
    n_tgt = t_idx * B + b_idx
    ppad = ((b_idx[:, None] < B)
            & (n_tgt[:, None] == jnp.arange(N)[None, :])).astype(f32)

    # ---- GRU / fc weights; fold b_hr, b_hz into b_ih (b_hn kept separate) ---------
    wih = params["gru_wih"].astype(f32)
    wihx = wih[:feat_dim]                                      # (FEAT, 3H)
    wihr = wih[feat_dim:]                                      # (R, 3H)
    bih_c = params["gru_bih"].astype(f32) + jnp.concatenate(
        [params["gru_bhh"][:, :2 * hid].astype(f32),
         jnp.zeros((1, hid), f32)], axis=1)
    whh = params["gru_whh"].astype(f32)
    bhn = params["gru_bhh"][:, 2 * hid:].astype(f32)           # (1, HID)
    fcw = params["fc_w"].astype(f32)
    fcb = params["fc_b"].reshape(1, embed).astype(f32)

    args = (patches, w2, convb2, featw, featb, rew_pad, ppad,
            wihx, wihr, bih_c, whh, bhn, fcw, fcb)

    def full_spec(shape):
        zeros = (0,) * len(shape)
        return pl.BlockSpec(shape, lambda i, _z=zeros: _z)

    kernel = functools.partial(
        _rollout_encoder_kernel,
        n_img=N, c_out=c_out, hid=hid, k_steps=K, batch=B, bp=Bp)

    return pl.pallas_call(
        kernel,
        out_shape=jax.ShapeDtypeStruct((B, embed), jnp.float32),
        grid=(1,),
        in_specs=[full_spec(a.shape) for a in args],
        out_specs=full_spec((B, embed)),
        compiler_params=pltpu.CompilerParams(dimension_semantics=("arbitrary",)),
    )(*args)


# ----------------------------------------------------------------------------
# Deterministic parameter construction (same layout/semantics as before).
# ----------------------------------------------------------------------------
def init_params(key, input_shape, feat_dim, reward_size, hidden, embed, conv_out=8):
    C, H, W = input_shape
    ks = jax.random.split(key, 10)
    s = 0.1
    p = {}
    # feature_encoder: Conv2d(C, conv_out, 3, padding=1)+ReLU -> flatten -> Linear+ReLU
    p["conv_w"] = s * jax.random.normal(ks[0], (conv_out, C, 3, 3), jnp.float32)
    p["conv_b"] = s * jax.random.normal(ks[1], (conv_out,), jnp.float32)
    p["feat_w"] = s * jax.random.normal(ks[2], (conv_out * H * W, feat_dim), jnp.float32)
    p["feat_b"] = s * jax.random.normal(ks[3], (feat_dim,), jnp.float32)
    # rollout_feature_encoder: GRU(input=feat_dim+reward_size, hidden=hidden), gates [r|z|n]
    in_sz = feat_dim + reward_size
    p["gru_wih"] = s * jax.random.normal(ks[4], (in_sz, 3 * hidden), jnp.float32)
    p["gru_whh"] = s * jax.random.normal(ks[5], (hidden, 3 * hidden), jnp.float32)
    p["gru_bih"] = s * jax.random.normal(ks[6], (1, 3 * hidden), jnp.float32)
    p["gru_bhh"] = s * jax.random.normal(ks[7], (1, 3 * hidden), jnp.float32)
    # fc_rollout_embeddings: Linear(hidden, embed)
    p["fc_w"] = s * jax.random.normal(ks[8], (hidden, embed), jnp.float32)
    p["fc_b"] = s * jax.random.normal(ks[9], (embed,), jnp.float32)
    return p


# ----------------------------------------------------------------------------
if __name__ == "__main__":
    rollout_length = 10
    nbr_states_to_encode = 8
    batch = 2
    input_shape = (4, 16, 16)          # (C, H, W)
    reward_size = 2
    feat_dim = 32
    hidden = 32                        # rollout_encoder_encoder_nbr_hidden_units
    embed = 32                         # rollout_encoder_embedding_size

    key = jax.random.PRNGKey(0)
    k_s, k_r, k_p = jax.random.split(key, 3)

    states = jax.random.normal(
        k_s, (rollout_length, batch) + input_shape, jnp.float32)
    rewards = jax.random.normal(
        k_r, (rollout_length, batch, reward_size), jnp.float32)

    params = init_params(k_p, input_shape, feat_dim, reward_size, hidden, embed)

    out = rollout_encoder_forward(states, rewards, params,
                                  nbr_states_to_encode, input_shape)
    out = jax.block_until_ready(out)

    assert out.shape == (batch, embed), out.shape
    assert bool(jnp.all(jnp.isfinite(out)))
    print("KERNEL_OK")
</pallas_src>

<mosaic_0001>
module attributes {stable_mosaic.version = 11 : i64} {
  func.func @_rollout_encoder_kernel(%arg0: i32, %arg1: memref<576x256xbf16, #tpu.memory_space<vmem>>, %arg2: memref<128x576xbf16, #tpu.memory_space<vmem>>, %arg3: memref<128x1xf32, #tpu.memory_space<vmem>>, %arg4: memref<2048x32xbf16, #tpu.memory_space<vmem>>, %arg5: memref<1x32xf32, #tpu.memory_space<vmem>>, %arg6: memref<64x2xf32, #tpu.memory_space<vmem>>, %arg7: memref<64x16xf32, #tpu.memory_space<vmem>>, %arg8: memref<32x96xf32, #tpu.memory_space<vmem>>, %arg9: memref<2x96xf32, #tpu.memory_space<vmem>>, %arg10: memref<1x96xf32, #tpu.memory_space<vmem>>, %arg11: memref<32x96xf32, #tpu.memory_space<vmem>>, %arg12: memref<1x32xf32, #tpu.memory_space<vmem>>, %arg13: memref<32x32xf32, #tpu.memory_space<vmem>>, %arg14: memref<1x32xf32, #tpu.memory_space<vmem>>, %arg15: memref<2x32xf32, #tpu.memory_space<vmem>>) attributes {dimension_semantics = [#tpu.dimension_semantics<arbitrary>], iteration_bounds = array<i64: 1>, scalar_prefetch = 0 : i64, scratch_operands = 0 : i64, tpu.core_type = #tpu.core_type<tc>, window_params = [{pipeline_mode = #tpu.pipeline_mode<synchronous>, transform_indices = @transform_0, window_bounds = array<i64: 576, 256>}, {pipeline_mode = #tpu.pipeline_mode<synchronous>, transform_indices = @transform_1, window_bounds = array<i64: 128, 576>}, {pipeline_mode = #tpu.pipeline_mode<synchronous>, transform_indices = @transform_2, window_bounds = array<i64: 128, 1>}, {pipeline_mode = #tpu.pipeline_mode<synchronous>, transform_indices = @transform_3, window_bounds = array<i64: 2048, 32>}, {pipeline_mode = #tpu.pipeline_mode<synchronous>, transform_indices = @transform_4, window_bounds = array<i64: 1, 32>}, {pipeline_mode = #tpu.pipeline_mode<synchronous>, transform_indices = @transform_5, window_bounds = array<i64: 64, 2>}, {pipeline_mode = #tpu.pipeline_mode<synchronous>, transform_indices = @transform_6, window_bounds = array<i64: 64, 16>}, {pipeline_mode = #tpu.pipeline_mode<synchronous>, transform_indices = @transform_7, window_bounds = array<i64: 32, 96>}, {pipeline_mode = #tpu.pipeline_mode<synchronous>, transform_indices = @transform_8, window_bounds = array<i64: 2, 96>}, {pipeline_mode = #tpu.pipeline_mode<synchronous>, transform_indices = @transform_9, window_bounds = array<i64: 1, 96>}, {pipeline_mode = #tpu.pipeline_mode<synchronous>, transform_indices = @transform_10, window_bounds = array<i64: 32, 96>}, {pipeline_mode = #tpu.pipeline_mode<synchronous>, transform_indices = @transform_11, window_bounds = array<i64: 1, 32>}, {pipeline_mode = #tpu.pipeline_mode<synchronous>, transform_indices = @transform_12, window_bounds = array<i64: 32, 32>}, {pipeline_mode = #tpu.pipeline_mode<synchronous>, transform_indices = @transform_13, window_bounds = array<i64: 1, 32>}, {pipeline_mode = #tpu.pipeline_mode<synchronous>, transform_indices = @transform_14, window_bounds = array<i64: 2, 32>}]} {
    %c0 = arith.constant 0 : index
    %c0_0 = arith.constant 0 : index
    %0 = vector.load %arg2[%c0, %c0_0] : memref<128x576xbf16, #tpu.memory_space<vmem>>, vector<128x576xbf16>
    %c0_1 = arith.constant 0 : index
    %c0_2 = arith.constant 0 : index
    %1 = vector.load %arg1[%c0_1, %c0_2] : memref<576x256xbf16, #tpu.memory_space<vmem>>, vector<576x256xbf16>
    %cst = arith.constant dense<0.000000e+00> : vector<128x256xf32>
    %2 = tpu.matmul %0, %1, %cst {dimension_numbers = #tpu.dot_dimension_numbers<[1], [0], [0], [1], [0, 0, 1, 1], [], []>} : vector<128x576xbf16>, vector<576x256xbf16>, vector<128x256xf32> -> vector<128x256xf32>
    %c0_3 = arith.constant 0 : index
    %c0_4 = arith.constant 0 : index
    %3 = vector.load %arg3[%c0_3, %c0_4] : memref<128x1xf32, #tpu.memory_space<vmem>>, vector<128x1xf32>
    %4 = vector.broadcast %3 : vector<128x1xf32> to vector<128x256xf32>
    %5 = arith.addf %2, %4 : vector<128x256xf32>
    %cst_5 = arith.constant 0.000000e+00 : f32
    %6 = vector.broadcast %cst_5 : f32 to vector<128x256xf32>
    %7 = arith.maximumf %5, %6 : vector<128x256xf32>
    %8 = arith.truncf %7 : vector<128x256xf32> to vector<128x256xbf16>
    %9 = vector.extract_strided_slice %8 {offsets = [0, 0], sizes = [16, 256], strides = [1, 1]} : vector<128x256xbf16> to vector<16x256xbf16>
    %10 = vector.extract_strided_slice %8 {offsets = [16, 0], sizes = [16, 256], strides = [1, 1]} : vector<128x256xbf16> to vector<16x256xbf16>
    %11 = vector.extract_strided_slice %8 {offsets = [32, 0], sizes = [16, 256], strides = [1, 1]} : vector<128x256xbf16> to vector<16x256xbf16>
    %12 = vector.extract_strided_slice %8 {offsets = [48, 0], sizes = [16, 256], strides = [1, 1]} : vector<128x256xbf16> to vector<16x256xbf16>
    %13 = vector.extract_strided_slice %8 {offsets = [64, 0], sizes = [16, 256], strides = [1, 1]} : vector<128x256xbf16> to vector<16x256xbf16>
    %14 = vector.extract_strided_slice %8 {offsets = [80, 0], sizes = [16, 256], strides = [1, 1]} : vector<128x256xbf16> to vector<16x256xbf16>
    %15 = vector.extract_strided_slice %8 {offsets = [96, 0], sizes = [16, 256], strides = [1, 1]} : vector<128x256xbf16> to vector<16x256xbf16>
    %16 = vector.extract_strided_slice %8 {offsets = [112, 0], sizes = [16, 256], strides = [1, 1]} : vector<128x256xbf16> to vector<16x256xbf16>
    %17 = tpu.concatenate %9, %10, %11, %12, %13, %14, %15, %16 in 1 : vector<16x256xbf16>, vector<16x256xbf16>, vector<16x256xbf16>, vector<16x256xbf16>, vector<16x256xbf16>, vector<16x256xbf16>, vector<16x256xbf16>, vector<16x256xbf16> -> vector<16x2048xbf16>
    %c0_6 = arith.constant 0 : index
    %c0_7 = arith.constant 0 : index
    %18 = vector.load %arg4[%c0_6, %c0_7] : memref<2048x32xbf16, #tpu.memory_space<vmem>>, vector<2048x32xbf16>
    %cst_8 = arith.constant dense<0.000000e+00> : vector<16x32xf32>
    %19 = tpu.matmul %17, %18, %cst_8 {dimension_numbers = #tpu.dot_dimension_numbers<[1], [0], [0], [1], [0, 0, 1, 1], [], []>} : vector<16x2048xbf16>, vector<2048x32xbf16>, vector<16x32xf32> -> vector<16x32xf32>
    %c0_9 = arith.constant 0 : index
    %c0_10 = arith.constant 0 : index
    %20 = vector.load %arg5[%c0_9, %c0_10] : memref<1x32xf32, #tpu.memory_space<vmem>>, vector<1x32xf32>
    %21 = vector.broadcast %20 : vector<1x32xf32> to vector<16x32xf32>
    %22 = arith.addf %19, %21 : vector<16x32xf32>
    %cst_11 = arith.constant 0.000000e+00 : f32
    %23 = vector.broadcast %cst_11 : f32 to vector<16x32xf32>
    %24 = arith.maximumf %22, %23 : vector<16x32xf32>
    %c0_12 = arith.constant 0 : index
    %c0_13 = arith.constant 0 : index
    %25 = vector.load %arg7[%c0_12, %c0_13] : memref<64x16xf32, #tpu.memory_space<vmem>>, vector<64x16xf32>
    %cst_14 = arith.constant dense<0.000000e+00> : vector<64x32xf32>
    %26 = tpu.matmul %25, %24, %cst_14 {dimension_numbers = #tpu.dot_dimension_numbers<[1], [0], [0], [1], [0, 0, 1, 1], [], []>} : vector<64x16xf32>, vector<16x32xf32>, vector<64x32xf32> -> vector<64x32xf32>
    %c0_15 = arith.constant 0 : index
    %c0_16 = arith.constant 0 : index
    %27 = vector.load %arg8[%c0_15, %c0_16] : memref<32x96xf32, #tpu.memory_space<vmem>>, vector<32x96xf32>
    %cst_17 = arith.constant dense<0.000000e+00> : vector<64x96xf32>
    %28 = tpu.matmul %26, %27, %cst_17 {dimension_numbers = #tpu.dot_dimension_numbers<[1], [0], [0], [1], [0, 0, 1, 1], [], []>} : vector<64x32xf32>, vector<32x96xf32>, vector<64x96xf32> -> vector<64x96xf32>
    %c0_18 = arith.constant 0 : index
    %c0_19 = arith.constant 0 : index
    %29 = vector.load %arg6[%c0_18, %c0_19] : memref<64x2xf32, #tpu.memory_space<vmem>>, vector<64x2xf32>
    %c0_20 = arith.constant 0 : index
    %c0_21 = arith.constant 0 : index
    %30 = vector.load %arg9[%c0_20, %c0_21] : memref<2x96xf32, #tpu.memory_space<vmem>>, vector<2x96xf32>
    %cst_22 = arith.constant dense<0.000000e+00> : vector<64x96xf32>
    %31 = tpu.matmul %29, %30, %cst_22 {dimension_numbers = #tpu.dot_dimension_numbers<[1], [0], [0], [1], [0, 0, 1, 1], [], []>} : vector<64x2xf32>, vector<2x96xf32>, vector<64x96xf32> -> vector<64x96xf32>
    %32 = arith.addf %28, %31 : vector<64x96xf32>
    %c0_23 = arith.constant 0 : index
    %c0_24 = arith.constant 0 : index
    %33 = vector.load %arg10[%c0_23, %c0_24] : memref<1x96xf32, #tpu.memory_space<vmem>>, vector<1x96xf32>
    %34 = vector.broadcast %33 : vector<1x96xf32> to vector<64x96xf32>
    %35 = arith.addf %32, %34 : vector<64x96xf32>
    %c0_25 = arith.constant 0 : index
    %c0_26 = arith.constant 0 : index
    %36 = vector.load %arg11[%c0_25, %c0_26] : memref<32x96xf32, #tpu.memory_space<vmem>>, vector<32x96xf32>
    %c0_27 = arith.constant 0 : index
    %c0_28 = arith.constant 0 : index
    %37 = vector.load %arg12[%c0_27, %c0_28] : memref<1x32xf32, #tpu.memory_space<vmem>>, vector<1x32xf32>
    %38 = vector.shape_cast %37 : vector<1x32xf32> to vector<1x32xf32>
    %39 = vector.broadcast %38 : vector<1x32xf32> to vector<8x32xf32>
    %cst_29 = arith.constant 0.000000e+00 : f32
    %40 = vector.broadcast %cst_29 : f32 to vector<8x32xf32>
    %41 = vector.extract_strided_slice %35 {offsets = [56, 0], sizes = [8, 96], strides = [1, 1]} : vector<64x96xf32> to vector<8x96xf32>
    %cst_30 = arith.constant dense<0.000000e+00> : vector<8x96xf32>
    %42 = tpu.matmul %40, %36, %cst_30 {dimension_numbers = #tpu.dot_dimension_numbers<[1], [0], [0], [1], [0, 0, 1, 1], [], []>} : vector<8x32xf32>, vector<32x96xf32>, vector<8x96xf32> -> vector<8x96xf32>
    %43 = vector.extract_strided_slice %41 {offsets = [0, 0], sizes = [8, 32], strides = [1, 1]} : vector<8x96xf32> to vector<8x32xf32>
    %44 = vector.extract_strided_slice %42 {offsets = [0, 0], sizes = [8, 32], strides = [1, 1]} : vector<8x96xf32> to vector<8x32xf32>
    %45 = arith.addf %43, %44 : vector<8x32xf32>
    %46 = arith.negf %45 : vector<8x32xf32>
    %47 = math.exp %46 : vector<8x32xf32>
    %cst_31 = arith.constant 1.000000e+00 : f32
    %48 = vector.broadcast %cst_31 : f32 to vector<8x32xf32>
    %49 = arith.addf %48, %47 : vector<8x32xf32>
    %50 = arith.divf %48, %49 : vector<8x32xf32>
    %51 = vector.extract_strided_slice %41 {offsets = [0, 32], sizes = [8, 32], strides = [1, 1]} : vector<8x96xf32> to vector<8x32xf32>
    %52 = vector.extract_strided_slice %42 {offsets = [0, 32], sizes = [8, 32], strides = [1, 1]} : vector<8x96xf32> to vector<8x32xf32>
    %53 = arith.addf %51, %52 : vector<8x32xf32>
    %54 = arith.negf %53 : vector<8x32xf32>
    %55 = math.exp %54 : vector<8x32xf32>
    %cst_32 = arith.constant 1.000000e+00 : f32
    %56 = vector.broadcast %cst_32 : f32 to vector<8x32xf32>
    %57 = arith.addf %56, %55 : vector<8x32xf32>
    %58 = arith.divf %56, %57 : vector<8x32xf32>
    %59 = vector.extract_strided_slice %41 {offsets = [0, 64], sizes = [8, 32], strides = [1, 1]} : vector<8x96xf32> to vector<8x32xf32>
    %60 = vector.extract_strided_slice %42 {offsets = [0, 64], sizes = [8, 32], strides = [1, 1]} : vector<8x96xf32> to vector<8x32xf32>
    %61 = arith.addf %60, %39 : vector<8x32xf32>
    %62 = arith.mulf %50, %61 : vector<8x32xf32>
    %63 = arith.addf %59, %62 : vector<8x32xf32>
    %64 = math.tanh %63 : vector<8x32xf32>
    %cst_33 = arith.constant 1.000000e+00 : f32
    %65 = vector.broadcast %cst_33 : f32 to vector<8x32xf32>
    %66 = arith.subf %65, %58 : vector<8x32xf32>
    %67 = arith.mulf %66, %64 : vector<8x32xf32>
    %68 = arith.mulf %58, %40 : vector<8x32xf32>
    %69 = arith.addf %67, %68 : vector<8x32xf32>
    %70 = vector.extract_strided_slice %35 {offsets = [48, 0], sizes = [8, 96], strides = [1, 1]} : vector<64x96xf32> to vector<8x96xf32>
    %cst_34 = arith.constant dense<0.000000e+00> : vector<8x96xf32>
    %71 = tpu.matmul %69, %36, %cst_34 {dimension_numbers = #tpu.dot_dimension_numbers<[1], [0], [0], [1], [0, 0, 1, 1], [], []>} : vector<8x32xf32>, vector<32x96xf32>, vector<8x96xf32> -> vector<8x96xf32>
    %72 = vector.extract_strided_slice %70 {offsets = [0, 0], sizes = [8, 32], strides = [1, 1]} : vector<8x96xf32> to vector<8x32xf32>
    %73 = vector.extract_strided_slice %71 {offsets = [0, 0], sizes = [8, 32], strides = [1, 1]} : vector<8x96xf32> to vector<8x32xf32>
    %74 = arith.addf %72, %73 : vector<8x32xf32>
    %75 = arith.negf %74 : vector<8x32xf32>
    %76 = math.exp %75 : vector<8x32xf32>
    %cst_35 = arith.constant 1.000000e+00 : f32
    %77 = vector.broadcast %cst_35 : f32 to vector<8x32xf32>
    %78 = arith.addf %77, %76 : vector<8x32xf32>
    %79 = arith.divf %77, %78 : vector<8x32xf32>
    %80 = vector.extract_strided_slice %70 {offsets = [0, 32], sizes = [8, 32], strides = [1, 1]} : vector<8x96xf32> to vector<8x32xf32>
    %81 = vector.extract_strided_slice %71 {offsets = [0, 32], sizes = [8, 32], strides = [1, 1]} : vector<8x96xf32> to vector<8x32xf32>
    %82 = arith.addf %80, %81 : vector<8x32xf32>
    %83 = arith.negf %82 : vector<8x32xf32>
    %84 = math.exp %83 : vector<8x32xf32>
    %cst_36 = arith.constant 1.000000e+00 : f32
    %85 = vector.broadcast %cst_36 : f32 to vector<8x32xf32>
    %86 = arith.addf %85, %84 : vector<8x32xf32>
    %87 = arith.divf %85, %86 : vector<8x32xf32>
    %88 = vector.extract_strided_slice %70 {offsets = [0, 64], sizes = [8, 32], strides = [1, 1]} : vector<8x96xf32> to vector<8x32xf32>
    %89 = vector.extract_strided_slice %71 {offsets = [0, 64], sizes = [8, 32], strides = [1, 1]} : vector<8x96xf32> to vector<8x32xf32>
    %90 = arith.addf %89, %39 : vector<8x32xf32>
    %91 = arith.mulf %79, %90 : vector<8x32xf32>
    %92 = arith.addf %88, %91 : vector<8x32xf32>
    %93 = math.tanh %92 : vector<8x32xf32>
    %cst_37 = arith.constant 1.000000e+00 : f32
    %94 = vector.broadcast %cst_37 : f32 to vector<8x32xf32>
    %95 = arith.subf %94, %87 : vector<8x32xf32>
    %96 = arith.mulf %95, %93 : vector<8x32xf32>
    %97 = arith.mulf %87, %69 : vector<8x32xf32>
    %98 = arith.addf %96, %97 : vector<8x32xf32>
    %99 = vector.extract_strided_slice %35 {offsets = [40, 0], sizes = [8, 96], strides = [1, 1]} : vector<64x96xf32> to vector<8x96xf32>
    %cst_38 = arith.constant dense<0.000000e+00> : vector<8x96xf32>
    %100 = tpu.matmul %98, %36, %cst_38 {dimension_numbers = #tpu.dot_dimension_numbers<[1], [0], [0], [1], [0, 0, 1, 1], [], []>} : vector<8x32xf32>, vector<32x96xf32>, vector<8x96xf32> -> vector<8x96xf32>
    %101 = vector.extract_strided_slice %99 {offsets = [0, 0], sizes = [8, 32], strides = [1, 1]} : vector<8x96xf32> to vector<8x32xf32>
    %102 = vector.extract_strided_slice %100 {offsets = [0, 0], sizes = [8, 32], strides = [1, 1]} : vector<8x96xf32> to vector<8x32xf32>
    %103 = arith.addf %101, %102 : vector<8x32xf32>
    %104 = arith.negf %103 : vector<8x32xf32>
    %105 = math.exp %104 : vector<8x32xf32>
    %cst_39 = arith.constant 1.000000e+00 : f32
    %106 = vector.broadcast %cst_39 : f32 to vector<8x32xf32>
    %107 = arith.addf %106, %105 : vector<8x32xf32>
    %108 = arith.divf %106, %107 : vector<8x32xf32>
    %109 = vector.extract_strided_slice %99 {offsets = [0, 32], sizes = [8, 32], strides = [1, 1]} : vector<8x96xf32> to vector<8x32xf32>
    %110 = vector.extract_strided_slice %100 {offsets = [0, 32], sizes = [8, 32], strides = [1, 1]} : vector<8x96xf32> to vector<8x32xf32>
    %111 = arith.addf %109, %110 : vector<8x32xf32>
    %112 = arith.negf %111 : vector<8x32xf32>
    %113 = math.exp %112 : vector<8x32xf32>
    %cst_40 = arith.constant 1.000000e+00 : f32
    %114 = vector.broadcast %cst_40 : f32 to vector<8x32xf32>
    %115 = arith.addf %114, %113 : vector<8x32xf32>
    %116 = arith.divf %114, %115 : vector<8x32xf32>
    %117 = vector.extract_strided_slice %99 {offsets = [0, 64], sizes = [8, 32], strides = [1, 1]} : vector<8x96xf32> to vector<8x32xf32>
    %118 = vector.extract_strided_slice %100 {offsets = [0, 64], sizes = [8, 32], strides = [1, 1]} : vector<8x96xf32> to vector<8x32xf32>
    %119 = arith.addf %118, %39 : vector<8x32xf32>
    %120 = arith.mulf %108, %119 : vector<8x32xf32>
    %121 = arith.addf %117, %120 : vector<8x32xf32>
    %122 = math.tanh %121 : vector<8x32xf32>
    %cst_41 = arith.constant 1.000000e+00 : f32
    %123 = vector.broadcast %cst_41 : f32 to vector<8x32xf32>
    %124 = arith.subf %123, %116 : vector<8x32xf32>
    %125 = arith.mulf %124, %122 : vector<8x32xf32>
    %126 = arith.mulf %116, %98 : vector<8x32xf32>
    %127 = arith.addf %125, %126 : vector<8x32xf32>
    %128 = vector.extract_strided_slice %35 {offsets = [32, 0], sizes = [8, 96], strides = [1, 1]} : vector<64x96xf32> to vector<8x96xf32>
    %cst_42 = arith.constant dense<0.000000e+00> : vector<8x96xf32>
    %129 = tpu.matmul %127, %36, %cst_42 {dimension_numbers = #tpu.dot_dimension_numbers<[1], [0], [0], [1], [0, 0, 1, 1], [], []>} : vector<8x32xf32>, vector<32x96xf32>, vector<8x96xf32> -> vector<8x96xf32>
    %130 = vector.extract_strided_slice %128 {offsets = [0, 0], sizes = [8, 32], strides = [1, 1]} : vector<8x96xf32> to vector<8x32xf32>
    %131 = vector.extract_strided_slice %129 {offsets = [0, 0], sizes = [8, 32], strides = [1, 1]} : vector<8x96xf32> to vector<8x32xf32>
    %132 = arith.addf %130, %131 : vector<8x32xf32>
    %133 = arith.negf %132 : vector<8x32xf32>
    %134 = math.exp %133 : vector<8x32xf32>
    %cst_43 = arith.constant 1.000000e+00 : f32
    %135 = vector.broadcast %cst_43 : f32 to vector<8x32xf32>
    %136 = arith.addf %135, %134 : vector<8x32xf32>
    %137 = arith.divf %135, %136 : vector<8x32xf32>
    %138 = vector.extract_strided_slice %128 {offsets = [0, 32], sizes = [8, 32], strides = [1, 1]} : vector<8x96xf32> to vector<8x32xf32>
    %139 = vector.extract_strided_slice %129 {offsets = [0, 32], sizes = [8, 32], strides = [1, 1]} : vector<8x96xf32> to vector<8x32xf32>
    %140 = arith.addf %138, %139 : vector<8x32xf32>
    %141 = arith.negf %140 : vector<8x32xf32>
    %142 = math.exp %141 : vector<8x32xf32>
    %cst_44 = arith.constant 1.000000e+00 : f32
    %143 = vector.broadcast %cst_44 : f32 to vector<8x32xf32>
    %144 = arith.addf %143, %142 : vector<8x32xf32>
    %145 = arith.divf %143, %144 : vector<8x32xf32>
    %146 = vector.extract_strided_slice %128 {offsets = [0, 64], sizes = [8, 32], strides = [1, 1]} : vector<8x96xf32> to vector<8x32xf32>
    %147 = vector.extract_strided_slice %129 {offsets = [0, 64], sizes = [8, 32], strides = [1, 1]} : vector<8x96xf32> to vector<8x32xf32>
    %148 = arith.addf %147, %39 : vector<8x32xf32>
    %149 = arith.mulf %137, %148 : vector<8x32xf32>
    %150 = arith.addf %146, %149 : vector<8x32xf32>
    %151 = math.tanh %150 : vector<8x32xf32>
    %cst_45 = arith.constant 1.000000e+00 : f32
    %152 = vector.broadcast %cst_45 : f32 to vector<8x32xf32>
    %153 = arith.subf %152, %145 : vector<8x32xf32>
    %154 = arith.mulf %153, %151 : vector<8x32xf32>
    %155 = arith.mulf %145, %127 : vector<8x32xf32>
    %156 = arith.addf %154, %155 : vector<8x32xf32>
    %157 = vector.extract_strided_slice %35 {offsets = [24, 0], sizes = [8, 96], strides = [1, 1]} : vector<64x96xf32> to vector<8x96xf32>
    %cst_46 = arith.constant dense<0.000000e+00> : vector<8x96xf32>
    %158 = tpu.matmul %156, %36, %cst_46 {dimension_numbers = #tpu.dot_dimension_numbers<[1], [0], [0], [1], [0, 0, 1, 1], [], []>} : vector<8x32xf32>, vector<32x96xf32>, vector<8x96xf32> -> vector<8x96xf32>
    %159 = vector.extract_strided_slice %157 {offsets = [0, 0], sizes = [8, 32], strides = [1, 1]} : vector<8x96xf32> to vector<8x32xf32>
    %160 = vector.extract_strided_slice %158 {offsets = [0, 0], sizes = [8, 32], strides = [1, 1]} : vector<8x96xf32> to vector<8x32xf32>
    %161 = arith.addf %159, %160 : vector<8x32xf32>
    %162 = arith.negf %161 : vector<8x32xf32>
    %163 = math.exp %162 : vector<8x32xf32>
    %cst_47 = arith.constant 1.000000e+00 : f32
    %164 = vector.broadcast %cst_47 : f32 to vector<8x32xf32>
    %165 = arith.addf %164, %163 : vector<8x32xf32>
    %166 = arith.divf %164, %165 : vector<8x32xf32>
    %167 = vector.extract_strided_slice %157 {offsets = [0, 32], sizes = [8, 32], strides = [1, 1]} : vector<8x96xf32> to vector<8x32xf32>
    %168 = vector.extract_strided_slice %158 {offsets = [0, 32], sizes = [8, 32], strides = [1, 1]} : vector<8x96xf32> to vector<8x32xf32>
    %169 = arith.addf %167, %168 : vector<8x32xf32>
    %170 = arith.negf %169 : vector<8x32xf32>
    %171 = math.exp %170 : vector<8x32xf32>
    %cst_48 = arith.constant 1.000000e+00 : f32
    %172 = vector.broadcast %cst_48 : f32 to vector<8x32xf32>
    %173 = arith.addf %172, %171 : vector<8x32xf32>
    %174 = arith.divf %172, %173 : vector<8x32xf32>
    %175 = vector.extract_strided_slice %157 {offsets = [0, 64], sizes = [8, 32], strides = [1, 1]} : vector<8x96xf32> to vector<8x32xf32>
    %176 = vector.extract_strided_slice %158 {offsets = [0, 64], sizes = [8, 32], strides = [1, 1]} : vector<8x96xf32> to vector<8x32xf32>
    %177 = arith.addf %176, %39 : vector<8x32xf32>
    %178 = arith.mulf %166, %177 : vector<8x32xf32>
    %179 = arith.addf %175, %178 : vector<8x32xf32>
    %180 = math.tanh %179 : vector<8x32xf32>
    %cst_49 = arith.constant 1.000000e+00 : f32
    %181 = vector.broadcast %cst_49 : f32 to vector<8x32xf32>
    %182 = arith.subf %181, %174 : vector<8x32xf32>
    %183 = arith.mulf %182, %180 : vector<8x32xf32>
    %184 = arith.mulf %174, %156 : vector<8x32xf32>
    %185 = arith.addf %183, %184 : vector<8x32xf32>
    %186 = vector.extract_strided_slice %35 {offsets = [16, 0], sizes = [8, 96], strides = [1, 1]} : vector<64x96xf32> to vector<8x96xf32>
    %cst_50 = arith.constant dense<0.000000e+00> : vector<8x96xf32>
    %187 = tpu.matmul %185, %36, %cst_50 {dimension_numbers = #tpu.dot_dimension_numbers<[1], [0], [0], [1], [0, 0, 1, 1], [], []>} : vector<8x32xf32>, vector<32x96xf32>, vector<8x96xf32> -> vector<8x96xf32>
    %188 = vector.extract_strided_slice %186 {offsets = [0, 0], sizes = [8, 32], strides = [1, 1]} : vector<8x96xf32> to vector<8x32xf32>
    %189 = vector.extract_strided_slice %187 {offsets = [0, 0], sizes = [8, 32], strides = [1, 1]} : vector<8x96xf32> to vector<8x32xf32>
    %190 = arith.addf %188, %189 : vector<8x32xf32>
    %191 = arith.negf %190 : vector<8x32xf32>
    %192 = math.exp %191 : vector<8x32xf32>
    %cst_51 = arith.constant 1.000000e+00 : f32
    %193 = vector.broadcast %cst_51 : f32 to vector<8x32xf32>
    %194 = arith.addf %193, %192 : vector<8x32xf32>
    %195 = arith.divf %193, %194 : vector<8x32xf32>
    %196 = vector.extract_strided_slice %186 {offsets = [0, 32], sizes = [8, 32], strides = [1, 1]} : vector<8x96xf32> to vector<8x32xf32>
    %197 = vector.extract_strided_slice %187 {offsets = [0, 32], sizes = [8, 32], strides = [1, 1]} : vector<8x96xf32> to vector<8x32xf32>
    %198 = arith.addf %196, %197 : vector<8x32xf32>
    %199 = arith.negf %198 : vector<8x32xf32>
    %200 = math.exp %199 : vector<8x32xf32>
    %cst_52 = arith.constant 1.000000e+00 : f32
    %201 = vector.broadcast %cst_52 : f32 to vector<8x32xf32>
    %202 = arith.addf %201, %200 : vector<8x32xf32>
    %203 = arith.divf %201, %202 : vector<8x32xf32>
    %204 = vector.extract_strided_slice %186 {offsets = [0, 64], sizes = [8, 32], strides = [1, 1]} : vector<8x96xf32> to vector<8x32xf32>
    %205 = vector.extract_strided_slice %187 {offsets = [0, 64], sizes = [8, 32], strides = [1, 1]} : vector<8x96xf32> to vector<8x32xf32>
    %206 = arith.addf %205, %39 : vector<8x32xf32>
    %207 = arith.mulf %195, %206 : vector<8x32xf32>
    %208 = arith.addf %204, %207 : vector<8x32xf32>
    %209 = math.tanh %208 : vector<8x32xf32>
    %cst_53 = arith.constant 1.000000e+00 : f32
    %210 = vector.broadcast %cst_53 : f32 to vector<8x32xf32>
    %211 = arith.subf %210, %203 : vector<8x32xf32>
    %212 = arith.mulf %211, %209 : vector<8x32xf32>
    %213 = arith.mulf %203, %185 : vector<8x32xf32>
    %214 = arith.addf %212, %213 : vector<8x32xf32>
    %215 = vector.extract_strided_slice %35 {offsets = [8, 0], sizes = [8, 96], strides = [1, 1]} : vector<64x96xf32> to vector<8x96xf32>
    %cst_54 = arith.constant dense<0.000000e+00> : vector<8x96xf32>
    %216 = tpu.matmul %214, %36, %cst_54 {dimension_numbers = #tpu.dot_dimension_numbers<[1], [0], [0], [1], [0, 0, 1, 1], [], []>} : vector<8x32xf32>, vector<32x96xf32>, vector<8x96xf32> -> vector<8x96xf32>
    %217 = vector.extract_strided_slice %215 {offsets = [0, 0], sizes = [8, 32], strides = [1, 1]} : vector<8x96xf32> to vector<8x32xf32>
    %218 = vector.extract_strided_slice %216 {offsets = [0, 0], sizes = [8, 32], strides = [1, 1]} : vector<8x96xf32> to vector<8x32xf32>
    %219 = arith.addf %217, %218 : vector<8x32xf32>
    %220 = arith.negf %219 : vector<8x32xf32>
    %221 = math.exp %220 : vector<8x32xf32>
    %cst_55 = arith.constant 1.000000e+00 : f32
    %222 = vector.broadcast %cst_55 : f32 to vector<8x32xf32>
    %223 = arith.addf %222, %221 : vector<8x32xf32>
    %224 = arith.divf %222, %223 : vector<8x32xf32>
    %225 = vector.extract_strided_slice %215 {offsets = [0, 32], sizes = [8, 32], strides = [1, 1]} : vector<8x96xf32> to vector<8x32xf32>
    %226 = vector.extract_strided_slice %216 {offsets = [0, 32], sizes = [8, 32], strides = [1, 1]} : vector<8x96xf32> to vector<8x32xf32>
    %227 = arith.addf %225, %226 : vector<8x32xf32>
    %228 = arith.negf %227 : vector<8x32xf32>
    %229 = math.exp %228 : vector<8x32xf32>
    %cst_56 = arith.constant 1.000000e+00 : f32
    %230 = vector.broadcast %cst_56 : f32 to vector<8x32xf32>
    %231 = arith.addf %230, %229 : vector<8x32xf32>
    %232 = arith.divf %230, %231 : vector<8x32xf32>
    %233 = vector.extract_strided_slice %215 {offsets = [0, 64], sizes = [8, 32], strides = [1, 1]} : vector<8x96xf32> to vector<8x32xf32>
    %234 = vector.extract_strided_slice %216 {offsets = [0, 64], sizes = [8, 32], strides = [1, 1]} : vector<8x96xf32> to vector<8x32xf32>
    %235 = arith.addf %234, %39 : vector<8x32xf32>
    %236 = arith.mulf %224, %235 : vector<8x32xf32>
    %237 = arith.addf %233, %236 : vector<8x32xf32>
    %238 = math.tanh %237 : vector<8x32xf32>
    %cst_57 = arith.constant 1.000000e+00 : f32
    %239 = vector.broadcast %cst_57 : f32 to vector<8x32xf32>
    %240 = arith.subf %239, %232 : vector<8x32xf32>
    %241 = arith.mulf %240, %238 : vector<8x32xf32>
    %242 = arith.mulf %232, %214 : vector<8x32xf32>
    %243 = arith.addf %241, %242 : vector<8x32xf32>
    %244 = vector.extract_strided_slice %35 {offsets = [0, 0], sizes = [8, 96], strides = [1, 1]} : vector<64x96xf32> to vector<8x96xf32>
    %cst_58 = arith.constant dense<0.000000e+00> : vector<8x96xf32>
    %245 = tpu.matmul %243, %36, %cst_58 {dimension_numbers = #tpu.dot_dimension_numbers<[1], [0], [0], [1], [0, 0, 1, 1], [], []>} : vector<8x32xf32>, vector<32x96xf32>, vector<8x96xf32> -> vector<8x96xf32>
    %246 = vector.extract_strided_slice %244 {offsets = [0, 0], sizes = [8, 32], strides = [1, 1]} : vector<8x96xf32> to vector<8x32xf32>
    %247 = vector.extract_strided_slice %245 {offsets = [0, 0], sizes = [8, 32], strides = [1, 1]} : vector<8x96xf32> to vector<8x32xf32>
    %248 = arith.addf %246, %247 : vector<8x32xf32>
    %249 = arith.negf %248 : vector<8x32xf32>
    %250 = math.exp %249 : vector<8x32xf32>
    %cst_59 = arith.constant 1.000000e+00 : f32
    %251 = vector.broadcast %cst_59 : f32 to vector<8x32xf32>
    %252 = arith.addf %251, %250 : vector<8x32xf32>
    %253 = arith.divf %251, %252 : vector<8x32xf32>
    %254 = vector.extract_strided_slice %244 {offsets = [0, 32], sizes = [8, 32], strides = [1, 1]} : vector<8x96xf32> to vector<8x32xf32>
    %255 = vector.extract_strided_slice %245 {offsets = [0, 32], sizes = [8, 32], strides = [1, 1]} : vector<8x96xf32> to vector<8x32xf32>
    %256 = arith.addf %254, %255 : vector<8x32xf32>
    %257 = arith.negf %256 : vector<8x32xf32>
    %258 = math.exp %257 : vector<8x32xf32>
    %cst_60 = arith.constant 1.000000e+00 : f32
    %259 = vector.broadcast %cst_60 : f32 to vector<8x32xf32>
    %260 = arith.addf %259, %258 : vector<8x32xf32>
    %261 = arith.divf %259, %260 : vector<8x32xf32>
    %262 = vector.extract_strided_slice %244 {offsets = [0, 64], sizes = [8, 32], strides = [1, 1]} : vector<8x96xf32> to vector<8x32xf32>
    %263 = vector.extract_strided_slice %245 {offsets = [0, 64], sizes = [8, 32], strides = [1, 1]} : vector<8x96xf32> to vector<8x32xf32>
    %264 = arith.addf %263, %39 : vector<8x32xf32>
    %265 = arith.mulf %253, %264 : vector<8x32xf32>
    %266 = arith.addf %262, %265 : vector<8x32xf32>
    %267 = math.tanh %266 : vector<8x32xf32>
    %cst_61 = arith.constant 1.000000e+00 : f32
    %268 = vector.broadcast %cst_61 : f32 to vector<8x32xf32>
    %269 = arith.subf %268, %261 : vector<8x32xf32>
    %270 = arith.mulf %269, %267 : vector<8x32xf32>
    %271 = arith.mulf %261, %243 : vector<8x32xf32>
    %272 = arith.addf %270, %271 : vector<8x32xf32>
    %c0_62 = arith.constant 0 : index
    %c0_63 = arith.constant 0 : index
    %273 = vector.load %arg13[%c0_62, %c0_63] : memref<32x32xf32, #tpu.memory_space<vmem>>, vector<32x32xf32>
    %cst_64 = arith.constant dense<0.000000e+00> : vector<8x32xf32>
    %274 = tpu.matmul %272, %273, %cst_64 {dimension_numbers = #tpu.dot_dimension_numbers<[1], [0], [0], [1], [0, 0, 1, 1], [], []>} : vector<8x32xf32>, vector<32x32xf32>, vector<8x32xf32> -> vector<8x32xf32>
    %c0_65 = arith.constant 0 : index
    %c0_66 = arith.constant 0 : index
    %275 = vector.load %arg14[%c0_65, %c0_66] : memref<1x32xf32, #tpu.memory_space<vmem>>, vector<1x32xf32>
    %276 = vector.broadcast %275 : vector<1x32xf32> to vector<8x32xf32>
    %277 = arith.addf %274, %276 : vector<8x32xf32>
    %278 = vector.extract_strided_slice %277 {offsets = [0, 0], sizes = [2, 32], strides = [1, 1]} : vector<8x32xf32> to vector<2x32xf32>
    %c0_67 = arith.constant 0 : index
    %c0_68 = arith.constant 0 : index
    %279 = vector.load %arg15[%c0_67, %c0_68] : memref<2x32xf32, #tpu.memory_space<vmem>>, vector<2x32xf32>
    tpu.vector_store %arg15[%c0_67, %c0_68], %278 {strides = array<i32>} : memref<2x32xf32, #tpu.memory_space<vmem>>, vector<2x32xf32>,
    return
  }
  func.func @transform_0(%arg0: i32) -> (i32, i32) {
    %c0_i32 = arith.constant 0 : i32
    %c0_i32_0 = arith.constant 0 : i32
    %c0_i32_1 = arith.constant 0 : i32
    return %c0_i32, %c0_i32_0 : i32, i32
  }
  func.func @transform_1(%arg0: i32) -> (i32, i32) {
    %c0_i32 = arith.constant 0 : i32
    %c0_i32_0 = arith.constant 0 : i32
    %c0_i32_1 = arith.constant 0 : i32
    return %c0_i32, %c0_i32_0 : i32, i32
  }
  func.func @transform_2(%arg0: i32) -> (i32, i32) {
    %c0_i32 = arith.constant 0 : i32
    %c0_i32_0 = arith.constant 0 : i32
    %c0_i32_1 = arith.constant 0 : i32
    return %c0_i32, %c0_i32_0 : i32, i32
  }
  func.func @transform_3(%arg0: i32) -> (i32, i32) {
    %c0_i32 = arith.constant 0 : i32
    %c0_i32_0 = arith.constant 0 : i32
    %c0_i32_1 = arith.constant 0 : i32
    return %c0_i32, %c0_i32_0 : i32, i32
  }
  func.func @transform_4(%arg0: i32) -> (i32, i32) {
    %c0_i32 = arith.constant 0 : i32
    %c0_i32_0 = arith.constant 0 : i32
    %c0_i32_1 = arith.constant 0 : i32
    return %c0_i32, %c0_i32_0 : i32, i32
  }
  func.func @transform_5(%arg0: i32) -> (i32, i32) {
    %c0_i32 = arith.constant 0 : i32
    %c0_i32_0 = arith.constant 0 : i32
    %c0_i32_1 = arith.constant 0 : i32
    return %c0_i32, %c0_i32_0 : i32, i32
  }
  func.func @transform_6(%arg0: i32) -> (i32, i32) {
    %c0_i32 = arith.constant 0 : i32
    %c0_i32_0 = arith.constant 0 : i32
    %c0_i32_1 = arith.constant 0 : i32
    return %c0_i32, %c0_i32_0 : i32, i32
  }
  func.func @transform_7(%arg0: i32) -> (i32, i32) {
    %c0_i32 = arith.constant 0 : i32
    %c0_i32_0 = arith.constant 0 : i32
    %c0_i32_1 = arith.constant 0 : i32
    return %c0_i32, %c0_i32_0 : i32, i32
  }
  func.func @transform_8(%arg0: i32) -> (i32, i32) {
    %c0_i32 = arith.constant 0 : i32
    %c0_i32_0 = arith.constant 0 : i32
    %c0_i32_1 = arith.constant 0 : i32
    return %c0_i32, %c0_i32_0 : i32, i32
  }
  func.func @transform_9(%arg0: i32) -> (i32, i32) {
    %c0_i32 = arith.constant 0 : i32
    %c0_i32_0 = arith.constant 0 : i32
    %c0_i32_1 = arith.constant 0 : i32
    return %c0_i32, %c0_i32_0 : i32, i32
  }
  func.func @transform_10(%arg0: i32) -> (i32, i32) {
    %c0_i32 = arith.constant 0 : i32
    %c0_i32_0 = arith.constant 0 : i32
    %c0_i32_1 = arith.constant 0 : i32
    return %c0_i32, %c0_i32_0 : i32, i32
  }
  func.func @transform_11(%arg0: i32) -> (i32, i32) {
    %c0_i32 = arith.constant 0 : i32
    %c0_i32_0 = arith.constant 0 : i32
    %c0_i32_1 = arith.constant 0 : i32
    return %c0_i32, %c0_i32_0 : i32, i32
  }
  func.func @transform_12(%arg0: i32) -> (i32, i32) {
    %c0_i32 = arith.constant 0 : i32
    %c0_i32_0 = arith.constant 0 : i32
    %c0_i32_1 = arith.constant 0 : i32
    return %c0_i32, %c0_i32_0 : i32, i32
  }
  func.func @transform_13(%arg0: i32) -> (i32, i32) {
    %c0_i32 = arith.constant 0 : i32
    %c0_i32_0 = arith.constant 0 : i32
    %c0_i32_1 = arith.constant 0 : i32
    return %c0_i32, %c0_i32_0 : i32, i32
  }
  func.func @transform_14(%arg0: i32) -> (i32, i32) {
    %c0_i32 = arith.constant 0 : i32
    %c0_i32_0 = arith.constant 0 : i32
    %c0_i32_1 = arith.constant 0 : i32
    return %c0_i32, %c0_i32_0 : i32, i32
  }
}

</mosaic_0001>

<llo_original>
// kernel: mul.11
$region0: #{mul.11}
  %s0 = inlined_call_operand.vmem [shape: f32[8,4,3,3], index: 0, kind: input, shape index: {}]
  %s1 = inlined_call_operand.vmem [shape: f32[8,36], index: 1, kind: output, shape index: {}]
  $region1: #{mul.11} parent=0
    #allocation0 [shape = 'u8[49152]{0}', space=vmem, size = 0xc000, scoped, tag = 'scoped mem for input reshape']
    %s3 = ssub.s32 16, 1
    %s4 = scalar_lea.vmem %s0, 44
    %v5 = vld [vmem:[%s4] sm:%s3]
    %s6 = scalar_lea.vmem [#allocation0], 88
    %7 = vst [vmem:[%s6] sm:%s3] %v5
    %s8 = scalar_lea.vmem %s0, 40
    %v9 = vld [vmem:[%s8] sm:%s3]
    %s10 = scalar_lea.vmem [#allocation0], 80
    %11 = vst [vmem:[%s10] sm:%s3] %v9
    %s12 = scalar_lea.vmem %s0, 36
    %v13 = vld [vmem:[%s12] sm:%s3]
    %s14 = scalar_lea.vmem [#allocation0], 72
    %15 = vst [vmem:[%s14] sm:%s3] %v13
    %s16 = scalar_lea.vmem %s0, 32
    %v17 = vld [vmem:[%s16] sm:%s3]
    %s18 = scalar_lea.vmem [#allocation0], 64
    %19 = vst [vmem:[%s18] sm:%s3] %v17
    %s20 = scalar_lea.vmem %s0, 28
    %v21 = vld [vmem:[%s20] sm:%s3]
    %s22 = scalar_lea.vmem [#allocation0], 56
    %23 = vst [vmem:[%s22] sm:%s3] %v21
    %s24 = scalar_lea.vmem %s0, 24
    %v25 = vld [vmem:[%s24] sm:%s3]
    %s26 = scalar_lea.vmem [#allocation0], 48
    %27 = vst [vmem:[%s26] sm:%s3] %v25
    %s28 = scalar_lea.vmem %s0, 20
    %v29 = vld [vmem:[%s28] sm:%s3]
    %s30 = scalar_lea.vmem [#allocation0], 40
    %31 = vst [vmem:[%s30] sm:%s3] %v29
    %s32 = scalar_lea.vmem %s0, 16
    %v33 = vld [vmem:[%s32] sm:%s3]
    %s34 = scalar_lea.vmem [#allocation0], 32
    %35 = vst [vmem:[%s34] sm:%s3] %v33
    %s36 = scalar_lea.vmem %s0, 12
    %v37 = vld [vmem:[%s36] sm:%s3]
    %s38 = scalar_lea.vmem [#allocation0], 24
    %39 = vst [vmem:[%s38] sm:%s3] %v37
    %s40 = scalar_lea.vmem %s0, 8
    %v41 = vld [vmem:[%s40] sm:%s3]
    %s42 = scalar_lea.vmem [#allocation0], 16
    %43 = vst [vmem:[%s42] sm:%s3] %v41
    %s44 = scalar_lea.vmem %s0, 4
    %v45 = vld [vmem:[%s44] sm:%s3]
    %s46 = scalar_lea.vmem [#allocation0], 8
    %47 = vst [vmem:[%s46] sm:%s3] %v45
    %v48 = vld [vmem:[%s0] sm:%s3]
    %49 = vst [vmem:[#allocation0] sm:%s3] %v48
    %v50 = vld [vmem:[#allocation0] sm:$0x7]
    %vm51 = vcmask 64512
    %52 = vst.msk [vmem:[%s1] sm:$0x7] %vm51, %v50
    %s53 = scalar_lea.vmem [#allocation0], 8
    %v54 = vld [vmem:[%s53] sm:$0x7]
    %vm55 = vcmask 64512
    %s56 = scalar_lea.vmem %s1, 3
    %57 = vst.msk [vmem:[%s56] sm:$0x7] %vm55, %v54
    %s58 = scalar_lea.vmem [#allocation0], 16
    %v59 = vld [vmem:[%s58] sm:$0x7]
    %vm60 = vcmask 64512
    %s61 = scalar_lea.vmem %s1, 6
    %62 = vst.msk [vmem:[%s61] sm:$0x7] %vm60, %v59
    %s63 = scalar_lea.vmem [#allocation0], 24
    %v64 = vld [vmem:[%s63] sm:$0x7]
    %vm65 = vcmask 64512
    %s66 = scalar_lea.vmem %s1, 9
    %67 = vst.msk [vmem:[%s66] sm:$0x7] %vm65, %v64
    %s68 = scalar_lea.vmem [#allocation0], 32
    %v69 = vld [vmem:[%s68] sm:$0x7]
    %vm70 = vcmask 64512
    %s71 = scalar_lea.vmem %s1, 12
    %72 = vst.msk [vmem:[%s71] sm:$0x7] %vm70, %v69
    %s73 = scalar_lea.vmem [#allocation0], 40
    %v74 = vld [vmem:[%s73] sm:$0x7]
    %vm75 = vcmask 64512
    %s76 = scalar_lea.vmem %s1, 15
    %77 = vst.msk [vmem:[%s76] sm:$0x7] %vm75, %v74
    %s78 = scalar_lea.vmem [#allocation0], 48
    %v79 = vld [vmem:[%s78] sm:$0x7]
    %vm80 = vcmask 64512
    %s81 = scalar_lea.vmem %s1, 18
    %82 = vst.msk [vmem:[%s81] sm:$0x7] %vm80, %v79
    %s83 = scalar_lea.vmem [#allocation0], 56
    %v84 = vld [vmem:[%s83] sm:$0x7]
    %vm85 = vcmask 64512
    %s86 = scalar_lea.vmem %s1, 21
    %87 = vst.msk [vmem:[%s86] sm:$0x7] %vm85, %v84
    %s88 = scalar_lea.vmem [#allocation0], 64
    %v89 = vld [vmem:[%s88] sm:$0x7]
    %vm90 = vcmask 64512
    %s91 = scalar_lea.vmem %s1, 24
    %92 = vst.msk [vmem:[%s91] sm:$0x7] %vm90, %v89
    %s93 = scalar_lea.vmem [#allocation0], 72
    %v94 = vld [vmem:[%s93] sm:$0x7]
    %vm95 = vcmask 64512
    %s96 = scalar_lea.vmem %s1, 27
    %97 = vst.msk [vmem:[%s96] sm:$0x7] %vm95, %v94
    %s98 = scalar_lea.vmem [#allocation0], 80
    %v99 = vld [vmem:[%s98] sm:$0x7]
    %vm100 = vcmask 64512
    %s101 = scalar_lea.vmem %s1, 30
    %102 = vst.msk [vmem:[%s101] sm:$0x7] %vm100, %v99
    %s103 = scalar_lea.vmem [#allocation0], 88
    %v104 = vld [vmem:[%s103] sm:$0x7]
    %vm105 = vcmask 64512
    %s106 = scalar_lea.vmem %s1, 33
    %107 = vst.msk [vmem:[%s106] sm:$0x7] %vm105, %v104

// kernel: rollout_encoder_forward.1
$region0: #{rollout_encoder_forward.1}
  #allocation0 [shape = 'u32[]', space=smem, size = 0x4, offset = 0x4, fixed_abs, tag = 'smem constant byte address 0x4 - core index']
  #allocation1 [shape = 'u32[72,128]{1,0:T(1,128)}', space=vmem, size = 0x9000, scoped, tag = 'internal scratch']
  %s0 = inlined_call_operand.vmem [shape: bf16[576,256], index: 0, kind: input, shape index: {}]
  %s1 = inlined_call_operand.vmem [shape: bf16[128,576], index: 1, kind: input, shape index: {}]
  %s2 = inlined_call_operand.vmem [shape: f32[128,1], index: 2, kind: input, shape index: {}]
  %s3 = inlined_call_operand.vmem [shape: bf16[2048,32], index: 3, kind: input, shape index: {}]
  %s4 = inlined_call_operand.vmem [shape: f32[1,32], index: 4, kind: input, shape index: {}]
  %s5 = inlined_call_operand.vmem [shape: f32[64,2], index: 5, kind: input, shape index: {}]
  %s6 = inlined_call_operand.vmem [shape: f32[64,16], index: 6, kind: input, shape index: {}]
  %s7 = inlined_call_operand.vmem [shape: f32[32,96], index: 7, kind: input, shape index: {}]
  %s8 = inlined_call_operand.vmem [shape: f32[2,96], index: 8, kind: input, shape index: {}]
  %s9 = inlined_call_operand.vmem [shape: f32[1,96], index: 9, kind: input, shape index: {}]
  %s10 = inlined_call_operand.vmem [shape: f32[32,96], index: 10, kind: input, shape index: {}]
  %s11 = inlined_call_operand.vmem [shape: f32[1,32], index: 11, kind: input, shape index: {}]
  %s12 = inlined_call_operand.vmem [shape: f32[32,32], index: 12, kind: input, shape index: {}]
  %s13 = inlined_call_operand.vmem [shape: f32[1,32], index: 13, kind: input, shape index: {}]
  %s14 = inlined_call_operand.hbm [shape: f32[2,32], index: 14, kind: output, shape index: {}]
  %s15 = sld [smem:[#allocation0]]
  $region66: #{rollout_encoder_forward.1} parent=0
    _
  %s17 = ssub.s32 1, %s15
  %s18 = scalar_select 0, %s17, %s15
  $region1: #{rollout_encoder_forward.1} parent=0
    #allocation2 [shape = 'u8[1024]{0}', space=vmem, size = 0x400, scoped, tag = 'output window, operand 0, single buffered']
    #allocation3 [shape = 's32[1]{0}', space=sflag, size = 0x4, scoped, tag = 'scoped memory for rollout_encoder_forward.1']
    %19 = vsyncpa [#allocation3], 0
    // Predicated region
    $region2: #{rollout_encoder_forward.1} parent=1 // pred_check
      _
    $region3: #{rollout_encoder_forward.1} parent=1 // pred_check_branch
      %21 = sbr.rel (0) target = $region5
    $region4: #{rollout_encoder_forward.1} parent=1 // pred_region
      _
    $region5: #{rollout_encoder_forward.1} parent=1 // pred_fallthru
      _
    // Predicated region
    $region6: #{rollout_encoder_forward.1} parent=1 // pred_check
      _
    $region7: #{rollout_encoder_forward.1} parent=1 // pred_check_branch
      %23 = sbr.rel (0) target = $region9
    $region8: #{rollout_encoder_forward.1} parent=1 // pred_region
      _
    $region9: #{rollout_encoder_forward.1} parent=1 // pred_fallthru
      _
    // Predicated region
    $region10: #{rollout_encoder_forward.1} parent=1 // pred_check
      _
    $region11: #{rollout_encoder_forward.1} parent=1 // pred_check_branch
      %25 = sbr.rel (0) target = $region13
    $region12: #{rollout_encoder_forward.1} parent=1 // pred_region
      _
    $region13: #{rollout_encoder_forward.1} parent=1 // pred_fallthru
      _
    // Predicated region
    $region14: #{rollout_encoder_forward.1} parent=1 // pred_check
      _
    $region15: #{rollout_encoder_forward.1} parent=1 // pred_check_branch
      %27 = sbr.rel (0) target = $region17
    $region16: #{rollout_encoder_forward.1} parent=1 // pred_region
      _
    $region17: #{rollout_encoder_forward.1} parent=1 // pred_fallthru
      _
    // Predicated region
    $region18: #{rollout_encoder_forward.1} parent=1 // pred_check
      _
    $region19: #{rollout_encoder_forward.1} parent=1 // pred_check_branch
      %29 = sbr.rel (0) target = $region21
    $region20: #{rollout_encoder_forward.1} parent=1 // pred_region
      _
    $region21: #{rollout_encoder_forward.1} parent=1 // pred_fallthru
      _
    // Predicated region
    $region22: #{rollout_encoder_forward.1} parent=1 // pred_check
      _
    $region23: #{rollout_encoder_forward.1} parent=1 // pred_check_branch
      %31 = sbr.rel (0) target = $region25
    $region24: #{rollout_encoder_forward.1} parent=1 // pred_region
      _
    $region25: #{rollout_encoder_forward.1} parent=1 // pred_fallthru
      _
    // Predicated region
    $region26: #{rollout_encoder_forward.1} parent=1 // pred_check
      _
    $region27: #{rollout_encoder_forward.1} parent=1 // pred_check_branch
      %33 = sbr.rel (0) target = $region29
    $region28: #{rollout_encoder_forward.1} parent=1 // pred_region
      _
    $region29: #{rollout_encoder_forward.1} parent=1 // pred_fallthru
      _
    // Predicated region
    $region30: #{rollout_encoder_forward.1} parent=1 // pred_check
      _
    $region31: #{rollout_encoder_forward.1} parent=1 // pred_check_branch
      %35 = sbr.rel (0) target = $region33
    $region32: #{rollout_encoder_forward.1} parent=1 // pred_region
      _
    $region33: #{rollout_encoder_forward.1} parent=1 // pred_fallthru
      _
    // Predicated region
    $region34: #{rollout_encoder_forward.1} parent=1 // pred_check
      _
    $region35: #{rollout_encoder_forward.1} parent=1 // pred_check_branch
      %37 = sbr.rel (0) target = $region37
    $region36: #{rollout_encoder_forward.1} parent=1 // pred_region
      _
    $region37: #{rollout_encoder_forward.1} parent=1 // pred_fallthru
      _
    // Predicated region
    $region38: #{rollout_encoder_forward.1} parent=1 // pred_check
      _
    $region39: #{rollout_encoder_forward.1} parent=1 // pred_check_branch
      %39 = sbr.rel (0) target = $region41
    $region40: #{rollout_encoder_forward.1} parent=1 // pred_region
      _
    $region41: #{rollout_encoder_forward.1} parent=1 // pred_fallthru
      _
    // Predicated region
    $region42: #{rollout_encoder_forward.1} parent=1 // pred_check
      _
    $region43: #{rollout_encoder_forward.1} parent=1 // pred_check_branch
      %41 = sbr.rel (0) target = $region45
    $region44: #{rollout_encoder_forward.1} parent=1 // pred_region
      _
    $region45: #{rollout_encoder_forward.1} parent=1 // pred_fallthru
      _
    // Predicated region
    $region46: #{rollout_encoder_forward.1} parent=1 // pred_check
      _
    $region47: #{rollout_encoder_forward.1} parent=1 // pred_check_branch
      %43 = sbr.rel (0) target = $region49
    $region48: #{rollout_encoder_forward.1} parent=1 // pred_region
      _
    $region49: #{rollout_encoder_forward.1} parent=1 // pred_fallthru
      _
    // Predicated region
    $region50: #{rollout_encoder_forward.1} parent=1 // pred_check
      _
    $region51: #{rollout_encoder_forward.1} parent=1 // pred_check_branch
      %45 = sbr.rel (0) target = $region53
    $region52: #{rollout_encoder_forward.1} parent=1 // pred_region
      _
    $region53: #{rollout_encoder_forward.1} parent=1 // pred_fallthru
      _
    // Predicated region
    $region54: #{rollout_encoder_forward.1} parent=1 // pred_check
      _
    $region55: #{rollout_encoder_forward.1} parent=1 // pred_check_branch
      %47 = sbr.rel (0) target = $region57
    $region56: #{rollout_encoder_forward.1} parent=1 // pred_region
      _
    $region57: #{rollout_encoder_forward.1} parent=1 // pred_fallthru
      _
    %v49 = vld [vmem:[%s1] sm:$0xff]
    %v50 = vld [vmem:[%s1 + $0x8] sm:$0xff]
    %v51 = vld [vmem:[%s1 + $0x10] sm:$0xf]
    %v52 = vld [vmem:[%s1 + $0x14] sm:$0xff]
    %v53 = vld [vmem:[%s1 + $0x1c] sm:$0xff]
    %v54 = vld [vmem:[%s1 + $0x24] sm:$0xf]
    %v55 = vld [vmem:[%s1 + $0x28] sm:$0xff]
    %v56 = vld [vmem:[%s1 + $0x30] sm:$0xff]
    %v57 = vld [vmem:[%s1 + $0x38] sm:$0xf]
    %v58 = vld [vmem:[%s1 + $0x3c] sm:$0xff]
    %v59 = vld [vmem:[%s1 + $0x44] sm:$0xff]
    %v60 = vld [vmem:[%s1 + $0x4c] sm:$0xf]
    %v61 = vld [vmem:[%s1 + $0x50] sm:$0xff]
    %v62 = vld [vmem:[%s1 + $0x58] sm:$0xff]
    %v63 = vld [vmem:[%s1 + $0x60] sm:$0xf]
    %v64 = vld [vmem:[%s1 + $0x64] sm:$0xff]
    %v65 = vld [vmem:[%s1 + $0x6c] sm:$0xff]
    %v66 = vld [vmem:[%s1 + $0x74] sm:$0xf]
    %v67 = vld [vmem:[%s1 + $0x78] sm:$0xff]
    %v68 = vld [vmem:[%s1 + $0x80] sm:$0xff]
    %v69 = vld [vmem:[%s1 + $0x88] sm:$0xf]
    %v70 = vld [vmem:[%s1 + $0x8c] sm:$0xff]
    %v71 = vld [vmem:[%s1 + $0x94] sm:$0xff]
    %v72 = vld [vmem:[%s1 + $0x9c] sm:$0xf]
    %v73 = vld [vmem:[%s1 + $0xa0] sm:$0xff]
    %v74 = vld [vmem:[%s1 + $0xa8] sm:$0xff]
    %v75 = vld [vmem:[%s1 + $0xb0] sm:$0xf]
    %v76 = vld [vmem:[%s1 + $0xb4] sm:$0xff]
    %v77 = vld [vmem:[%s1 + $0xbc] sm:$0xff]
    %v78 = vld [vmem:[%s1 + $0xc4] sm:$0xf]
    %v79 = vld [vmem:[%s1 + $0xc8] sm:$0xff]
    %v80 = vld [vmem:[%s1 + $0xd0] sm:$0xff]
    %v81 = vld [vmem:[%s1 + $0xd8] sm:$0xf]
    %v82 = vld [vmem:[%s1 + $0xdc] sm:$0xff]
    %v83 = vld [vmem:[%s1 + $0xe4] sm:$0xff]
    %v84 = vld [vmem:[%s1 + $0xec] sm:$0xf]
    %v85 = vld [vmem:[%s1 + $0xf0] sm:$0xff]
    %v86 = vld [vmem:[%s1 + $0xf8] sm:$0xff]
    %v87 = vld [vmem:[%s1 + $0x100] sm:$0xf]
    %v88 = vld [vmem:[%s1 + $0x104] sm:$0xff]
    %v89 = vld [vmem:[%s1 + $0x10c] sm:$0xff]
    %v90 = vld [vmem:[%s1 + $0x114] sm:$0xf]
    %v91 = vld [vmem:[%s1 + $0x118] sm:$0xff]
    %v92 = vld [vmem:[%s1 + $0x120] sm:$0xff]
    %v93 = vld [vmem:[%s1 + $0x128] sm:$0xf]
    %v94 = vld [vmem:[%s1 + $0x12c] sm:$0xff]
    %v95 = vld [vmem:[%s1 + $0x134] sm:$0xff]
    %v96 = vld [vmem:[%s1 + $0x13c] sm:$0xf]
    %v97 = vld [vmem:[%s0] sm:$0xff]
    %v98 = vld [vmem:[%s0 + $0x8] sm:$0xff]
    %v99 = vld [vmem:[%s0 + $0x10] sm:$0xff]
    %v100 = vld [vmem:[%s0 + $0x18] sm:$0xff]
    %v101 = vld [vmem:[%s0 + $0x20] sm:$0xff]
    %v102 = vld [vmem:[%s0 + $0x28] sm:$0xff]
    %v103 = vld [vmem:[%s0 + $0x30] sm:$0xff]
    %v104 = vld [vmem:[%s0 + $0x38] sm:$0xff]
    %v105 = vld [vmem:[%s0 + $0x40] sm:$0xff]
    %v106 = vld [vmem:[%s0 + $0x48] sm:$0xff]
    %v107 = vld [vmem:[%s0 + $0x50] sm:$0xff]
    %v108 = vld [vmem:[%s0 + $0x58] sm:$0xff]
    %v109 = vld [vmem:[%s0 + $0x60] sm:$0xff]
    %v110 = vld [vmem:[%s0 + $0x68] sm:$0xff]
    %v111 = vld [vmem:[%s0 + $0x70] sm:$0xff]
    %v112 = vld [vmem:[%s0 + $0x78] sm:$0xff]
    %v113 = vld [vmem:[%s0 + $0x80] sm:$0xff]
    %v114 = vld [vmem:[%s0 + $0x88] sm:$0xff]
    %v115 = vld [vmem:[%s0 + $0x90] sm:$0xff]
    %v116 = vld [vmem:[%s0 + $0x98] sm:$0xff]
    %v117 = vld [vmem:[%s0 + $0xa0] sm:$0xff]
    %v118 = vld [vmem:[%s0 + $0xa8] sm:$0xff]
    %v119 = vld [vmem:[%s0 + $0xb0] sm:$0xff]
    %v120 = vld [vmem:[%s0 + $0xb8] sm:$0xff]
    %v121 = vld [vmem:[%s0 + $0xc0] sm:$0xff]
    %v122 = vld [vmem:[%s0 + $0xc8] sm:$0xff]
    %v123 = vld [vmem:[%s0 + $0xd0] sm:$0xff]
    %v124 = vld [vmem:[%s0 + $0xd8] sm:$0xff]
    %v125 = vld [vmem:[%s0 + $0xe0] sm:$0xff]
    %v126 = vld [vmem:[%s0 + $0xe8] sm:$0xff]
    %v127 = vld [vmem:[%s0 + $0xf0] sm:$0xff]
    %v128 = vld [vmem:[%s0 + $0xf8] sm:$0xff]
    %v129 = vld [vmem:[%s0 + $0x100] sm:$0xff]
    %v130 = vld [vmem:[%s0 + $0x108] sm:$0xff]
    %v131 = vld [vmem:[%s0 + $0x110] sm:$0xff]
    %v132 = vld [vmem:[%s0 + $0x118] sm:$0xff]
    %v133 = vld [vmem:[%s0 + $0x120] sm:$0xff]
    %v134 = vld [vmem:[%s0 + $0x128] sm:$0xff]
    %v135 = vld [vmem:[%s0 + $0x130] sm:$0xff]
    %v136 = vld [vmem:[%s0 + $0x138] sm:$0xff]
    %v137 = vld [vmem:[%s0 + $0x140] sm:$0xff]
    %v138 = vld [vmem:[%s0 + $0x148] sm:$0xff]
    %v139 = vld [vmem:[%s0 + $0x150] sm:$0xff]
    %v140 = vld [vmem:[%s0 + $0x158] sm:$0xff]
    %v141 = vld [vmem:[%s0 + $0x160] sm:$0xff]
    %v142 = vld [vmem:[%s0 + $0x168] sm:$0xff]
    %v143 = vld [vmem:[%s0 + $0x170] sm:$0xff]
    %v144 = vld [vmem:[%s0 + $0x178] sm:$0xff]
    %v145 = vld [vmem:[%s0 + $0x180] sm:$0xff]
    %v146 = vld [vmem:[%s0 + $0x188] sm:$0xff]
    %v147 = vld [vmem:[%s0 + $0x190] sm:$0xff]
    %v148 = vld [vmem:[%s0 + $0x198] sm:$0xff]
    %v149 = vld [vmem:[%s0 + $0x1a0] sm:$0xff]
    %v150 = vld [vmem:[%s0 + $0x1a8] sm:$0xff]
    %v151 = vld [vmem:[%s0 + $0x1b0] sm:$0xff]
    %v152 = vld [vmem:[%s0 + $0x1b8] sm:$0xff]
    %v153 = vld [vmem:[%s0 + $0x1c0] sm:$0xff]
    %v154 = vld [vmem:[%s0 + $0x1c8] sm:$0xff]
    %v155 = vld [vmem:[%s0 + $0x1d0] sm:$0xff]
    %v156 = vld [vmem:[%s0 + $0x1d8] sm:$0xff]
    %v157 = vld [vmem:[%s0 + $0x1e0] sm:$0xff]
    %v158 = vld [vmem:[%s0 + $0x1e8] sm:$0xff]
    %v159 = vld [vmem:[%s0 + $0x1f0] sm:$0xff]
    %v160 = vld [vmem:[%s0 + $0x1f8] sm:$0xff]
    %v161 = vld [vmem:[%s0 + $0x200] sm:$0xff]
    %v162 = vld [vmem:[%s0 + $0x208] sm:$0xff]
    %v163 = vld [vmem:[%s0 + $0x210] sm:$0xff]
    %v164 = vld [vmem:[%s0 + $0x218] sm:$0xff]
    %v165 = vld [vmem:[%s0 + $0x220] sm:$0xff]
    %v166 = vld [vmem:[%s0 + $0x228] sm:$0xff]
    %v167 = vld [vmem:[%s0 + $0x230] sm:$0xff]
    %v168 = vld [vmem:[%s0 + $0x238] sm:$0xff]
    %v169 = vld [vmem:[%s2] sm:$0xff]
    %v170 = vld [vmem:[%s2 + $0x8] sm:$0xff]
    %v171 = vld [vmem:[%s2 + $0x10] sm:$0xff]
    %v172 = vld [vmem:[%s2 + $0x18] sm:$0xff]
    %v173 = vld [vmem:[%s2 + $0x20] sm:$0xff]
    %v174 = vld [vmem:[%s2 + $0x28] sm:$0xff]
    %v175 = vld [vmem:[%s2 + $0x30] sm:$0xff]
    %v176 = vld [vmem:[%s2 + $0x38] sm:$0xff]
    %v177 = vld [vmem:[%s2 + $0x40] sm:$0xff]
    %v178 = vld [vmem:[%s2 + $0x48] sm:$0xff]
    %v179 = vld [vmem:[%s2 + $0x50] sm:$0xff]
    %v180 = vld [vmem:[%s2 + $0x58] sm:$0xff]
    %v181 = vld [vmem:[%s2 + $0x60] sm:$0xff]
    %v182 = vld [vmem:[%s2 + $0x68] sm:$0xff]
    %v183 = vld [vmem:[%s2 + $0x70] sm:$0xff]
    %v184 = vld [vmem:[%s2 + $0x78] sm:$0xff]
    %186 = vset.pattern.permute.xlu0 0
    %187 = vperm.xlu0 %186, %v169
    %v188 = vpop.permute.xlu0 %187
    %191 = vset.pattern.permute.xlu0 0
    %192 = vperm.xlu0 %191, %v170
    %v193 = vpop.permute.xlu0 %192
    %196 = vset.pattern.permute.xlu0 0
    %197 = vperm.xlu0 %196, %v171
    %v198 = vpop.permute.xlu0 %197
    %201 = vset.pattern.permute.xlu0 0
    %202 = vperm.xlu0 %201, %v172
    %v203 = vpop.permute.xlu0 %202
    %206 = vset.pattern.permute.xlu0 0
    %207 = vperm.xlu0 %206, %v173
    %v208 = vpop.permute.xlu0 %207
    %211 = vset.pattern.permute.xlu0 0
    %212 = vperm.xlu0 %211, %v174
    %v213 = vpop.permute.xlu0 %212
    %216 = vset.pattern.permute.xlu0 0
    %217 = vperm.xlu0 %216, %v175
    %v218 = vpop.permute.xlu0 %217
    %221 = vset.pattern.permute.xlu0 0
    %222 = vperm.xlu0 %221, %v176
    %v223 = vpop.permute.xlu0 %222
    %226 = vset.pattern.permute.xlu0 0
    %227 = vperm.xlu0 %226, %v177
    %v228 = vpop.permute.xlu0 %227
    %231 = vset.pattern.permute.xlu0 0
    %232 = vperm.xlu0 %231, %v178
    %v233 = vpop.permute.xlu0 %232
    %236 = vset.pattern.permute.xlu0 0
    %237 = vperm.xlu0 %236, %v179
    %v238 = vpop.permute.xlu0 %237
    %241 = vset.pattern.permute.xlu0 0
    %242 = vperm.xlu0 %241, %v180
    %v243 = vpop.permute.xlu0 %242
    %246 = vset.pattern.permute.xlu0 0
    %247 = vperm.xlu0 %246, %v181
    %v248 = vpop.permute.xlu0 %247
    %251 = vset.pattern.permute.xlu0 0
    %252 = vperm.xlu0 %251, %v182
    %v253 = vpop.permute.xlu0 %252
    %256 = vset.pattern.permute.xlu0 0
    %257 = vperm.xlu0 %256, %v183
    %v258 = vpop.permute.xlu0 %257
    %261 = vset.pattern.permute.xlu0 0
    %262 = vperm.xlu0 %261, %v184
    %v263 = vpop.permute.xlu0 %262
    %v313 = vunpack.c.l.b16 %v49
    %v314 = vunpack.c.h.b16 %v49
    %v315 = vunpack.c.l.b16 %v50
    %v316 = vunpack.c.h.b16 %v50
    %v317 = vunpack.c.l.b16 %v51
    %v318 = vunpack.c.l.b16 %v52
    %v319 = vunpack.c.h.b16 %v52
    %v320 = vunpack.c.l.b16 %v53
    %v321 = vunpack.c.h.b16 %v53
    %v322 = vunpack.c.l.b16 %v54
    %v323 = vunpack.c.l.b16 %v55
    %v324 = vunpack.c.h.b16 %v55
    %v325 = vunpack.c.l.b16 %v56
    %v326 = vunpack.c.h.b16 %v56
    %v327 = vunpack.c.l.b16 %v57
    %v328 = vunpack.c.l.b16 %v58
    %v329 = vunpack.c.h.b16 %v58
    %v330 = vunpack.c.l.b16 %v59
    %v331 = vunpack.c.h.b16 %v59
    %v332 = vunpack.c.l.b16 %v60
    %v333 = vunpack.c.l.b16 %v61
    %v334 = vunpack.c.h.b16 %v61
    %v335 = vunpack.c.l.b16 %v62
    %v336 = vunpack.c.h.b16 %v62
    %v337 = vunpack.c.l.b16 %v63
    %v338 = vunpack.c.l.b16 %v64
    %v339 = vunpack.c.h.b16 %v64
    %v340 = vunpack.c.l.b16 %v65
    %v341 = vunpack.c.h.b16 %v65
    %v342 = vunpack.c.l.b16 %v66
    %v343 = vunpack.c.l.b16 %v67
    %v344 = vunpack.c.h.b16 %v67
    %v345 = vunpack.c.l.b16 %v68
    %v346 = vunpack.c.h.b16 %v68
    %v347 = vunpack.c.l.b16 %v69
    %v348 = vunpack.c.l.b16 %v70
    %v349 = vunpack.c.h.b16 %v70
    %v350 = vunpack.c.l.b16 %v71
    %v351 = vunpack.c.h.b16 %v71
    %v352 = vunpack.c.l.b16 %v72
    %v353 = vunpack.c.l.b16 %v73
    %v354 = vunpack.c.h.b16 %v73
    %v355 = vunpack.c.l.b16 %v74
    %v356 = vunpack.c.h.b16 %v74
    %v357 = vunpack.c.l.b16 %v75
    %v358 = vunpack.c.l.b16 %v76
    %v359 = vunpack.c.h.b16 %v76
    %v360 = vunpack.c.l.b16 %v77
    %v361 = vunpack.c.h.b16 %v77
    %v362 = vunpack.c.l.b16 %v78
    %v363 = vunpack.c.l.b16 %v79
    %v364 = vunpack.c.h.b16 %v79
    %v365 = vunpack.c.l.b16 %v80
    %v366 = vunpack.c.h.b16 %v80
    %v367 = vunpack.c.l.b16 %v81
    %v368 = vunpack.c.l.b16 %v82
    %v369 = vunpack.c.h.b16 %v82
    %v370 = vunpack.c.l.b16 %v83
    %v371 = vunpack.c.h.b16 %v83
    %v372 = vunpack.c.l.b16 %v84
    %v373 = vunpack.c.l.b16 %v85
    %v374 = vunpack.c.h.b16 %v85
    %v375 = vunpack.c.l.b16 %v86
    %v376 = vunpack.c.h.b16 %v86
    %v377 = vunpack.c.l.b16 %v87
    %v378 = vunpack.c.l.b16 %v88
    %v379 = vunpack.c.h.b16 %v88
    %v380 = vunpack.c.l.b16 %v89
    %v381 = vunpack.c.h.b16 %v89
    %v382 = vunpack.c.l.b16 %v90
    %v383 = vunpack.c.l.b16 %v91
    %v384 = vunpack.c.h.b16 %v91
    %v385 = vunpack.c.l.b16 %v92
    %v386 = vunpack.c.h.b16 %v92
    %v387 = vunpack.c.l.b16 %v93
    %v388 = vunpack.c.l.b16 %v94
    %v389 = vunpack.c.h.b16 %v94
    %v390 = vunpack.c.l.b16 %v95
    %v391 = vunpack.c.h.b16 %v95
    %v392 = vunpack.c.l.b16 %v96
    %v393 = vpack.c.b16 %v318, %v313
    %v394 = vpack.c.b16 %v319, %v314
    %v395 = vpack.c.b16 %v320, %v315
    %v396 = vpack.c.b16 %v321, %v316
    %v397 = vpack.c.b16 %v322, %v317
    %v398 = vpack.c.b16 %v328, %v323
    %v399 = vpack.c.b16 %v329, %v324
    %v400 = vpack.c.b16 %v330, %v325
    %v401 = vpack.c.b16 %v331, %v326
    %v402 = vpack.c.b16 %v332, %v327
    %v403 = vpack.c.b16 %v338, %v333
    %v404 = vpack.c.b16 %v339, %v334
    %v405 = vpack.c.b16 %v340, %v335
    %v406 = vpack.c.b16 %v341, %v336
    %v407 = vpack.c.b16 %v342, %v337
    %v408 = vpack.c.b16 %v348, %v343
    %v409 = vpack.c.b16 %v349, %v344
    %v410 = vpack.c.b16 %v350, %v345
    %v411 = vpack.c.b16 %v351, %v346
    %v412 = vpack.c.b16 %v352, %v347
    %v413 = vpack.c.b16 %v358, %v353
    %v414 = vpack.c.b16 %v359, %v354
    %v415 = vpack.c.b16 %v360, %v355
    %v416 = vpack.c.b16 %v361, %v356
    %v417 = vpack.c.b16 %v362, %v357
    %v418 = vpack.c.b16 %v368, %v363
    %v419 = vpack.c.b16 %v369, %v364
    %v420 = vpack.c.b16 %v370, %v365
    %v421 = vpack.c.b16 %v371, %v366
    %v422 = vpack.c.b16 %v372, %v367
    %v423 = vpack.c.b16 %v378, %v373
    %v424 = vpack.c.b16 %v379, %v374
    %v425 = vpack.c.b16 %v380, %v375
    %v426 = vpack.c.b16 %v381, %v376
    %v427 = vpack.c.b16 %v382, %v377
    %v428 = vpack.c.b16 %v388, %v383
    %v429 = vpack.c.b16 %v389, %v384
    %v430 = vpack.c.b16 %v390, %v385
    %v431 = vpack.c.b16 %v391, %v386
    %v432 = vpack.c.b16 %v392, %v387
    %v537 = vunpack.c.l.b16 %v97
    %v538 = vunpack.c.h.b16 %v97
    %v539 = vunpack.c.l.b16 %v98
    %v540 = vunpack.c.h.b16 %v98
    %v541 = vunpack.c.l.b16 %v99
    %v542 = vunpack.c.h.b16 %v99
    %v543 = vunpack.c.l.b16 %v100
    %v544 = vunpack.c.h.b16 %v100
    %v545 = vunpack.c.l.b16 %v101
    %v546 = vunpack.c.h.b16 %v101
    %v547 = vunpack.c.l.b16 %v102
    %v548 = vunpack.c.h.b16 %v102
    %v549 = vunpack.c.l.b16 %v103
    %v550 = vunpack.c.h.b16 %v103
    %v551 = vunpack.c.l.b16 %v104
    %v552 = vunpack.c.h.b16 %v104
    %v553 = vunpack.c.l.b16 %v105
    %v554 = vunpack.c.h.b16 %v105
    %v555 = vunpack.c.l.b16 %v106
    %v556 = vunpack.c.h.b16 %v106
    %v557 = vunpack.c.l.b16 %v107
    %v558 = vunpack.c.h.b16 %v107
    %v559 = vunpack.c.l.b16 %v108
    %v560 = vunpack.c.h.b16 %v108
    %v561 = vunpack.c.l.b16 %v109
    %v562 = vunpack.c.h.b16 %v109
    %v563 = vunpack.c.l.b16 %v110
    %v564 = vunpack.c.h.b16 %v110
    %v565 = vunpack.c.l.b16 %v111
    %v566 = vunpack.c.h.b16 %v111
    %v567 = vunpack.c.l.b16 %v112
    %v568 = vunpack.c.h.b16 %v112
    %v569 = vunpack.c.l.b16 %v113
    %v570 = vunpack.c.h.b16 %v113
    %v571 = vunpack.c.l.b16 %v114
    %v572 = vunpack.c.h.b16 %v114
    %v573 = vunpack.c.l.b16 %v115
    %v574 = vunpack.c.h.b16 %v115
    %v575 = vunpack.c.l.b16 %v116
    %v576 = vunpack.c.h.b16 %v116
    %v577 = vunpack.c.l.b16 %v117
    %v578 = vunpack.c.h.b16 %v117
    %v579 = vunpack.c.l.b16 %v118
    %v580 = vunpack.c.h.b16 %v118
    %v581 = vunpack.c.l.b16 %v119
    %v582 = vunpack.c.h.b16 %v119
    %v583 = vunpack.c.l.b16 %v120
    %v584 = vunpack.c.h.b16 %v120
    %v585 = vunpack.c.l.b16 %v121
    %v586 = vunpack.c.h.b16 %v121
    %v587 = vunpack.c.l.b16 %v122
    %v588 = vunpack.c.h.b16 %v122
    %v589 = vunpack.c.l.b16 %v123
    %v590 = vunpack.c.h.b16 %v123
    %v591 = vunpack.c.l.b16 %v124
    %v592 = vunpack.c.h.b16 %v124
    %v593 = vunpack.c.l.b16 %v125
    %v594 = vunpack.c.h.b16 %v125
    %v595 = vunpack.c.l.b16 %v126
    %v596 = vunpack.c.h.b16 %v126
    %v597 = vunpack.c.l.b16 %v127
    %v598 = vunpack.c.h.b16 %v127
    %v599 = vunpack.c.l.b16 %v128
    %v600 = vunpack.c.h.b16 %v128
    %v601 = vunpack.c.l.b16 %v129
    %v602 = vunpack.c.h.b16 %v129
    %v603 = vunpack.c.l.b16 %v130
    %v604 = vunpack.c.h.b16 %v130
    %v605 = vunpack.c.l.b16 %v131
    %v606 = vunpack.c.h.b16 %v131
    %v607 = vunpack.c.l.b16 %v132
    %v608 = vunpack.c.h.b16 %v132
    %v609 = vunpack.c.l.b16 %v133
    %v610 = vunpack.c.h.b16 %v133
    %v611 = vunpack.c.l.b16 %v134
    %v612 = vunpack.c.h.b16 %v134
    %v613 = vunpack.c.l.b16 %v135
    %v614 = vunpack.c.h.b16 %v135
    %v615 = vunpack.c.l.b16 %v136
    %v616 = vunpack.c.h.b16 %v136
    %v617 = vunpack.c.l.b16 %v137
    %v618 = vunpack.c.h.b16 %v137
    %v619 = vunpack.c.l.b16 %v138
    %v620 = vunpack.c.h.b16 %v138
    %v621 = vunpack.c.l.b16 %v139
    %v622 = vunpack.c.h.b16 %v139
    %v623 = vunpack.c.l.b16 %v140
    %v624 = vunpack.c.h.b16 %v140
    %v625 = vunpack.c.l.b16 %v141
    %v626 = vunpack.c.h.b16 %v141
    %v627 = vunpack.c.l.b16 %v142
    %v628 = vunpack.c.h.b16 %v142
    %v629 = vunpack.c.l.b16 %v143
    %v630 = vunpack.c.h.b16 %v143
    %v631 = vunpack.c.l.b16 %v144
    %v632 = vunpack.c.h.b16 %v144
    %v633 = vunpack.c.l.b16 %v145
    %v634 = vunpack.c.h.b16 %v145
    %v635 = vunpack.c.l.b16 %v146
    %v636 = vunpack.c.h.b16 %v146
    %v637 = vunpack.c.l.b16 %v147
    %v638 = vunpack.c.h.b16 %v147
    %v639 = vunpack.c.l.b16 %v148
    %v640 = vunpack.c.h.b16 %v148
    %v641 = vunpack.c.l.b16 %v149
    %v642 = vunpack.c.h.b16 %v149
    %v643 = vunpack.c.l.b16 %v150
    %v644 = vunpack.c.h.b16 %v150
    %v645 = vunpack.c.l.b16 %v151
    %v646 = vunpack.c.h.b16 %v151
    %v647 = vunpack.c.l.b16 %v152
    %v648 = vunpack.c.h.b16 %v152
    %v649 = vunpack.c.l.b16 %v153
    %v650 = vunpack.c.h.b16 %v153
    %v651 = vunpack.c.l.b16 %v154
    %v652 = vunpack.c.h.b16 %v154
    %v653 = vunpack.c.l.b16 %v155
    %v654 = vunpack.c.h.b16 %v155
    %v655 = vunpack.c.l.b16 %v156
    %v656 = vunpack.c.h.b16 %v156
    %v657 = vunpack.c.l.b16 %v157
    %v658 = vunpack.c.h.b16 %v157
    %v659 = vunpack.c.l.b16 %v158
    %v660 = vunpack.c.h.b16 %v158
    %v661 = vunpack.c.l.b16 %v159
    %v662 = vunpack.c.h.b16 %v159
    %v663 = vunpack.c.l.b16 %v160
    %v664 = vunpack.c.h.b16 %v160
    %v665 = vunpack.c.l.b16 %v161
    %v666 = vunpack.c.h.b16 %v161
    %v667 = vunpack.c.l.b16 %v162
    %v668 = vunpack.c.h.b16 %v162
    %v669 = vunpack.c.l.b16 %v163
    %v670 = vunpack.c.h.b16 %v163
    %v671 = vunpack.c.l.b16 %v164
    %v672 = vunpack.c.h.b16 %v164
    %v673 = vunpack.c.l.b16 %v165
    %v674 = vunpack.c.h.b16 %v165
    %v675 = vunpack.c.l.b16 %v166
    %v676 = vunpack.c.h.b16 %v166
    %v677 = vunpack.c.l.b16 %v167
    %v678 = vunpack.c.h.b16 %v167
    %v679 = vunpack.c.l.b16 %v168
    %v680 = vunpack.c.h.b16 %v168
    %v681 = vpack.c.b16 %v539, %v537
    %v682 = vpack.c.b16 %v540, %v538
    %v683 = vpack.c.b16 %v543, %v541
    %v684 = vpack.c.b16 %v544, %v542
    %v685 = vpack.c.b16 %v547, %v545
    %v686 = vpack.c.b16 %v548, %v546
    %v687 = vpack.c.b16 %v551, %v549
    %v688 = vpack.c.b16 %v552, %v550
    %v689 = vpack.c.b16 %v555, %v553
    %v690 = vpack.c.b16 %v556, %v554
    %v691 = vpack.c.b16 %v559, %v557
    %v692 = vpack.c.b16 %v560, %v558
    %v693 = vpack.c.b16 %v563, %v561
    %v694 = vpack.c.b16 %v564, %v562
    %v695 = vpack.c.b16 %v567, %v565
    %v696 = vpack.c.b16 %v568, %v566
    %v697 = vpack.c.b16 %v571, %v569
    %v698 = vpack.c.b16 %v572, %v570
    %v699 = vpack.c.b16 %v575, %v573
    %v700 = vpack.c.b16 %v576, %v574
    %v701 = vpack.c.b16 %v579, %v577
    %v702 = vpack.c.b16 %v580, %v578
    %v703 = vpack.c.b16 %v583, %v581
    %v704 = vpack.c.b16 %v584, %v582
    %v705 = vpack.c.b16 %v587, %v585
    %v706 = vpack.c.b16 %v588, %v586
    %v707 = vpack.c.b16 %v591, %v589
    %v708 = vpack.c.b16 %v592, %v590
    %v709 = vpack.c.b16 %v595, %v593
    %v710 = vpack.c.b16 %v596, %v594
    %v711 = vpack.c.b16 %v599, %v597
    %v712 = vpack.c.b16 %v600, %v598
    %v713 = vpack.c.b16 %v603, %v601
    %v714 = vpack.c.b16 %v604, %v602
    %v715 = vpack.c.b16 %v607, %v605
    %v716 = vpack.c.b16 %v608, %v606
    %v717 = vpack.c.b16 %v611, %v609
    %v718 = vpack.c.b16 %v612, %v610
    %v719 = vpack.c.b16 %v615, %v613
    %v720 = vpack.c.b16 %v616, %v614
    %v721 = vpack.c.b16 %v619, %v617
    %v722 = vpack.c.b16 %v620, %v618
    %v723 = vpack.c.b16 %v623, %v621
    %v724 = vpack.c.b16 %v624, %v622
    %v725 = vpack.c.b16 %v627, %v625
    %v726 = vpack.c.b16 %v628, %v626
    %v727 = vpack.c.b16 %v631, %v629
    %v728 = vpack.c.b16 %v632, %v630
    %v729 = vpack.c.b16 %v635, %v633
    %v730 = vpack.c.b16 %v636, %v634
    %v731 = vpack.c.b16 %v639, %v637
    %v732 = vpack.c.b16 %v640, %v638
    %v733 = vpack.c.b16 %v643, %v641
    %v734 = vpack.c.b16 %v644, %v642
    %v735 = vpack.c.b16 %v647, %v645
    %v736 = vpack.c.b16 %v648, %v646
    %v737 = vpack.c.b16 %v651, %v649
    %v738 = vpack.c.b16 %v652, %v650
    %v739 = vpack.c.b16 %v655, %v653
    %v740 = vpack.c.b16 %v656, %v654
    %v741 = vpack.c.b16 %v659, %v657
    %v742 = vpack.c.b16 %v660, %v658
    %v743 = vpack.c.b16 %v663, %v661
    %v744 = vpack.c.b16 %v664, %v662
    %v745 = vpack.c.b16 %v667, %v665
    %v746 = vpack.c.b16 %v668, %v666
    %v747 = vpack.c.b16 %v671, %v669
    %v748 = vpack.c.b16 %v672, %v670
    %v749 = vpack.c.b16 %v675, %v673
    %v750 = vpack.c.b16 %v676, %v674
    %v751 = vpack.c.b16 %v679, %v677
    %v752 = vpack.c.b16 %v680, %v678
    %vm825 = vcmask 523264
    %v827 = vsel %vm825, %v397, 0
    %v830 = vsel %vm825, %v402, 0
    %v833 = vsel %vm825, %v407, 0
    %v836 = vsel %vm825, %v412, 0
    %v839 = vsel %vm825, %v417, 0
    %v842 = vsel %vm825, %v422, 0
    %v845 = vsel %vm825, %v427, 0
    %v848 = vsel %vm825, %v432, 0
    %850 = vmatpush.bf16.msra.mxu0 %v695
    %851 = vmatpush.bf16.msra.mxu0 %v693
    %852 = vmatpush.bf16.msra.mxu0 %v691
    %853 = vmatpush.bf16.msra.mxu0 %v689
    %854 = vmatpush.bf16.msra.mxu0 %v687
    %855 = vmatpush.bf16.msra.mxu0 %v685
    %856 = vmatpush.bf16.msra.mxu0 %v683
    %857 = vmatpush.bf16.msra.mxu0 %v681
    %858 = vmatmul.bf16.gmra.mxu0 %v393
    %v859 = vpop.f32.mrf.mxu0
    %v860 = vadd.f32 %v188, %v859
    %v861 = vpop.f32.mrf.mxu0
    %v862 = vadd.f32 %v193, %v861
    %863 = vmatmul.bf16.gmra.mxu0 %v398
    %v864 = vpop.f32.mrf.mxu0
    %v865 = vadd.f32 %v198, %v864
    %v866 = vpop.f32.mrf.mxu0
    %v867 = vadd.f32 %v203, %v866
    %868 = vmatmul.bf16.gmra.mxu0 %v403
    %v869 = vpop.f32.mrf.mxu0
    %v870 = vadd.f32 %v208, %v869
    %v871 = vpop.f32.mrf.mxu0
    %v872 = vadd.f32 %v213, %v871
    %873 = vmatmul.bf16.gmra.mxu0 %v408
    %v874 = vpop.f32.mrf.mxu0
    %v875 = vadd.f32 %v218, %v874
    %v876 = vpop.f32.mrf.mxu0
    %v877 = vadd.f32 %v223, %v876
    %878 = vmatmul.bf16.gmra.mxu0 %v413
    %v879 = vpop.f32.mrf.mxu0
    %v880 = vadd.f32 %v228, %v879
    %v881 = vpop.f32.mrf.mxu0
    %v882 = vadd.f32 %v233, %v881
    %883 = vmatmul.bf16.gmra.mxu0 %v418
    %v884 = vpop.f32.mrf.mxu0
    %v885 = vadd.f32 %v238, %v884
    %v886 = vpop.f32.mrf.mxu0
    %v887 = vadd.f32 %v243, %v886
    %888 = vmatmul.bf16.gmra.mxu0 %v423
    %v889 = vpop.f32.mrf.mxu0
    %v890 = vadd.f32 %v248, %v889
    %v891 = vpop.f32.mrf.mxu0
    %v892 = vadd.f32 %v253, %v891
    %893 = vmatmul.bf16.gmra.mxu0 %v428
    %v894 = vpop.f32.mrf.mxu0
    %v895 = vadd.f32 %v258, %v894
    %v896 = vpop.f32.mrf.mxu0
    %v897 = vadd.f32 %v263, %v896
    %898 = vdwg.mxu0
    %899 = vmatpush.bf16.msra.mxu0 %v711
    %900 = vmatpush.bf16.msra.mxu0 %v709
    %901 = vmatpush.bf16.msra.mxu0 %v707
    %902 = vmatpush.bf16.msra.mxu0 %v705
    %903 = vmatpush.bf16.msra.mxu0 %v703
    %904 = vmatpush.bf16.msra.mxu0 %v701
    %905 = vmatpush.bf16.msra.mxu0 %v699
    %906 = vmatpush.bf16.msra.mxu0 %v697
    %907 = vmatmul.bf16.gmra.mxu0 %v394
    %v908 = vpop.f32.mrf.mxu0
    %v909 = vadd.f32 %v860, %v908
    %v910 = vpop.f32.mrf.mxu0
    %v911 = vadd.f32 %v862, %v910
    %912 = vmatmul.bf16.gmra.mxu0 %v399
    %v913 = vpop.f32.mrf.mxu0
    %v914 = vadd.f32 %v865, %v913
    %v915 = vpop.f32.mrf.mxu0
    %v916 = vadd.f32 %v867, %v915
    %917 = vmatmul.bf16.gmra.mxu0 %v404
    %v918 = vpop.f32.mrf.mxu0
    %v919 = vadd.f32 %v870, %v918
    %v920 = vpop.f32.mrf.mxu0
    %v921 = vadd.f32 %v872, %v920
    %922 = vmatmul.bf16.gmra.mxu0 %v409
    %v923 = vpop.f32.mrf.mxu0
    %v924 = vadd.f32 %v875, %v923
    %v925 = vpop.f32.mrf.mxu0
    %v926 = vadd.f32 %v877, %v925
    %927 = vmatmul.bf16.gmra.mxu0 %v414
    %v928 = vpop.f32.mrf.mxu0
    %v929 = vadd.f32 %v880, %v928
    %v930 = vpop.f32.mrf.mxu0
    %v931 = vadd.f32 %v882, %v930
    %932 = vmatmul.bf16.gmra.mxu0 %v419
    %v933 = vpop.f32.mrf.mxu0
    %v934 = vadd.f32 %v885, %v933
    %v935 = vpop.f32.mrf.mxu0
    %v936 = vadd.f32 %v887, %v935
    %937 = vmatmul.bf16.gmra.mxu0 %v424
    %v938 = vpop.f32.mrf.mxu0
    %v939 = vadd.f32 %v890, %v938
    %v940 = vpop.f32.mrf.mxu0
    %v941 = vadd.f32 %v892, %v940
    %942 = vmatmul.bf16.gmra.mxu0 %v429
    %v943 = vpop.f32.mrf.mxu0
    %v944 = vadd.f32 %v895, %v943
    %v945 = vpop.f32.mrf.mxu0
    %v946 = vadd.f32 %v897, %v945
    %947 = vdwg.mxu0
    %948 = vmatpush.bf16.msra.mxu0 %v727
    %949 = vmatpush.bf16.msra.mxu0 %v725
    %950 = vmatpush.bf16.msra.mxu0 %v723
    %951 = vmatpush.bf16.msra.mxu0 %v721
    %952 = vmatpush.bf16.msra.mxu0 %v719
    %953 = vmatpush.bf16.msra.mxu0 %v717
    %954 = vmatpush.bf16.msra.mxu0 %v715
    %955 = vmatpush.bf16.msra.mxu0 %v713
    %956 = vmatmul.bf16.gmra.mxu0 %v395
    %v957 = vpop.f32.mrf.mxu0
    %v958 = vadd.f32 %v909, %v957
    %v959 = vpop.f32.mrf.mxu0
    %v960 = vadd.f32 %v911, %v959
    %961 = vmatmul.bf16.gmra.mxu0 %v400
    %v962 = vpop.f32.mrf.mxu0
    %v963 = vadd.f32 %v914, %v962
    %v964 = vpop.f32.mrf.mxu0
    %v965 = vadd.f32 %v916, %v964
    %966 = vmatmul.bf16.gmra.mxu0 %v405
    %v967 = vpop.f32.mrf.mxu0
    %v968 = vadd.f32 %v919, %v967
    %v969 = vpop.f32.mrf.mxu0
    %v970 = vadd.f32 %v921, %v969
    %971 = vmatmul.bf16.gmra.mxu0 %v410
    %v972 = vpop.f32.mrf.mxu0
    %v973 = vadd.f32 %v924, %v972
    %v974 = vpop.f32.mrf.mxu0
    %v975 = vadd.f32 %v926, %v974
    %976 = vmatmul.bf16.gmra.mxu0 %v415
    %v977 = vpop.f32.mrf.mxu0
    %v978 = vadd.f32 %v929, %v977
    %v979 = vpop.f32.mrf.mxu0
    %v980 = vadd.f32 %v931, %v979
    %981 = vmatmul.bf16.gmra.mxu0 %v420
    %v982 = vpop.f32.mrf.mxu0
    %v983 = vadd.f32 %v934, %v982
    %v984 = vpop.f32.mrf.mxu0
    %v985 = vadd.f32 %v936, %v984
    %986 = vmatmul.bf16.gmra.mxu0 %v425
    %v987 = vpop.f32.mrf.mxu0
    %v988 = vadd.f32 %v939, %v987
    %v989 = vpop.f32.mrf.mxu0
    %v990 = vadd.f32 %v941, %v989
    %991 = vmatmul.bf16.gmra.mxu0 %v430
    %v992 = vpop.f32.mrf.mxu0
    %v993 = vadd.f32 %v944, %v992
    %v994 = vpop.f32.mrf.mxu0
    %v995 = vadd.f32 %v946, %v994
    %996 = vdwg.mxu0
    %997 = vmatpush.bf16.msra.mxu0 %v743
    %998 = vmatpush.bf16.msra.mxu0 %v741
    %999 = vmatpush.bf16.msra.mxu0 %v739
    %1000 = vmatpush.bf16.msra.mxu0 %v737
    %1001 = vmatpush.bf16.msra.mxu0 %v735
    %1002 = vmatpush.bf16.msra.mxu0 %v733
    %1003 = vmatpush.bf16.msra.mxu0 %v731
    %1004 = vmatpush.bf16.msra.mxu0 %v729
    %1005 = vmatmul.bf16.gmra.mxu0 %v396
    %v1006 = vpop.f32.mrf.mxu0
    %v1007 = vadd.f32 %v958, %v1006
    %v1008 = vpop.f32.mrf.mxu0
    %v1009 = vadd.f32 %v960, %v1008
    %1010 = vmatmul.bf16.gmra.mxu0 %v401
    %v1011 = vpop.f32.mrf.mxu0
    %v1012 = vadd.f32 %v963, %v1011
    %v1013 = vpop.f32.mrf.mxu0
    %v1014 = vadd.f32 %v965, %v1013
    %1015 = vmatmul.bf16.gmra.mxu0 %v406
    %v1016 = vpop.f32.mrf.mxu0
    %v1017 = vadd.f32 %v968, %v1016
    %v1018 = vpop.f32.mrf.mxu0
    %v1019 = vadd.f32 %v970, %v1018
    %1020 = vmatmul.bf16.gmra.mxu0 %v411
    %v1021 = vpop.f32.mrf.mxu0
    %v1022 = vadd.f32 %v973, %v1021
    %v1023 = vpop.f32.mrf.mxu0
    %v1024 = vadd.f32 %v975, %v1023
    %1025 = vmatmul.bf16.gmra.mxu0 %v416
    %v1026 = vpop.f32.mrf.mxu0
    %v1027 = vadd.f32 %v978, %v1026
    %v1028 = vpop.f32.mrf.mxu0
    %v1029 = vadd.f32 %v980, %v1028
    %1030 = vmatmul.bf16.gmra.mxu0 %v421
    %v1031 = vpop.f32.mrf.mxu0
    %v1032 = vadd.f32 %v983, %v1031
    %v1033 = vpop.f32.mrf.mxu0
    %v1034 = vadd.f32 %v985, %v1033
    %1035 = vmatmul.bf16.gmra.mxu0 %v426
    %v1036 = vpop.f32.mrf.mxu0
    %v1037 = vadd.f32 %v988, %v1036
    %v1038 = vpop.f32.mrf.mxu0
    %v1039 = vadd.f32 %v990, %v1038
    %1040 = vmatmul.bf16.gmra.mxu0 %v431
    %v1041 = vpop.f32.mrf.mxu0
    %v1042 = vadd.f32 %v993, %v1041
    %v1043 = vpop.f32.mrf.mxu0
    %v1044 = vadd.f32 %v995, %v1043
    %1045 = vdwg.mxu0
    %1046 = vmatpush.bf16.msra.mxu0 0
    %1047 = vmatpush.bf16.msra.mxu0 0
    %1048 = vmatpush.bf16.msra.mxu0 0
    %1049 = vmatpush.bf16.msra.mxu0 0
    %1050 = vmatpush.bf16.msra.mxu0 %v751
    %1051 = vmatpush.bf16.msra.mxu0 %v749
    %1052 = vmatpush.bf16.msra.mxu0 %v747
    %1053 = vmatpush.bf16.msra.mxu0 %v745
    %1054 = vmatmul.bf16.gmra.mxu0 %v827
    %v1055 = vpop.f32.mrf.mxu0
    %v1056 = vadd.f32 %v1007, %v1055
    %v1057 = vpop.f32.mrf.mxu0
    %v1058 = vadd.f32 %v1009, %v1057
    %1059 = vmatmul.bf16.gmra.mxu0 %v830
    %v1060 = vpop.f32.mrf.mxu0
    %v1061 = vadd.f32 %v1012, %v1060
    %v1062 = vpop.f32.mrf.mxu0
    %v1063 = vadd.f32 %v1014, %v1062
    %1064 = vmatmul.bf16.gmra.mxu0 %v833
    %v1065 = vpop.f32.mrf.mxu0
    %v1066 = vadd.f32 %v1017, %v1065
    %v1067 = vpop.f32.mrf.mxu0
    %v1068 = vadd.f32 %v1019, %v1067
    %1069 = vmatmul.bf16.gmra.mxu0 %v836
    %v1070 = vpop.f32.mrf.mxu0
    %v1071 = vadd.f32 %v1022, %v1070
    %v1072 = vpop.f32.mrf.mxu0
    %v1073 = vadd.f32 %v1024, %v1072
    %1074 = vmatmul.bf16.gmra.mxu0 %v839
    %v1075 = vpop.f32.mrf.mxu0
    %v1076 = vadd.f32 %v1027, %v1075
    %v1077 = vpop.f32.mrf.mxu0
    %v1078 = vadd.f32 %v1029, %v1077
    %1079 = vmatmul.bf16.gmra.mxu0 %v842
    %v1080 = vpop.f32.mrf.mxu0
    %v1081 = vadd.f32 %v1032, %v1080
    %v1082 = vpop.f32.mrf.mxu0
    %v1083 = vadd.f32 %v1034, %v1082
    %1084 = vmatmul.bf16.gmra.mxu0 %v845
    %v1085 = vpop.f32.mrf.mxu0
    %v1086 = vadd.f32 %v1037, %v1085
    %v1087 = vpop.f32.mrf.mxu0
    %v1088 = vadd.f32 %v1039, %v1087
    %1089 = vmatmul.bf16.gmra.mxu0 %v848
    %v1090 = vpop.f32.mrf.mxu0
    %v1091 = vadd.f32 %v1042, %v1090
    %v1092 = vpop.f32.mrf.mxu0
    %v1093 = vadd.f32 %v1044, %v1092
    %1094 = vdwg.mxu0
    %1095 = vmatpush.bf16.msra.mxu0 %v696
    %1096 = vmatpush.bf16.msra.mxu0 %v694
    %1097 = vmatpush.bf16.msra.mxu0 %v692
    %1098 = vmatpush.bf16.msra.mxu0 %v690
    %1099 = vmatpush.bf16.msra.mxu0 %v688
    %1100 = vmatpush.bf16.msra.mxu0 %v686
    %1101 = vmatpush.bf16.msra.mxu0 %v684
    %1102 = vmatpush.bf16.msra.mxu0 %v682
    %1103 = vmatmul.bf16.gmra.mxu0 %v393
    %v1104 = vpop.f32.mrf.mxu0
    %v1105 = vadd.f32 %v188, %v1104
    %v1106 = vpop.f32.mrf.mxu0
    %v1107 = vadd.f32 %v193, %v1106
    %1108 = vmatmul.bf16.gmra.mxu0 %v398
    %v1109 = vpop.f32.mrf.mxu0
    %v1110 = vadd.f32 %v198, %v1109
    %v1111 = vpop.f32.mrf.mxu0
    %v1112 = vadd.f32 %v203, %v1111
    %1113 = vmatmul.bf16.gmra.mxu0 %v403
    %v1114 = vpop.f32.mrf.mxu0
    %v1115 = vadd.f32 %v208, %v1114
    %v1116 = vpop.f32.mrf.mxu0
    %v1117 = vadd.f32 %v213, %v1116
    %1118 = vmatmul.bf16.gmra.mxu0 %v408
    %v1119 = vpop.f32.mrf.mxu0
    %v1120 = vadd.f32 %v218, %v1119
    %v1121 = vpop.f32.mrf.mxu0
    %v1122 = vadd.f32 %v223, %v1121
    %1123 = vmatmul.bf16.gmra.mxu0 %v413
    %v1124 = vpop.f32.mrf.mxu0
    %v1125 = vadd.f32 %v228, %v1124
    %v1126 = vpop.f32.mrf.mxu0
    %v1127 = vadd.f32 %v233, %v1126
    %1128 = vmatmul.bf16.gmra.mxu0 %v418
    %v1129 = vpop.f32.mrf.mxu0
    %v1130 = vadd.f32 %v238, %v1129
    %v1131 = vpop.f32.mrf.mxu0
    %v1132 = vadd.f32 %v243, %v1131
    %1133 = vmatmul.bf16.gmra.mxu0 %v423
    %v1134 = vpop.f32.mrf.mxu0
    %v1135 = vadd.f32 %v248, %v1134
    %v1136 = vpop.f32.mrf.mxu0
    %v1137 = vadd.f32 %v253, %v1136
    %1138 = vmatmul.bf16.gmra.mxu0 %v428
    %v1139 = vpop.f32.mrf.mxu0
    %v1140 = vadd.f32 %v258, %v1139
    %v1141 = vpop.f32.mrf.mxu0
    %v1142 = vadd.f32 %v263, %v1141
    %1143 = vdwg.mxu0
    %1144 = vmatpush.bf16.msra.mxu0 %v712
    %1145 = vmatpush.bf16.msra.mxu0 %v710
    %1146 = vmatpush.bf16.msra.mxu0 %v708
    %1147 = vmatpush.bf16.msra.mxu0 %v706
    %1148 = vmatpush.bf16.msra.mxu0 %v704
    %1149 = vmatpush.bf16.msra.mxu0 %v702
    %1150 = vmatpush.bf16.msra.mxu0 %v700
    %1151 = vmatpush.bf16.msra.mxu0 %v698
    %1152 = vmatmul.bf16.gmra.mxu0 %v394
    %v1153 = vpop.f32.mrf.mxu0
    %v1154 = vadd.f32 %v1105, %v1153
    %v1155 = vpop.f32.mrf.mxu0
    %v1156 = vadd.f32 %v1107, %v1155
    %1157 = vmatmul.bf16.gmra.mxu0 %v399
    %v1158 = vpop.f32.mrf.mxu0
    %v1159 = vadd.f32 %v1110, %v1158
    %v1160 = vpop.f32.mrf.mxu0
    %v1161 = vadd.f32 %v1112, %v1160
    %1162 = vmatmul.bf16.gmra.mxu0 %v404
    %v1163 = vpop.f32.mrf.mxu0
    %v1164 = vadd.f32 %v1115, %v1163
    %v1165 = vpop.f32.mrf.mxu0
    %v1166 = vadd.f32 %v1117, %v1165
    %1167 = vmatmul.bf16.gmra.mxu0 %v409
    %v1168 = vpop.f32.mrf.mxu0
    %v1169 = vadd.f32 %v1120, %v1168
    %v1170 = vpop.f32.mrf.mxu0
    %v1171 = vadd.f32 %v1122, %v1170
    %1172 = vmatmul.bf16.gmra.mxu0 %v414
    %v1173 = vpop.f32.mrf.mxu0
    %v1174 = vadd.f32 %v1125, %v1173
    %v1175 = vpop.f32.mrf.mxu0
    %v1176 = vadd.f32 %v1127, %v1175
    %1177 = vmatmul.bf16.gmra.mxu0 %v419
    %v1178 = vpop.f32.mrf.mxu0
    %v1179 = vadd.f32 %v1130, %v1178
    %v1180 = vpop.f32.mrf.mxu0
    %v1181 = vadd.f32 %v1132, %v1180
    %1182 = vmatmul.bf16.gmra.mxu0 %v424
    %v1183 = vpop.f32.mrf.mxu0
    %v1184 = vadd.f32 %v1135, %v1183
    %v1185 = vpop.f32.mrf.mxu0
    %v1186 = vadd.f32 %v1137, %v1185
    %1187 = vmatmul.bf16.gmra.mxu0 %v429
    %v1188 = vpop.f32.mrf.mxu0
    %v1189 = vadd.f32 %v1140, %v1188
    %v1190 = vpop.f32.mrf.mxu0
    %v1191 = vadd.f32 %v1142, %v1190
    %1192 = vdwg.mxu0
    %1193 = vmatpush.bf16.msra.mxu0 %v728
    %1194 = vmatpush.bf16.msra.mxu0 %v726
    %1195 = vmatpush.bf16.msra.mxu0 %v724
    %1196 = vmatpush.bf16.msra.mxu0 %v722
    %1197 = vmatpush.bf16.msra.mxu0 %v720
    %1198 = vmatpush.bf16.msra.mxu0 %v718
    %1199 = vmatpush.bf16.msra.mxu0 %v716
    %1200 = vmatpush.bf16.msra.mxu0 %v714
    %1201 = vmatmul.bf16.gmra.mxu0 %v395
    %v1202 = vpop.f32.mrf.mxu0
    %v1203 = vadd.f32 %v1154, %v1202
    %v1204 = vpop.f32.mrf.mxu0
    %v1205 = vadd.f32 %v1156, %v1204
    %1206 = vmatmul.bf16.gmra.mxu0 %v400
    %v1207 = vpop.f32.mrf.mxu0
    %v1208 = vadd.f32 %v1159, %v1207
    %v1209 = vpop.f32.mrf.mxu0
    %v1210 = vadd.f32 %v1161, %v1209
    %1211 = vmatmul.bf16.gmra.mxu0 %v405
    %v1212 = vpop.f32.mrf.mxu0
    %v1213 = vadd.f32 %v1164, %v1212
    %v1214 = vpop.f32.mrf.mxu0
    %v1215 = vadd.f32 %v1166, %v1214
    %1216 = vmatmul.bf16.gmra.mxu0 %v410
    %v1217 = vpop.f32.mrf.mxu0
    %v1218 = vadd.f32 %v1169, %v1217
    %v1219 = vpop.f32.mrf.mxu0
    %v1220 = vadd.f32 %v1171, %v1219
    %1221 = vmatmul.bf16.gmra.mxu0 %v415
    %v1222 = vpop.f32.mrf.mxu0
    %v1223 = vadd.f32 %v1174, %v1222
    %v1224 = vpop.f32.mrf.mxu0
    %v1225 = vadd.f32 %v1176, %v1224
    %1226 = vmatmul.bf16.gmra.mxu0 %v420
    %v1227 = vpop.f32.mrf.mxu0
    %v1228 = vadd.f32 %v1179, %v1227
    %v1229 = vpop.f32.mrf.mxu0
    %v1230 = vadd.f32 %v1181, %v1229
    %1231 = vmatmul.bf16.gmra.mxu0 %v425
    %v1232 = vpop.f32.mrf.mxu0
    %v1233 = vadd.f32 %v1184, %v1232
    %v1234 = vpop.f32.mrf.mxu0
    %v1235 = vadd.f32 %v1186, %v1234
    %1236 = vmatmul.bf16.gmra.mxu0 %v430
    %v1237 = vpop.f32.mrf.mxu0
    %v1238 = vadd.f32 %v1189, %v1237
    %v1239 = vpop.f32.mrf.mxu0
    %v1240 = vadd.f32 %v1191, %v1239
    %1241 = vdwg.mxu0
    %1242 = vmatpush.bf16.msra.mxu0 %v744
    %1243 = vmatpush.bf16.msra.mxu0 %v742
    %1244 = vmatpush.bf16.msra.mxu0 %v740
    %1245 = vmatpush.bf16.msra.mxu0 %v738
    %1246 = vmatpush.bf16.msra.mxu0 %v736
    %1247 = vmatpush.bf16.msra.mxu0 %v734
    %1248 = vmatpush.bf16.msra.mxu0 %v732
    %1249 = vmatpush.bf16.msra.mxu0 %v730
    %1250 = vmatmul.bf16.gmra.mxu0 %v396
    %v1251 = vpop.f32.mrf.mxu0
    %v1252 = vadd.f32 %v1203, %v1251
    %v1253 = vpop.f32.mrf.mxu0
    %v1254 = vadd.f32 %v1205, %v1253
    %1255 = vmatmul.bf16.gmra.mxu0 %v401
    %v1256 = vpop.f32.mrf.mxu0
    %v1257 = vadd.f32 %v1208, %v1256
    %v1258 = vpop.f32.mrf.mxu0
    %v1259 = vadd.f32 %v1210, %v1258
    %1260 = vmatmul.bf16.gmra.mxu0 %v406
    %v1261 = vpop.f32.mrf.mxu0
    %v1262 = vadd.f32 %v1213, %v1261
    %v1263 = vpop.f32.mrf.mxu0
    %v1264 = vadd.f32 %v1215, %v1263
    %1265 = vmatmul.bf16.gmra.mxu0 %v411
    %v1266 = vpop.f32.mrf.mxu0
    %v1267 = vadd.f32 %v1218, %v1266
    %v1268 = vpop.f32.mrf.mxu0
    %v1269 = vadd.f32 %v1220, %v1268
    %1270 = vmatmul.bf16.gmra.mxu0 %v416
    %v1271 = vpop.f32.mrf.mxu0
    %v1272 = vadd.f32 %v1223, %v1271
    %v1273 = vpop.f32.mrf.mxu0
    %v1274 = vadd.f32 %v1225, %v1273
    %1275 = vmatmul.bf16.gmra.mxu0 %v421
    %v1276 = vpop.f32.mrf.mxu0
    %v1277 = vadd.f32 %v1228, %v1276
    %v1278 = vpop.f32.mrf.mxu0
    %v1279 = vadd.f32 %v1230, %v1278
    %1280 = vmatmul.bf16.gmra.mxu0 %v426
    %v1281 = vpop.f32.mrf.mxu0
    %v1282 = vadd.f32 %v1233, %v1281
    %v1283 = vpop.f32.mrf.mxu0
    %v1284 = vadd.f32 %v1235, %v1283
    %1285 = vmatmul.bf16.gmra.mxu0 %v431
    %v1286 = vpop.f32.mrf.mxu0
    %v1287 = vadd.f32 %v1238, %v1286
    %v1288 = vpop.f32.mrf.mxu0
    %v1289 = vadd.f32 %v1240, %v1288
    %1290 = vdwg.mxu0
    %1291 = vmatpush.bf16.msra.mxu0 0
    %1292 = vmatpush.bf16.msra.mxu0 0
    %1293 = vmatpush.bf16.msra.mxu0 0
    %1294 = vmatpush.bf16.msra.mxu0 0
    %1295 = vmatpush.bf16.msra.mxu0 %v752
    %1296 = vmatpush.bf16.msra.mxu0 %v750
    %1297 = vmatpush.bf16.msra.mxu0 %v748
    %1298 = vmatpush.bf16.msra.mxu0 %v746
    %1299 = vmatmul.bf16.gmra.mxu0 %v827
    %v1300 = vpop.f32.mrf.mxu0
    %v1301 = vadd.f32 %v1252, %v1300
    %v1302 = vpop.f32.mrf.mxu0
    %v1303 = vadd.f32 %v1254, %v1302
    %1304 = vmatmul.bf16.gmra.mxu0 %v830
    %v1305 = vpop.f32.mrf.mxu0
    %v1306 = vadd.f32 %v1257, %v1305
    %v1307 = vpop.f32.mrf.mxu0
    %v1308 = vadd.f32 %v1259, %v1307
    %1309 = vmatmul.bf16.gmra.mxu0 %v833
    %v1310 = vpop.f32.mrf.mxu0
    %v1311 = vadd.f32 %v1262, %v1310
    %v1312 = vpop.f32.mrf.mxu0
    %v1313 = vadd.f32 %v1264, %v1312
    %1314 = vmatmul.bf16.gmra.mxu0 %v836
    %v1315 = vpop.f32.mrf.mxu0
    %v1316 = vadd.f32 %v1267, %v1315
    %v1317 = vpop.f32.mrf.mxu0
    %v1318 = vadd.f32 %v1269, %v1317
    %1319 = vmatmul.bf16.gmra.mxu0 %v839
    %v1320 = vpop.f32.mrf.mxu0
    %v1321 = vadd.f32 %v1272, %v1320
    %v1322 = vpop.f32.mrf.mxu0
    %v1323 = vadd.f32 %v1274, %v1322
    %1324 = vmatmul.bf16.gmra.mxu0 %v842
    %v1325 = vpop.f32.mrf.mxu0
    %v1326 = vadd.f32 %v1277, %v1325
    %v1327 = vpop.f32.mrf.mxu0
    %v1328 = vadd.f32 %v1279, %v1327
    %1329 = vmatmul.bf16.gmra.mxu0 %v845
    %v1330 = vpop.f32.mrf.mxu0
    %v1331 = vadd.f32 %v1282, %v1330
    %v1332 = vpop.f32.mrf.mxu0
    %v1333 = vadd.f32 %v1284, %v1332
    %1334 = vmatmul.bf16.gmra.mxu0 %v848
    %v1335 = vpop.f32.mrf.mxu0
    %v1336 = vadd.f32 %v1287, %v1335
    %v1337 = vpop.f32.mrf.mxu0
    %v1338 = vadd.f32 %v1289, %v1337
    %1339 = vdwg.mxu0
    %v1340 = vmax.f32 %v1056, 0.0
    %v1341 = vmax.f32 %v1301, 0.0
    %v1342 = vmax.f32 %v1058, 0.0
    %v1343 = vmax.f32 %v1303, 0.0
    %v1344 = vmax.f32 %v1061, 0.0
    %v1345 = vmax.f32 %v1306, 0.0
    %v1346 = vmax.f32 %v1063, 0.0
    %v1347 = vmax.f32 %v1308, 0.0
    %v1348 = vmax.f32 %v1066, 0.0
    %v1349 = vmax.f32 %v1311, 0.0
    %v1350 = vmax.f32 %v1068, 0.0
    %v1351 = vmax.f32 %v1313, 0.0
    %v1352 = vmax.f32 %v1071, 0.0
    %v1353 = vmax.f32 %v1316, 0.0
    %v1354 = vmax.f32 %v1073, 0.0
    %v1355 = vmax.f32 %v1318, 0.0
    %v1356 = vmax.f32 %v1076, 0.0
    %v1357 = vmax.f32 %v1321, 0.0
    %v1358 = vmax.f32 %v1078, 0.0
    %v1359 = vmax.f32 %v1323, 0.0
    %v1360 = vmax.f32 %v1081, 0.0
    %v1361 = vmax.f32 %v1326, 0.0
    %v1362 = vmax.f32 %v1083, 0.0
    %v1363 = vmax.f32 %v1328, 0.0
    %v1364 = vmax.f32 %v1086, 0.0
    %v1365 = vmax.f32 %v1331, 0.0
    %v1366 = vmax.f32 %v1088, 0.0
    %v1367 = vmax.f32 %v1333, 0.0
    %v1368 = vmax.f32 %v1091, 0.0
    %v1369 = vmax.f32 %v1336, 0.0
    %v1370 = vmax.f32 %v1093, 0.0
    %v1371 = vmax.f32 %v1338, 0.0
    %v1372 = vpack.c.bf16 %v1341, %v1340
    %v1373 = vpack.c.bf16 %v1343, %v1342
    %v1374 = vpack.c.bf16 %v1345, %v1344
    %v1375 = vpack.c.bf16 %v1347, %v1346
    %v1376 = vpack.c.bf16 %v1349, %v1348
    %v1377 = vpack.c.bf16 %v1351, %v1350
    %v1378 = vpack.c.bf16 %v1353, %v1352
    %v1379 = vpack.c.bf16 %v1355, %v1354
    %v1380 = vpack.c.bf16 %v1357, %v1356
    %v1381 = vpack.c.bf16 %v1359, %v1358
    %v1382 = vpack.c.bf16 %v1361, %v1360
    %v1383 = vpack.c.bf16 %v1363, %v1362
    %v1384 = vpack.c.bf16 %v1365, %v1364
    %v1385 = vpack.c.bf16 %v1367, %v1366
    %v1386 = vpack.c.bf16 %v1369, %v1368
    %v1387 = vpack.c.bf16 %v1371, %v1370
    %v1390 = vunpack.c.l.b16 %v1372
    %v1391 = vunpack.c.h.b16 %v1372
    %v1392 = vunpack.c.l.b16 %v1373
    %v1393 = vunpack.c.h.b16 %v1373
    %v1394 = vpack.c.b16 %v1392, %v1390
    %v1395 = vpack.c.b16 %v1393, %v1391
    %v1400 = vunpack.c.l.b16 %v1374
    %v1401 = vunpack.c.h.b16 %v1374
    %v1402 = vunpack.c.l.b16 %v1375
    %v1403 = vunpack.c.h.b16 %v1375
    %v1404 = vpack.c.b16 %v1402, %v1400
    %v1405 = vpack.c.b16 %v1403, %v1401
    %v1410 = vunpack.c.l.b16 %v1376
    %v1411 = vunpack.c.h.b16 %v1376
    %v1412 = vunpack.c.l.b16 %v1377
    %v1413 = vunpack.c.h.b16 %v1377
    %v1414 = vpack.c.b16 %v1412, %v1410
    %v1415 = vpack.c.b16 %v1413, %v1411
    %v1420 = vunpack.c.l.b16 %v1378
    %v1421 = vunpack.c.h.b16 %v1378
    %v1422 = vunpack.c.l.b16 %v1379
    %v1423 = vunpack.c.h.b16 %v1379
    %v1424 = vpack.c.b16 %v1422, %v1420
    %v1425 = vpack.c.b16 %v1423, %v1421
    %v1430 = vunpack.c.l.b16 %v1380
    %v1431 = vunpack.c.h.b16 %v1380
    %v1432 = vunpack.c.l.b16 %v1381
    %v1433 = vunpack.c.h.b16 %v1381
    %v1434 = vpack.c.b16 %v1432, %v1430
    %v1435 = vpack.c.b16 %v1433, %v1431
    %v1440 = vunpack.c.l.b16 %v1382
    %v1441 = vunpack.c.h.b16 %v1382
    %v1442 = vunpack.c.l.b16 %v1383
    %v1443 = vunpack.c.h.b16 %v1383
    %v1444 = vpack.c.b16 %v1442, %v1440
    %v1445 = vpack.c.b16 %v1443, %v1441
    %v1450 = vunpack.c.l.b16 %v1384
    %v1451 = vunpack.c.h.b16 %v1384
    %v1452 = vunpack.c.l.b16 %v1385
    %v1453 = vunpack.c.h.b16 %v1385
    %v1454 = vpack.c.b16 %v1452, %v1450
    %v1455 = vpack.c.b16 %v1453, %v1451
    %v1460 = vunpack.c.l.b16 %v1386
    %v1461 = vunpack.c.h.b16 %v1386
    %v1462 = vunpack.c.l.b16 %v1387
    %v1463 = vunpack.c.h.b16 %v1387
    %v1464 = vpack.c.b16 %v1462, %v1460
    %v1465 = vpack.c.b16 %v1463, %v1461
    %v1468 = vld [vmem:[%s3] sm:$0xf]
    %v1469 = vld [vmem:[%s3 + $0x4] sm:$0xf]
    %v1470 = vld [vmem:[%s3 + $0x8] sm:$0xf]
    %v1471 = vld [vmem:[%s3 + $0xc] sm:$0xf]
    %v1472 = vld [vmem:[%s3 + $0x10] sm:$0xf]
    %v1473 = vld [vmem:[%s3 + $0x14] sm:$0xf]
    %v1474 = vld [vmem:[%s3 + $0x18] sm:$0xf]
    %v1475 = vld [vmem:[%s3 + $0x1c] sm:$0xf]
    %v1476 = vld [vmem:[%s3 + $0x20] sm:$0xf]
    %v1477 = vld [vmem:[%s3 + $0x24] sm:$0xf]
    %v1478 = vld [vmem:[%s3 + $0x28] sm:$0xf]
    %v1479 = vld [vmem:[%s3 + $0x2c] sm:$0xf]
    %v1480 = vld [vmem:[%s3 + $0x30] sm:$0xf]
    %v1481 = vld [vmem:[%s3 + $0x34] sm:$0xf]
    %v1482 = vld [vmem:[%s3 + $0x38] sm:$0xf]
    %v1483 = vld [vmem:[%s3 + $0x3c] sm:$0xf]
    %v1484 = vld [vmem:[%s3 + $0x40] sm:$0xf]
    %v1485 = vld [vmem:[%s3 + $0x44] sm:$0xf]
    %v1486 = vld [vmem:[%s3 + $0x48] sm:$0xf]
    %v1487 = vld [vmem:[%s3 + $0x4c] sm:$0xf]
    %v1488 = vld [vmem:[%s3 + $0x50] sm:$0xf]
    %v1489 = vld [vmem:[%s3 + $0x54] sm:$0xf]
    %v1490 = vld [vmem:[%s3 + $0x58] sm:$0xf]
    %v1491 = vld [vmem:[%s3 + $0x5c] sm:$0xf]
    %v1492 = vld [vmem:[%s3 + $0x60] sm:$0xf]
    %v1493 = vld [vmem:[%s3 + $0x64] sm:$0xf]
    %v1494 = vld [vmem:[%s3 + $0x68] sm:$0xf]
    %v1495 = vld [vmem:[%s3 + $0x6c] sm:$0xf]
    %v1496 = vld [vmem:[%s3 + $0x70] sm:$0xf]
    %v1497 = vld [vmem:[%s3 + $0x74] sm:$0xf]
    %v1498 = vld [vmem:[%s3 + $0x78] sm:$0xf]
    %v1499 = vld [vmem:[%s3 + $0x7c] sm:$0xf]
    %v1500 = vld [vmem:[%s3 + $0x80] sm:$0xf]
    %v1501 = vld [vmem:[%s3 + $0x84] sm:$0xf]
    %v1502 = vld [vmem:[%s3 + $0x88] sm:$0xf]
    %v1503 = vld [vmem:[%s3 + $0x8c] sm:$0xf]
    %v1504 = vld [vmem:[%s3 + $0x90] sm:$0xf]
    %v1505 = vld [vmem:[%s3 + $0x94] sm:$0xf]
    %v1506 = vld [vmem:[%s3 + $0x98] sm:$0xf]
    %v1507 = vld [vmem:[%s3 + $0x9c] sm:$0xf]
    %v1508 = vld [vmem:[%s3 + $0xa0] sm:$0xf]
    %v1509 = vld [vmem:[%s3 + $0xa4] sm:$0xf]
    %v1510 = vld [vmem:[%s3 + $0xa8] sm:$0xf]
    %v1511 = vld [vmem:[%s3 + $0xac] sm:$0xf]
    %v1512 = vld [vmem:[%s3 + $0xb0] sm:$0xf]
    %v1513 = vld [vmem:[%s3 + $0xb4] sm:$0xf]
    %v1514 = vld [vmem:[%s3 + $0xb8] sm:$0xf]
    %v1515 = vld [vmem:[%s3 + $0xbc] sm:$0xf]
    %v1516 = vld [vmem:[%s3 + $0xc0] sm:$0xf]
    %v1517 = vld [vmem:[%s3 + $0xc4] sm:$0xf]
    %v1518 = vld [vmem:[%s3 + $0xc8] sm:$0xf]
    %v1519 = vld [vmem:[%s3 + $0xcc] sm:$0xf]
    %v1520 = vld [vmem:[%s3 + $0xd0] sm:$0xf]
    %v1521 = vld [vmem:[%s3 + $0xd4] sm:$0xf]
    %v1522 = vld [vmem:[%s3 + $0xd8] sm:$0xf]
    %v1523 = vld [vmem:[%s3 + $0xdc] sm:$0xf]
    %v1524 = vld [vmem:[%s3 + $0xe0] sm:$0xf]
    %v1525 = vld [vmem:[%s3 + $0xe4] sm:$0xf]
    %v1526 = vld [vmem:[%s3 + $0xe8] sm:$0xf]
    %v1527 = vld [vmem:[%s3 + $0xec] sm:$0xf]
    %v1528 = vld [vmem:[%s3 + $0xf0] sm:$0xf]
    %v1529 = vld [vmem:[%s3 + $0xf4] sm:$0xf]
    %v1530 = vld [vmem:[%s3 + $0xf8] sm:$0xf]
    %v1531 = vld [vmem:[%s3 + $0xfc] sm:$0xf]
    %v1532 = vld [vmem:[%s3 + $0x100] sm:$0xf]
    %v1533 = vld [vmem:[%s3 + $0x104] sm:$0xf]
    %v1534 = vld [vmem:[%s3 + $0x108] sm:$0xf]
    %v1535 = vld [vmem:[%s3 + $0x10c] sm:$0xf]
    %v1536 = vld [vmem:[%s3 + $0x110] sm:$0xf]
    %v1537 = vld [vmem:[%s3 + $0x114] sm:$0xf]
    %v1538 = vld [vmem:[%s3 + $0x118] sm:$0xf]
    %v1539 = vld [vmem:[%s3 + $0x11c] sm:$0xf]
    %v1540 = vld [vmem:[%s3 + $0x120] sm:$0xf]
    %v1541 = vld [vmem:[%s3 + $0x124] sm:$0xf]
    %v1542 = vld [vmem:[%s3 + $0x128] sm:$0xf]
    %v1543 = vld [vmem:[%s3 + $0x12c] sm:$0xf]
    %v1544 = vld [vmem:[%s3 + $0x130] sm:$0xf]
    %v1545 = vld [vmem:[%s3 + $0x134] sm:$0xf]
    %v1546 = vld [vmem:[%s3 + $0x138] sm:$0xf]
    %v1547 = vld [vmem:[%s3 + $0x13c] sm:$0xf]
    %v1548 = vld [vmem:[%s3 + $0x140] sm:$0xf]
    %v1549 = vld [vmem:[%s3 + $0x144] sm:$0xf]
    %v1550 = vld [vmem:[%s3 + $0x148] sm:$0xf]
    %v1551 = vld [vmem:[%s3 + $0x14c] sm:$0xf]
    %v1552 = vld [vmem:[%s3 + $0x150] sm:$0xf]
    %v1553 = vld [vmem:[%s3 + $0x154] sm:$0xf]
    %v1554 = vld [vmem:[%s3 + $0x158] sm:$0xf]
    %v1555 = vld [vmem:[%s3 + $0x15c] sm:$0xf]
    %v1556 = vld [vmem:[%s3 + $0x160] sm:$0xf]
    %v1557 = vld [vmem:[%s3 + $0x164] sm:$0xf]
    %v1558 = vld [vmem:[%s3 + $0x168] sm:$0xf]
    %v1559 = vld [vmem:[%s3 + $0x16c] sm:$0xf]
    %v1560 = vld [vmem:[%s3 + $0x170] sm:$0xf]
    %v1561 = vld [vmem:[%s3 + $0x174] sm:$0xf]
    %v1562 = vld [vmem:[%s3 + $0x178] sm:$0xf]
    %v1563 = vld [vmem:[%s3 + $0x17c] sm:$0xf]
    %v1564 = vld [vmem:[%s3 + $0x180] sm:$0xf]
    %v1565 = vld [vmem:[%s3 + $0x184] sm:$0xf]
    %v1566 = vld [vmem:[%s3 + $0x188] sm:$0xf]
    %v1567 = vld [vmem:[%s3 + $0x18c] sm:$0xf]
    %v1568 = vld [vmem:[%s3 + $0x190] sm:$0xf]
    %v1569 = vld [vmem:[%s3 + $0x194] sm:$0xf]
    %v1570 = vld [vmem:[%s3 + $0x198] sm:$0xf]
    %v1571 = vld [vmem:[%s3 + $0x19c] sm:$0xf]
    %v1572 = vld [vmem:[%s3 + $0x1a0] sm:$0xf]
    %v1573 = vld [vmem:[%s3 + $0x1a4] sm:$0xf]
    %v1574 = vld [vmem:[%s3 + $0x1a8] sm:$0xf]
    %v1575 = vld [vmem:[%s3 + $0x1ac] sm:$0xf]
    %v1576 = vld [vmem:[%s3 + $0x1b0] sm:$0xf]
    %v1577 = vld [vmem:[%s3 + $0x1b4] sm:$0xf]
    %v1578 = vld [vmem:[%s3 + $0x1b8] sm:$0xf]
    %v1579 = vld [vmem:[%s3 + $0x1bc] sm:$0xf]
    %v1580 = vld [vmem:[%s3 + $0x1c0] sm:$0xf]
    %v1581 = vld [vmem:[%s3 + $0x1c4] sm:$0xf]
    %v1582 = vld [vmem:[%s3 + $0x1c8] sm:$0xf]
    %v1583 = vld [vmem:[%s3 + $0x1cc] sm:$0xf]
    %v1584 = vld [vmem:[%s3 + $0x1d0] sm:$0xf]
    %v1585 = vld [vmem:[%s3 + $0x1d4] sm:$0xf]
    %v1586 = vld [vmem:[%s3 + $0x1d8] sm:$0xf]
    %v1587 = vld [vmem:[%s3 + $0x1dc] sm:$0xf]
    %v1588 = vld [vmem:[%s3 + $0x1e0] sm:$0xf]
    %v1589 = vld [vmem:[%s3 + $0x1e4] sm:$0xf]
    %v1590 = vld [vmem:[%s3 + $0x1e8] sm:$0xf]
    %v1591 = vld [vmem:[%s3 + $0x1ec] sm:$0xf]
    %v1592 = vld [vmem:[%s3 + $0x1f0] sm:$0xf]
    %v1593 = vld [vmem:[%s3 + $0x1f4] sm:$0xf]
    %v1594 = vld [vmem:[%s3 + $0x1f8] sm:$0xf]
    %v1595 = vld [vmem:[%s3 + $0x1fc] sm:$0xf]
    %v1596 = vld [vmem:[%s3 + $0x200] sm:$0xf]
    %v1597 = vld [vmem:[%s3 + $0x204] sm:$0xf]
    %v1598 = vld [vmem:[%s3 + $0x208] sm:$0xf]
    %v1599 = vld [vmem:[%s3 + $0x20c] sm:$0xf]
    %v1600 = vld [vmem:[%s3 + $0x210] sm:$0xf]
    %v1601 = vld [vmem:[%s3 + $0x214] sm:$0xf]
    %v1602 = vld [vmem:[%s3 + $0x218] sm:$0xf]
    %v1603 = vld [vmem:[%s3 + $0x21c] sm:$0xf]
    %v1604 = vld [vmem:[%s3 + $0x220] sm:$0xf]
    %v1605 = vld [vmem:[%s3 + $0x224] sm:$0xf]
    %v1606 = vld [vmem:[%s3 + $0x228] sm:$0xf]
    %v1607 = vld [vmem:[%s3 + $0x22c] sm:$0xf]
    %v1608 = vld [vmem:[%s3 + $0x230] sm:$0xf]
    %v1609 = vld [vmem:[%s3 + $0x234] sm:$0xf]
    %v1610 = vld [vmem:[%s3 + $0x238] sm:$0xf]
    %v1611 = vld [vmem:[%s3 + $0x23c] sm:$0xf]
    %v1612 = vld [vmem:[%s3 + $0x240] sm:$0xf]
    %v1613 = vld [vmem:[%s3 + $0x244] sm:$0xf]
    %v1614 = vld [vmem:[%s3 + $0x248] sm:$0xf]
    %v1615 = vld [vmem:[%s3 + $0x24c] sm:$0xf]
    %v1616 = vld [vmem:[%s3 + $0x250] sm:$0xf]
    %v1617 = vld [vmem:[%s3 + $0x254] sm:$0xf]
    %v1618 = vld [vmem:[%s3 + $0x258] sm:$0xf]
    %v1619 = vld [vmem:[%s3 + $0x25c] sm:$0xf]
    %v1620 = vld [vmem:[%s3 + $0x260] sm:$0xf]
    %v1621 = vld [vmem:[%s3 + $0x264] sm:$0xf]
    %v1622 = vld [vmem:[%s3 + $0x268] sm:$0xf]
    %v1623 = vld [vmem:[%s3 + $0x26c] sm:$0xf]
    %v1624 = vld [vmem:[%s3 + $0x270] sm:$0xf]
    %v1625 = vld [vmem:[%s3 + $0x274] sm:$0xf]
    %v1626 = vld [vmem:[%s3 + $0x278] sm:$0xf]
    %v1627 = vld [vmem:[%s3 + $0x27c] sm:$0xf]
    %v1628 = vld [vmem:[%s3 + $0x280] sm:$0xf]
    %v1629 = vld [vmem:[%s3 + $0x284] sm:$0xf]
    %v1630 = vld [vmem:[%s3 + $0x288] sm:$0xf]
    %v1631 = vld [vmem:[%s3 + $0x28c] sm:$0xf]
    %v1632 = vld [vmem:[%s3 + $0x290] sm:$0xf]
    %v1633 = vld [vmem:[%s3 + $0x294] sm:$0xf]
    %v1634 = vld [vmem:[%s3 + $0x298] sm:$0xf]
    %v1635 = vld [vmem:[%s3 + $0x29c] sm:$0xf]
    %v1636 = vld [vmem:[%s3 + $0x2a0] sm:$0xf]
    %v1637 = vld [vmem:[%s3 + $0x2a4] sm:$0xf]
    %v1638 = vld [vmem:[%s3 + $0x2a8] sm:$0xf]
    %v1639 = vld [vmem:[%s3 + $0x2ac] sm:$0xf]
    %v1640 = vld [vmem:[%s3 + $0x2b0] sm:$0xf]
    %v1641 = vld [vmem:[%s3 + $0x2b4] sm:$0xf]
    %v1642 = vld [vmem:[%s3 + $0x2b8] sm:$0xf]
    %v1643 = vld [vmem:[%s3 + $0x2bc] sm:$0xf]
    %v1644 = vld [vmem:[%s3 + $0x2c0] sm:$0xf]
    %v1645 = vld [vmem:[%s3 + $0x2c4] sm:$0xf]
    %v1646 = vld [vmem:[%s3 + $0x2c8] sm:$0xf]
    %v1647 = vld [vmem:[%s3 + $0x2cc] sm:$0xf]
    %v1648 = vld [vmem:[%s3 + $0x2d0] sm:$0xf]
    %v1649 = vld [vmem:[%s3 + $0x2d4] sm:$0xf]
    %v1650 = vld [vmem:[%s3 + $0x2d8] sm:$0xf]
    %v1651 = vld [vmem:[%s3 + $0x2dc] sm:$0xf]
    %v1652 = vld [vmem:[%s3 + $0x2e0] sm:$0xf]
    %v1653 = vld [vmem:[%s3 + $0x2e4] sm:$0xf]
    %v1654 = vld [vmem:[%s3 + $0x2e8] sm:$0xf]
    %v1655 = vld [vmem:[%s3 + $0x2ec] sm:$0xf]
    %v1656 = vld [vmem:[%s3 + $0x2f0] sm:$0xf]
    %v1657 = vld [vmem:[%s3 + $0x2f4] sm:$0xf]
    %v1658 = vld [vmem:[%s3 + $0x2f8] sm:$0xf]
    %v1659 = vld [vmem:[%s3 + $0x2fc] sm:$0xf]
    %v1660 = vld [vmem:[%s3 + $0x300] sm:$0xf]
    %v1661 = vld [vmem:[%s3 + $0x304] sm:$0xf]
    %v1662 = vld [vmem:[%s3 + $0x308] sm:$0xf]
    %v1663 = vld [vmem:[%s3 + $0x30c] sm:$0xf]
    %v1664 = vld [vmem:[%s3 + $0x310] sm:$0xf]
    %v1665 = vld [vmem:[%s3 + $0x314] sm:$0xf]
    %v1666 = vld [vmem:[%s3 + $0x318] sm:$0xf]
    %v1667 = vld [vmem:[%s3 + $0x31c] sm:$0xf]
    %v1668 = vld [vmem:[%s3 + $0x320] sm:$0xf]
    %v1669 = vld [vmem:[%s3 + $0x324] sm:$0xf]
    %v1670 = vld [vmem:[%s3 + $0x328] sm:$0xf]
    %v1671 = vld [vmem:[%s3 + $0x32c] sm:$0xf]
    %v1672 = vld [vmem:[%s3 + $0x330] sm:$0xf]
    %v1673 = vld [vmem:[%s3 + $0x334] sm:$0xf]
    %v1674 = vld [vmem:[%s3 + $0x338] sm:$0xf]
    %v1675 = vld [vmem:[%s3 + $0x33c] sm:$0xf]
    %v1676 = vld [vmem:[%s3 + $0x340] sm:$0xf]
    %v1677 = vld [vmem:[%s3 + $0x344] sm:$0xf]
    %v1678 = vld [vmem:[%s3 + $0x348] sm:$0xf]
    %v1679 = vld [vmem:[%s3 + $0x34c] sm:$0xf]
    %v1680 = vld [vmem:[%s3 + $0x350] sm:$0xf]
    %v1681 = vld [vmem:[%s3 + $0x354] sm:$0xf]
    %v1682 = vld [vmem:[%s3 + $0x358] sm:$0xf]
    %v1683 = vld [vmem:[%s3 + $0x35c] sm:$0xf]
    %v1684 = vld [vmem:[%s3 + $0x360] sm:$0xf]
    %v1685 = vld [vmem:[%s3 + $0x364] sm:$0xf]
    %v1686 = vld [vmem:[%s3 + $0x368] sm:$0xf]
    %v1687 = vld [vmem:[%s3 + $0x36c] sm:$0xf]
    %v1688 = vld [vmem:[%s3 + $0x370] sm:$0xf]
    %v1689 = vld [vmem:[%s3 + $0x374] sm:$0xf]
    %v1690 = vld [vmem:[%s3 + $0x378] sm:$0xf]
    %v1691 = vld [vmem:[%s3 + $0x37c] sm:$0xf]
    %v1692 = vld [vmem:[%s3 + $0x380] sm:$0xf]
    %v1693 = vld [vmem:[%s3 + $0x384] sm:$0xf]
    %v1694 = vld [vmem:[%s3 + $0x388] sm:$0xf]
    %v1695 = vld [vmem:[%s3 + $0x38c] sm:$0xf]
    %v1696 = vld [vmem:[%s3 + $0x390] sm:$0xf]
    %v1697 = vld [vmem:[%s3 + $0x394] sm:$0xf]
    %v1698 = vld [vmem:[%s3 + $0x398] sm:$0xf]
    %v1699 = vld [vmem:[%s3 + $0x39c] sm:$0xf]
    %v1700 = vld [vmem:[%s3 + $0x3a0] sm:$0xf]
    %v1701 = vld [vmem:[%s3 + $0x3a4] sm:$0xf]
    %v1702 = vld [vmem:[%s3 + $0x3a8] sm:$0xf]
    %v1703 = vld [vmem:[%s3 + $0x3ac] sm:$0xf]
    %v1704 = vld [vmem:[%s3 + $0x3b0] sm:$0xf]
    %v1705 = vld [vmem:[%s3 + $0x3b4] sm:$0xf]
    %v1706 = vld [vmem:[%s3 + $0x3b8] sm:$0xf]
    %v1707 = vld [vmem:[%s3 + $0x3bc] sm:$0xf]
    %v1708 = vld [vmem:[%s3 + $0x3c0] sm:$0xf]
    %v1709 = vld [vmem:[%s3 + $0x3c4] sm:$0xf]
    %v1710 = vld [vmem:[%s3 + $0x3c8] sm:$0xf]
    %v1711 = vld [vmem:[%s3 + $0x3cc] sm:$0xf]
    %v1712 = vld [vmem:[%s3 + $0x3d0] sm:$0xf]
    %v1713 = vld [vmem:[%s3 + $0x3d4] sm:$0xf]
    %v1714 = vld [vmem:[%s3 + $0x3d8] sm:$0xf]
    %v1715 = vld [vmem:[%s3 + $0x3dc] sm:$0xf]
    %v1716 = vld [vmem:[%s3 + $0x3e0] sm:$0xf]
    %v1717 = vld [vmem:[%s3 + $0x3e4] sm:$0xf]
    %v1718 = vld [vmem:[%s3 + $0x3e8] sm:$0xf]
    %v1719 = vld [vmem:[%s3 + $0x3ec] sm:$0xf]
    %v1720 = vld [vmem:[%s3 + $0x3f0] sm:$0xf]
    %v1721 = vld [vmem:[%s3 + $0x3f4] sm:$0xf]
    %v1722 = vld [vmem:[%s3 + $0x3f8] sm:$0xf]
    %v1723 = vld [vmem:[%s3 + $0x3fc] sm:$0xf]
    %v1724 = vld [vmem:[%s4] sm:$0x1]
    %v1726 = vperm.slane %v1724, 0
    %v1984 = vunpack.c.l.b16 %v1468
    %v1985 = vunpack.c.l.b16 %v1469
    %v1986 = vunpack.c.l.b16 %v1470
    %v1987 = vunpack.c.l.b16 %v1471
    %v1988 = vunpack.c.l.b16 %v1472
    %v1989 = vunpack.c.l.b16 %v1473
    %v1990 = vunpack.c.l.b16 %v1474
    %v1991 = vunpack.c.l.b16 %v1475
    %v1992 = vunpack.c.l.b16 %v1476
    %v1993 = vunpack.c.l.b16 %v1477
    %v1994 = vunpack.c.l.b16 %v1478
    %v1995 = vunpack.c.l.b16 %v1479
    %v1996 = vunpack.c.l.b16 %v1480
    %v1997 = vunpack.c.l.b16 %v1481
    %v1998 = vunpack.c.l.b16 %v1482
    %v1999 = vunpack.c.l.b16 %v1483
    %v2000 = vunpack.c.l.b16 %v1484
    %v2001 = vunpack.c.l.b16 %v1485
    %v2002 = vunpack.c.l.b16 %v1486
    %v2003 = vunpack.c.l.b16 %v1487
    %v2004 = vunpack.c.l.b16 %v1488
    %v2005 = vunpack.c.l.b16 %v1489
    %v2006 = vunpack.c.l.b16 %v1490
    %v2007 = vunpack.c.l.b16 %v1491
    %v2008 = vunpack.c.l.b16 %v1492
    %v2009 = vunpack.c.l.b16 %v1493
    %v2010 = vunpack.c.l.b16 %v1494
    %v2011 = vunpack.c.l.b16 %v1495
    %v2012 = vunpack.c.l.b16 %v1496
    %v2013 = vunpack.c.l.b16 %v1497
    %v2014 = vunpack.c.l.b16 %v1498
    %v2015 = vunpack.c.l.b16 %v1499
    %v2016 = vunpack.c.l.b16 %v1500
    %v2017 = vunpack.c.l.b16 %v1501
    %v2018 = vunpack.c.l.b16 %v1502
    %v2019 = vunpack.c.l.b16 %v1503
    %v2020 = vunpack.c.l.b16 %v1504
    %v2021 = vunpack.c.l.b16 %v1505
    %v2022 = vunpack.c.l.b16 %v1506
    %v2023 = vunpack.c.l.b16 %v1507
    %v2024 = vunpack.c.l.b16 %v1508
    %v2025 = vunpack.c.l.b16 %v1509
    %v2026 = vunpack.c.l.b16 %v1510
    %v2027 = vunpack.c.l.b16 %v1511
    %v2028 = vunpack.c.l.b16 %v1512
    %v2029 = vunpack.c.l.b16 %v1513
    %v2030 = vunpack.c.l.b16 %v1514
    %v2031 = vunpack.c.l.b16 %v1515
    %v2032 = vunpack.c.l.b16 %v1516
    %v2033 = vunpack.c.l.b16 %v1517
    %v2034 = vunpack.c.l.b16 %v1518
    %v2035 = vunpack.c.l.b16 %v1519
    %v2036 = vunpack.c.l.b16 %v1520
    %v2037 = vunpack.c.l.b16 %v1521
    %v2038 = vunpack.c.l.b16 %v1522
    %v2039 = vunpack.c.l.b16 %v1523
    %v2040 = vunpack.c.l.b16 %v1524
    %v2041 = vunpack.c.l.b16 %v1525
    %v2042 = vunpack.c.l.b16 %v1526
    %v2043 = vunpack.c.l.b16 %v1527
    %v2044 = vunpack.c.l.b16 %v1528
    %v2045 = vunpack.c.l.b16 %v1529
    %v2046 = vunpack.c.l.b16 %v1530
    %v2047 = vunpack.c.l.b16 %v1531
    %v2048 = vunpack.c.l.b16 %v1532
    %v2049 = vunpack.c.l.b16 %v1533
    %v2050 = vunpack.c.l.b16 %v1534
    %v2051 = vunpack.c.l.b16 %v1535
    %v2052 = vunpack.c.l.b16 %v1536
    %v2053 = vunpack.c.l.b16 %v1537
    %v2054 = vunpack.c.l.b16 %v1538
    %v2055 = vunpack.c.l.b16 %v1539
    %v2056 = vunpack.c.l.b16 %v1540
    %v2057 = vunpack.c.l.b16 %v1541
    %v2058 = vunpack.c.l.b16 %v1542
    %v2059 = vunpack.c.l.b16 %v1543
    %v2060 = vunpack.c.l.b16 %v1544
    %v2061 = vunpack.c.l.b16 %v1545
    %v2062 = vunpack.c.l.b16 %v1546
    %v2063 = vunpack.c.l.b16 %v1547
    %v2064 = vunpack.c.l.b16 %v1548
    %v2065 = vunpack.c.l.b16 %v1549
    %v2066 = vunpack.c.l.b16 %v1550
    %v2067 = vunpack.c.l.b16 %v1551
    %v2068 = vunpack.c.l.b16 %v1552
    %v2069 = vunpack.c.l.b16 %v1553
    %v2070 = vunpack.c.l.b16 %v1554
    %v2071 = vunpack.c.l.b16 %v1555
    %v2072 = vunpack.c.l.b16 %v1556
    %v2073 = vunpack.c.l.b16 %v1557
    %v2074 = vunpack.c.l.b16 %v1558
    %v2075 = vunpack.c.l.b16 %v1559
    %v2076 = vunpack.c.l.b16 %v1560
    %v2077 = vunpack.c.l.b16 %v1561
    %v2078 = vunpack.c.l.b16 %v1562
    %v2079 = vunpack.c.l.b16 %v1563
    %v2080 = vunpack.c.l.b16 %v1564
    %v2081 = vunpack.c.l.b16 %v1565
    %v2082 = vunpack.c.l.b16 %v1566
    %v2083 = vunpack.c.l.b16 %v1567
    %v2084 = vunpack.c.l.b16 %v1568
    %v2085 = vunpack.c.l.b16 %v1569
    %v2086 = vunpack.c.l.b16 %v1570
    %v2087 = vunpack.c.l.b16 %v1571
    %v2088 = vunpack.c.l.b16 %v1572
    %v2089 = vunpack.c.l.b16 %v1573
    %v2090 = vunpack.c.l.b16 %v1574
    %v2091 = vunpack.c.l.b16 %v1575
    %v2092 = vunpack.c.l.b16 %v1576
    %v2093 = vunpack.c.l.b16 %v1577
    %v2094 = vunpack.c.l.b16 %v1578
    %v2095 = vunpack.c.l.b16 %v1579
    %v2096 = vunpack.c.l.b16 %v1580
    %v2097 = vunpack.c.l.b16 %v1581
    %v2098 = vunpack.c.l.b16 %v1582
    %v2099 = vunpack.c.l.b16 %v1583
    %v2100 = vunpack.c.l.b16 %v1584
    %v2101 = vunpack.c.l.b16 %v1585
    %v2102 = vunpack.c.l.b16 %v1586
    %v2103 = vunpack.c.l.b16 %v1587
    %v2104 = vunpack.c.l.b16 %v1588
    %v2105 = vunpack.c.l.b16 %v1589
    %v2106 = vunpack.c.l.b16 %v1590
    %v2107 = vunpack.c.l.b16 %v1591
    %v2108 = vunpack.c.l.b16 %v1592
    %v2109 = vunpack.c.l.b16 %v1593
    %v2110 = vunpack.c.l.b16 %v1594
    %v2111 = vunpack.c.l.b16 %v1595
    %v2112 = vunpack.c.l.b16 %v1596
    %v2113 = vunpack.c.l.b16 %v1597
    %v2114 = vunpack.c.l.b16 %v1598
    %v2115 = vunpack.c.l.b16 %v1599
    %v2116 = vunpack.c.l.b16 %v1600
    %v2117 = vunpack.c.l.b16 %v1601
    %v2118 = vunpack.c.l.b16 %v1602
    %v2119 = vunpack.c.l.b16 %v1603
    %v2120 = vunpack.c.l.b16 %v1604
    %v2121 = vunpack.c.l.b16 %v1605
    %v2122 = vunpack.c.l.b16 %v1606
    %v2123 = vunpack.c.l.b16 %v1607
    %v2124 = vunpack.c.l.b16 %v1608
    %v2125 = vunpack.c.l.b16 %v1609
    %v2126 = vunpack.c.l.b16 %v1610
    %v2127 = vunpack.c.l.b16 %v1611
    %v2128 = vunpack.c.l.b16 %v1612
    %v2129 = vunpack.c.l.b16 %v1613
    %v2130 = vunpack.c.l.b16 %v1614
    %v2131 = vunpack.c.l.b16 %v1615
    %v2132 = vunpack.c.l.b16 %v1616
    %v2133 = vunpack.c.l.b16 %v1617
    %v2134 = vunpack.c.l.b16 %v1618
    %v2135 = vunpack.c.l.b16 %v1619
    %v2136 = vunpack.c.l.b16 %v1620
    %v2137 = vunpack.c.l.b16 %v1621
    %v2138 = vunpack.c.l.b16 %v1622
    %v2139 = vunpack.c.l.b16 %v1623
    %v2140 = vunpack.c.l.b16 %v1624
    %v2141 = vunpack.c.l.b16 %v1625
    %v2142 = vunpack.c.l.b16 %v1626
    %v2143 = vunpack.c.l.b16 %v1627
    %v2144 = vunpack.c.l.b16 %v1628
    %v2145 = vunpack.c.l.b16 %v1629
    %v2146 = vunpack.c.l.b16 %v1630
    %v2147 = vunpack.c.l.b16 %v1631
    %v2148 = vunpack.c.l.b16 %v1632
    %v2149 = vunpack.c.l.b16 %v1633
    %v2150 = vunpack.c.l.b16 %v1634
    %v2151 = vunpack.c.l.b16 %v1635
    %v2152 = vunpack.c.l.b16 %v1636
    %v2153 = vunpack.c.l.b16 %v1637
    %v2154 = vunpack.c.l.b16 %v1638
    %v2155 = vunpack.c.l.b16 %v1639
    %v2156 = vunpack.c.l.b16 %v1640
    %v2157 = vunpack.c.l.b16 %v1641
    %v2158 = vunpack.c.l.b16 %v1642
    %v2159 = vunpack.c.l.b16 %v1643
    %v2160 = vunpack.c.l.b16 %v1644
    %v2161 = vunpack.c.l.b16 %v1645
    %v2162 = vunpack.c.l.b16 %v1646
    %v2163 = vunpack.c.l.b16 %v1647
    %v2164 = vunpack.c.l.b16 %v1648
    %v2165 = vunpack.c.l.b16 %v1649
    %v2166 = vunpack.c.l.b16 %v1650
    %v2167 = vunpack.c.l.b16 %v1651
    %v2168 = vunpack.c.l.b16 %v1652
    %v2169 = vunpack.c.l.b16 %v1653
    %v2170 = vunpack.c.l.b16 %v1654
    %v2171 = vunpack.c.l.b16 %v1655
    %v2172 = vunpack.c.l.b16 %v1656
    %v2173 = vunpack.c.l.b16 %v1657
    %v2174 = vunpack.c.l.b16 %v1658
    %v2175 = vunpack.c.l.b16 %v1659
    %v2176 = vunpack.c.l.b16 %v1660
    %v2177 = vunpack.c.l.b16 %v1661
    %v2178 = vunpack.c.l.b16 %v1662
    %v2179 = vunpack.c.l.b16 %v1663
    %v2180 = vunpack.c.l.b16 %v1664
    %v2181 = vunpack.c.l.b16 %v1665
    %v2182 = vunpack.c.l.b16 %v1666
    %v2183 = vunpack.c.l.b16 %v1667
    %v2184 = vunpack.c.l.b16 %v1668
    %v2185 = vunpack.c.l.b16 %v1669
    %v2186 = vunpack.c.l.b16 %v1670
    %v2187 = vunpack.c.l.b16 %v1671
    %v2188 = vunpack.c.l.b16 %v1672
    %v2189 = vunpack.c.l.b16 %v1673
    %v2190 = vunpack.c.l.b16 %v1674
    %v2191 = vunpack.c.l.b16 %v1675
    %v2192 = vunpack.c.l.b16 %v1676
    %v2193 = vunpack.c.l.b16 %v1677
    %v2194 = vunpack.c.l.b16 %v1678
    %v2195 = vunpack.c.l.b16 %v1679
    %v2196 = vunpack.c.l.b16 %v1680
    %v2197 = vunpack.c.l.b16 %v1681
    %v2198 = vunpack.c.l.b16 %v1682
    %v2199 = vunpack.c.l.b16 %v1683
    %v2200 = vunpack.c.l.b16 %v1684
    %v2201 = vunpack.c.l.b16 %v1685
    %v2202 = vunpack.c.l.b16 %v1686
    %v2203 = vunpack.c.l.b16 %v1687
    %v2204 = vunpack.c.l.b16 %v1688
    %v2205 = vunpack.c.l.b16 %v1689
    %v2206 = vunpack.c.l.b16 %v1690
    %v2207 = vunpack.c.l.b16 %v1691
    %v2208 = vunpack.c.l.b16 %v1692
    %v2209 = vunpack.c.l.b16 %v1693
    %v2210 = vunpack.c.l.b16 %v1694
    %v2211 = vunpack.c.l.b16 %v1695
    %v2212 = vunpack.c.l.b16 %v1696
    %v2213 = vunpack.c.l.b16 %v1697
    %v2214 = vunpack.c.l.b16 %v1698
    %v2215 = vunpack.c.l.b16 %v1699
    %v2216 = vunpack.c.l.b16 %v1700
    %v2217 = vunpack.c.l.b16 %v1701
    %v2218 = vunpack.c.l.b16 %v1702
    %v2219 = vunpack.c.l.b16 %v1703
    %v2220 = vunpack.c.l.b16 %v1704
    %v2221 = vunpack.c.l.b16 %v1705
    %v2222 = vunpack.c.l.b16 %v1706
    %v2223 = vunpack.c.l.b16 %v1707
    %v2224 = vunpack.c.l.b16 %v1708
    %v2225 = vunpack.c.l.b16 %v1709
    %v2226 = vunpack.c.l.b16 %v1710
    %v2227 = vunpack.c.l.b16 %v1711
    %v2228 = vunpack.c.l.b16 %v1712
    %v2229 = vunpack.c.l.b16 %v1713
    %v2230 = vunpack.c.l.b16 %v1714
    %v2231 = vunpack.c.l.b16 %v1715
    %v2232 = vunpack.c.l.b16 %v1716
    %v2233 = vunpack.c.l.b16 %v1717
    %v2234 = vunpack.c.l.b16 %v1718
    %v2235 = vunpack.c.l.b16 %v1719
    %v2236 = vunpack.c.l.b16 %v1720
    %v2237 = vunpack.c.l.b16 %v1721
    %v2238 = vunpack.c.l.b16 %v1722
    %v2239 = vunpack.c.l.b16 %v1723
    %v2240 = vpack.c.b16 %v1985, %v1984
    %v2241 = vpack.c.b16 %v1987, %v1986
    %v2242 = vpack.c.b16 %v1989, %v1988
    %v2243 = vpack.c.b16 %v1991, %v1990
    %v2244 = vpack.c.b16 %v1993, %v1992
    %v2245 = vpack.c.b16 %v1995, %v1994
    %v2246 = vpack.c.b16 %v1997, %v1996
    %v2247 = vpack.c.b16 %v1999, %v1998
    %v2248 = vpack.c.b16 %v2001, %v2000
    %v2249 = vpack.c.b16 %v2003, %v2002
    %v2250 = vpack.c.b16 %v2005, %v2004
    %v2251 = vpack.c.b16 %v2007, %v2006
    %v2252 = vpack.c.b16 %v2009, %v2008
    %v2253 = vpack.c.b16 %v2011, %v2010
    %v2254 = vpack.c.b16 %v2013, %v2012
    %v2255 = vpack.c.b16 %v2015, %v2014
    %v2256 = vpack.c.b16 %v2017, %v2016
    %v2257 = vpack.c.b16 %v2019, %v2018
    %v2258 = vpack.c.b16 %v2021, %v2020
    %v2259 = vpack.c.b16 %v2023, %v2022
    %v2260 = vpack.c.b16 %v2025, %v2024
    %v2261 = vpack.c.b16 %v2027, %v2026
    %v2262 = vpack.c.b16 %v2029, %v2028
    %v2263 = vpack.c.b16 %v2031, %v2030
    %v2264 = vpack.c.b16 %v2033, %v2032
    %v2265 = vpack.c.b16 %v2035, %v2034
    %v2266 = vpack.c.b16 %v2037, %v2036
    %v2267 = vpack.c.b16 %v2039, %v2038
    %v2268 = vpack.c.b16 %v2041, %v2040
    %v2269 = vpack.c.b16 %v2043, %v2042
    %v2270 = vpack.c.b16 %v2045, %v2044
    %v2271 = vpack.c.b16 %v2047, %v2046
    %v2272 = vpack.c.b16 %v2049, %v2048
    %v2273 = vpack.c.b16 %v2051, %v2050
    %v2274 = vpack.c.b16 %v2053, %v2052
    %v2275 = vpack.c.b16 %v2055, %v2054
    %v2276 = vpack.c.b16 %v2057, %v2056
    %v2277 = vpack.c.b16 %v2059, %v2058
    %v2278 = vpack.c.b16 %v2061, %v2060
    %v2279 = vpack.c.b16 %v2063, %v2062
    %v2280 = vpack.c.b16 %v2065, %v2064
    %v2281 = vpack.c.b16 %v2067, %v2066
    %v2282 = vpack.c.b16 %v2069, %v2068
    %v2283 = vpack.c.b16 %v2071, %v2070
    %v2284 = vpack.c.b16 %v2073, %v2072
    %v2285 = vpack.c.b16 %v2075, %v2074
    %v2286 = vpack.c.b16 %v2077, %v2076
    %v2287 = vpack.c.b16 %v2079, %v2078
    %v2288 = vpack.c.b16 %v2081, %v2080
    %v2289 = vpack.c.b16 %v2083, %v2082
    %v2290 = vpack.c.b16 %v2085, %v2084
    %v2291 = vpack.c.b16 %v2087, %v2086
    %v2292 = vpack.c.b16 %v2089, %v2088
    %v2293 = vpack.c.b16 %v2091, %v2090
    %v2294 = vpack.c.b16 %v2093, %v2092
    %v2295 = vpack.c.b16 %v2095, %v2094
    %v2296 = vpack.c.b16 %v2097, %v2096
    %v2297 = vpack.c.b16 %v2099, %v2098
    %v2298 = vpack.c.b16 %v2101, %v2100
    %v2299 = vpack.c.b16 %v2103, %v2102
    %v2300 = vpack.c.b16 %v2105, %v2104
    %v2301 = vpack.c.b16 %v2107, %v2106
    %v2302 = vpack.c.b16 %v2109, %v2108
    %v2303 = vpack.c.b16 %v2111, %v2110
    %v2304 = vpack.c.b16 %v2113, %v2112
    %v2305 = vpack.c.b16 %v2115, %v2114
    %v2306 = vpack.c.b16 %v2117, %v2116
    %v2307 = vpack.c.b16 %v2119, %v2118
    %v2308 = vpack.c.b16 %v2121, %v2120
    %v2309 = vpack.c.b16 %v2123, %v2122
    %v2310 = vpack.c.b16 %v2125, %v2124
    %v2311 = vpack.c.b16 %v2127, %v2126
    %v2312 = vpack.c.b16 %v2129, %v2128
    %v2313 = vpack.c.b16 %v2131, %v2130
    %v2314 = vpack.c.b16 %v2133, %v2132
    %v2315 = vpack.c.b16 %v2135, %v2134
    %v2316 = vpack.c.b16 %v2137, %v2136
    %v2317 = vpack.c.b16 %v2139, %v2138
    %v2318 = vpack.c.b16 %v2141, %v2140
    %v2319 = vpack.c.b16 %v2143, %v2142
    %v2320 = vpack.c.b16 %v2145, %v2144
    %v2321 = vpack.c.b16 %v2147, %v2146
    %v2322 = vpack.c.b16 %v2149, %v2148
    %v2323 = vpack.c.b16 %v2151, %v2150
    %v2324 = vpack.c.b16 %v2153, %v2152
    %v2325 = vpack.c.b16 %v2155, %v2154
    %v2326 = vpack.c.b16 %v2157, %v2156
    %v2327 = vpack.c.b16 %v2159, %v2158
    %v2328 = vpack.c.b16 %v2161, %v2160
    %v2329 = vpack.c.b16 %v2163, %v2162
    %v2330 = vpack.c.b16 %v2165, %v2164
    %v2331 = vpack.c.b16 %v2167, %v2166
    %v2332 = vpack.c.b16 %v2169, %v2168
    %v2333 = vpack.c.b16 %v2171, %v2170
    %v2334 = vpack.c.b16 %v2173, %v2172
    %v2335 = vpack.c.b16 %v2175, %v2174
    %v2336 = vpack.c.b16 %v2177, %v2176
    %v2337 = vpack.c.b16 %v2179, %v2178
    %v2338 = vpack.c.b16 %v2181, %v2180
    %v2339 = vpack.c.b16 %v2183, %v2182
    %v2340 = vpack.c.b16 %v2185, %v2184
    %v2341 = vpack.c.b16 %v2187, %v2186
    %v2342 = vpack.c.b16 %v2189, %v2188
    %v2343 = vpack.c.b16 %v2191, %v2190
    %v2344 = vpack.c.b16 %v2193, %v2192
    %v2345 = vpack.c.b16 %v2195, %v2194
    %v2346 = vpack.c.b16 %v2197, %v2196
    %v2347 = vpack.c.b16 %v2199, %v2198
    %v2348 = vpack.c.b16 %v2201, %v2200
    %v2349 = vpack.c.b16 %v2203, %v2202
    %v2350 = vpack.c.b16 %v2205, %v2204
    %v2351 = vpack.c.b16 %v2207, %v2206
    %v2352 = vpack.c.b16 %v2209, %v2208
    %v2353 = vpack.c.b16 %v2211, %v2210
    %v2354 = vpack.c.b16 %v2213, %v2212
    %v2355 = vpack.c.b16 %v2215, %v2214
    %v2356 = vpack.c.b16 %v2217, %v2216
    %v2357 = vpack.c.b16 %v2219, %v2218
    %v2358 = vpack.c.b16 %v2221, %v2220
    %v2359 = vpack.c.b16 %v2223, %v2222
    %v2360 = vpack.c.b16 %v2225, %v2224
    %v2361 = vpack.c.b16 %v2227, %v2226
    %v2362 = vpack.c.b16 %v2229, %v2228
    %v2363 = vpack.c.b16 %v2231, %v2230
    %v2364 = vpack.c.b16 %v2233, %v2232
    %v2365 = vpack.c.b16 %v2235, %v2234
    %v2366 = vpack.c.b16 %v2237, %v2236
    %v2367 = vpack.c.b16 %v2239, %v2238
    %2496 = vmatpush.bf16.msra.mxu0 %v2247
    %2497 = vmatpush.bf16.msra.mxu0 %v2246
    %2498 = vmatpush.bf16.msra.mxu0 %v2245
    %2499 = vmatpush.bf16.msra.mxu0 %v2244
    %2500 = vmatpush.bf16.msra.mxu0 %v2243
    %2501 = vmatpush.bf16.msra.mxu0 %v2242
    %2502 = vmatpush.bf16.msra.mxu0 %v2241
    %2503 = vmatpush.bf16.msra.mxu0 %v2240
    %2504 = vmatmul.bf16.gmra.mxu0 %v1394
    %v2505 = vpop.f32.mrf.mxu0
    %v2506 = vadd.f32 %v1726, %v2505
    %v2507 = vpop.f32.mrf.mxu0
    %v2508 = vadd.f32 %v1726, %v2507
    %2509 = vdwg.mxu0
    %2510 = vmatpush.bf16.msra.mxu0 %v2255
    %2511 = vmatpush.bf16.msra.mxu0 %v2254
    %2512 = vmatpush.bf16.msra.mxu0 %v2253
    %2513 = vmatpush.bf16.msra.mxu0 %v2252
    %2514 = vmatpush.bf16.msra.mxu0 %v2251
    %2515 = vmatpush.bf16.msra.mxu0 %v2250
    %2516 = vmatpush.bf16.msra.mxu0 %v2249
    %2517 = vmatpush.bf16.msra.mxu0 %v2248
    %2518 = vmatmul.bf16.gmra.mxu0 %v1395
    %v2519 = vpop.f32.mrf.mxu0
    %v2520 = vadd.f32 %v2506, %v2519
    %v2521 = vpop.f32.mrf.mxu0
    %v2522 = vadd.f32 %v2508, %v2521
    %2523 = vdwg.mxu0
    %2524 = vmatpush.bf16.msra.mxu0 %v2263
    %2525 = vmatpush.bf16.msra.mxu0 %v2262
    %2526 = vmatpush.bf16.msra.mxu0 %v2261
    %2527 = vmatpush.bf16.msra.mxu0 %v2260
    %2528 = vmatpush.bf16.msra.mxu0 %v2259
    %2529 = vmatpush.bf16.msra.mxu0 %v2258
    %2530 = vmatpush.bf16.msra.mxu0 %v2257
    %2531 = vmatpush.bf16.msra.mxu0 %v2256
    %2532 = vmatmul.bf16.gmra.mxu0 %v1404
    %v2533 = vpop.f32.mrf.mxu0
    %v2534 = vadd.f32 %v2520, %v2533
    %v2535 = vpop.f32.mrf.mxu0
    %v2536 = vadd.f32 %v2522, %v2535
    %2537 = vdwg.mxu0
    %2538 = vmatpush.bf16.msra.mxu0 %v2271
    %2539 = vmatpush.bf16.msra.mxu0 %v2270
    %2540 = vmatpush.bf16.msra.mxu0 %v2269
    %2541 = vmatpush.bf16.msra.mxu0 %v2268
    %2542 = vmatpush.bf16.msra.mxu0 %v2267
    %2543 = vmatpush.bf16.msra.mxu0 %v2266
    %2544 = vmatpush.bf16.msra.mxu0 %v2265
    %2545 = vmatpush.bf16.msra.mxu0 %v2264
    %2546 = vmatmul.bf16.gmra.mxu0 %v1405
    %v2547 = vpop.f32.mrf.mxu0
    %v2548 = vadd.f32 %v2534, %v2547
    %v2549 = vpop.f32.mrf.mxu0
    %v2550 = vadd.f32 %v2536, %v2549
    %2551 = vdwg.mxu0
    %2552 = vmatpush.bf16.msra.mxu0 %v2279
    %2553 = vmatpush.bf16.msra.mxu0 %v2278
    %2554 = vmatpush.bf16.msra.mxu0 %v2277
    %2555 = vmatpush.bf16.msra.mxu0 %v2276
    %2556 = vmatpush.bf16.msra.mxu0 %v2275
    %2557 = vmatpush.bf16.msra.mxu0 %v2274
    %2558 = vmatpush.bf16.msra.mxu0 %v2273
    %2559 = vmatpush.bf16.msra.mxu0 %v2272
    %2560 = vmatmul.bf16.gmra.mxu0 %v1414
    %v2561 = vpop.f32.mrf.mxu0
    %v2562 = vadd.f32 %v2548, %v2561
    %v2563 = vpop.f32.mrf.mxu0
    %v2564 = vadd.f32 %v2550, %v2563
    %2565 = vdwg.mxu0
    %2566 = vmatpush.bf16.msra.mxu0 %v2287
    %2567 = vmatpush.bf16.msra.mxu0 %v2286
    %2568 = vmatpush.bf16.msra.mxu0 %v2285
    %2569 = vmatpush.bf16.msra.mxu0 %v2284
    %2570 = vmatpush.bf16.msra.mxu0 %v2283
    %2571 = vmatpush.bf16.msra.mxu0 %v2282
    %2572 = vmatpush.bf16.msra.mxu0 %v2281
    %2573 = vmatpush.bf16.msra.mxu0 %v2280
    %2574 = vmatmul.bf16.gmra.mxu0 %v1415
    %v2575 = vpop.f32.mrf.mxu0
    %v2576 = vadd.f32 %v2562, %v2575
    %v2577 = vpop.f32.mrf.mxu0
    %v2578 = vadd.f32 %v2564, %v2577
    %2579 = vdwg.mxu0
    %2580 = vmatpush.bf16.msra.mxu0 %v2295
    %2581 = vmatpush.bf16.msra.mxu0 %v2294
    %2582 = vmatpush.bf16.msra.mxu0 %v2293
    %2583 = vmatpush.bf16.msra.mxu0 %v2292
    %2584 = vmatpush.bf16.msra.mxu0 %v2291
    %2585 = vmatpush.bf16.msra.mxu0 %v2290
    %2586 = vmatpush.bf16.msra.mxu0 %v2289
    %2587 = vmatpush.bf16.msra.mxu0 %v2288
    %2588 = vmatmul.bf16.gmra.mxu0 %v1424
    %v2589 = vpop.f32.mrf.mxu0
    %v2590 = vadd.f32 %v2576, %v2589
    %v2591 = vpop.f32.mrf.mxu0
    %v2592 = vadd.f32 %v2578, %v2591
    %2593 = vdwg.mxu0
    %2594 = vmatpush.bf16.msra.mxu0 %v2303
    %2595 = vmatpush.bf16.msra.mxu0 %v2302
    %2596 = vmatpush.bf16.msra.mxu0 %v2301
    %2597 = vmatpush.bf16.msra.mxu0 %v2300
    %2598 = vmatpush.bf16.msra.mxu0 %v2299
    %2599 = vmatpush.bf16.msra.mxu0 %v2298
    %2600 = vmatpush.bf16.msra.mxu0 %v2297
    %2601 = vmatpush.bf16.msra.mxu0 %v2296
    %2602 = vmatmul.bf16.gmra.mxu0 %v1425
    %v2603 = vpop.f32.mrf.mxu0
    %v2604 = vadd.f32 %v2590, %v2603
    %v2605 = vpop.f32.mrf.mxu0
    %v2606 = vadd.f32 %v2592, %v2605
    %2607 = vdwg.mxu0
    %2608 = vmatpush.bf16.msra.mxu0 %v2311
    %2609 = vmatpush.bf16.msra.mxu0 %v2310
    %2610 = vmatpush.bf16.msra.mxu0 %v2309
    %2611 = vmatpush.bf16.msra.mxu0 %v2308
    %2612 = vmatpush.bf16.msra.mxu0 %v2307
    %2613 = vmatpush.bf16.msra.mxu0 %v2306
    %2614 = vmatpush.bf16.msra.mxu0 %v2305
    %2615 = vmatpush.bf16.msra.mxu0 %v2304
    %2616 = vmatmul.bf16.gmra.mxu0 %v1434
    %v2617 = vpop.f32.mrf.mxu0
    %v2618 = vadd.f32 %v2604, %v2617
    %v2619 = vpop.f32.mrf.mxu0
    %v2620 = vadd.f32 %v2606, %v2619
    %2621 = vdwg.mxu0
    %2622 = vmatpush.bf16.msra.mxu0 %v2319
    %2623 = vmatpush.bf16.msra.mxu0 %v2318
    %2624 = vmatpush.bf16.msra.mxu0 %v2317
    %2625 = vmatpush.bf16.msra.mxu0 %v2316
    %2626 = vmatpush.bf16.msra.mxu0 %v2315
    %2627 = vmatpush.bf16.msra.mxu0 %v2314
    %2628 = vmatpush.bf16.msra.mxu0 %v2313
    %2629 = vmatpush.bf16.msra.mxu0 %v2312
    %2630 = vmatmul.bf16.gmra.mxu0 %v1435
    %v2631 = vpop.f32.mrf.mxu0
    %v2632 = vadd.f32 %v2618, %v2631
    %v2633 = vpop.f32.mrf.mxu0
    %v2634 = vadd.f32 %v2620, %v2633
    %2635 = vdwg.mxu0
    %2636 = vmatpush.bf16.msra.mxu0 %v2327
    %2637 = vmatpush.bf16.msra.mxu0 %v2326
    %2638 = vmatpush.bf16.msra.mxu0 %v2325
    %2639 = vmatpush.bf16.msra.mxu0 %v2324
    %2640 = vmatpush.bf16.msra.mxu0 %v2323
    %2641 = vmatpush.bf16.msra.mxu0 %v2322
    %2642 = vmatpush.bf16.msra.mxu0 %v2321
    %2643 = vmatpush.bf16.msra.mxu0 %v2320
    %2644 = vmatmul.bf16.gmra.mxu0 %v1444
    %v2645 = vpop.f32.mrf.mxu0
    %v2646 = vadd.f32 %v2632, %v2645
    %v2647 = vpop.f32.mrf.mxu0
    %v2648 = vadd.f32 %v2634, %v2647
    %2649 = vdwg.mxu0
    %2650 = vmatpush.bf16.msra.mxu0 %v2335
    %2651 = vmatpush.bf16.msra.mxu0 %v2334
    %2652 = vmatpush.bf16.msra.mxu0 %v2333
    %2653 = vmatpush.bf16.msra.mxu0 %v2332
    %2654 = vmatpush.bf16.msra.mxu0 %v2331
    %2655 = vmatpush.bf16.msra.mxu0 %v2330
    %2656 = vmatpush.bf16.msra.mxu0 %v2329
    %2657 = vmatpush.bf16.msra.mxu0 %v2328
    %2658 = vmatmul.bf16.gmra.mxu0 %v1445
    %v2659 = vpop.f32.mrf.mxu0
    %v2660 = vadd.f32 %v2646, %v2659
    %v2661 = vpop.f32.mrf.mxu0
    %v2662 = vadd.f32 %v2648, %v2661
    %2663 = vdwg.mxu0
    %2664 = vmatpush.bf16.msra.mxu0 %v2343
    %2665 = vmatpush.bf16.msra.mxu0 %v2342
    %2666 = vmatpush.bf16.msra.mxu0 %v2341
    %2667 = vmatpush.bf16.msra.mxu0 %v2340
    %2668 = vmatpush.bf16.msra.mxu0 %v2339
    %2669 = vmatpush.bf16.msra.mxu0 %v2338
    %2670 = vmatpush.bf16.msra.mxu0 %v2337
    %2671 = vmatpush.bf16.msra.mxu0 %v2336
    %2672 = vmatmul.bf16.gmra.mxu0 %v1454
    %v2673 = vpop.f32.mrf.mxu0
    %v2674 = vadd.f32 %v2660, %v2673
    %v2675 = vpop.f32.mrf.mxu0
    %v2676 = vadd.f32 %v2662, %v2675
    %2677 = vdwg.mxu0
    %2678 = vmatpush.bf16.msra.mxu0 %v2351
    %2679 = vmatpush.bf16.msra.mxu0 %v2350
    %2680 = vmatpush.bf16.msra.mxu0 %v2349
    %2681 = vmatpush.bf16.msra.mxu0 %v2348
    %2682 = vmatpush.bf16.msra.mxu0 %v2347
    %2683 = vmatpush.bf16.msra.mxu0 %v2346
    %2684 = vmatpush.bf16.msra.mxu0 %v2345
    %2685 = vmatpush.bf16.msra.mxu0 %v2344
    %2686 = vmatmul.bf16.gmra.mxu0 %v1455
    %v2687 = vpop.f32.mrf.mxu0
    %v2688 = vadd.f32 %v2674, %v2687
    %v2689 = vpop.f32.mrf.mxu0
    %v2690 = vadd.f32 %v2676, %v2689
    %2691 = vdwg.mxu0
    %2692 = vmatpush.bf16.msra.mxu0 %v2359
    %2693 = vmatpush.bf16.msra.mxu0 %v2358
    %2694 = vmatpush.bf16.msra.mxu0 %v2357
    %2695 = vmatpush.bf16.msra.mxu0 %v2356
    %2696 = vmatpush.bf16.msra.mxu0 %v2355
    %2697 = vmatpush.bf16.msra.mxu0 %v2354
    %2698 = vmatpush.bf16.msra.mxu0 %v2353
    %2699 = vmatpush.bf16.msra.mxu0 %v2352
    %2700 = vmatmul.bf16.gmra.mxu0 %v1464
    %v2701 = vpop.f32.mrf.mxu0
    %v2702 = vadd.f32 %v2688, %v2701
    %v2703 = vpop.f32.mrf.mxu0
    %v2704 = vadd.f32 %v2690, %v2703
    %2705 = vdwg.mxu0
    %2706 = vmatpush.bf16.msra.mxu0 %v2367
    %2707 = vmatpush.bf16.msra.mxu0 %v2366
    %2708 = vmatpush.bf16.msra.mxu0 %v2365
    %2709 = vmatpush.bf16.msra.mxu0 %v2364
    %2710 = vmatpush.bf16.msra.mxu0 %v2363
    %2711 = vmatpush.bf16.msra.mxu0 %v2362
    %2712 = vmatpush.bf16.msra.mxu0 %v2361
    %2713 = vmatpush.bf16.msra.mxu0 %v2360
    %2714 = vmatmul.bf16.gmra.mxu0 %v1465
    %v2715 = vpop.f32.mrf.mxu0
    %v2716 = vadd.f32 %v2702, %v2715
    %v2717 = vpop.f32.mrf.mxu0
    %v2718 = vadd.f32 %v2704, %v2717
    %2719 = vdwg.mxu0
    %v2720 = vmax.f32 %v2716, 0.0
    %v2721 = vmax.f32 %v2718, 0.0
    %v2722 = vld [vmem:[%s6] sm:$0xff]
    %v2723 = vld [vmem:[%s6 + $0x8] sm:$0xff]
    %v2724 = vld [vmem:[%s6 + $0x10] sm:$0xff]
    %v2725 = vld [vmem:[%s6 + $0x18] sm:$0xff]
    %v2726 = vld [vmem:[%s6 + $0x20] sm:$0xff]
    %v2727 = vld [vmem:[%s6 + $0x28] sm:$0xff]
    %v2728 = vld [vmem:[%s6 + $0x30] sm:$0xff]
    %v2729 = vld [vmem:[%s6 + $0x38] sm:$0xff]
    %vm2730 = vcmask 130048
    %v2732 = vsel %vm2730, %v2722, 0
    %v2735 = vsel %vm2730, %v2723, 0
    %v2738 = vsel %vm2730, %v2724, 0
    %v2741 = vsel %vm2730, %v2725, 0
    %v2744 = vsel %vm2730, %v2726, 0
    %v2747 = vsel %vm2730, %v2727, 0
    %v2750 = vsel %vm2730, %v2728, 0
    %v2753 = vsel %vm2730, %v2729, 0
    %2755 = vmatpush.msra.mxu0 0.0
    %2756 = vmatpush.msra.mxu0 0.0
    %2757 = vmatpush.msra.mxu0 0.0
    %2758 = vmatpush.msra.mxu0 0.0
    %2759 = vmatpush.msra.mxu0 0.0
    %2760 = vmatpush.msra.mxu0 0.0
    %2761 = vmatpush.msra.mxu0 0.0
    %2762 = vmatpush.msra.mxu0 0.0
    %2763 = vmatpush.msra.mxu0 0.0
    %2764 = vmatpush.msra.mxu0 0.0
    %2765 = vmatpush.msra.mxu0 0.0
    %2766 = vmatpush.msra.mxu0 0.0
    %2767 = vmatpush.msra.mxu0 0.0
    %2768 = vmatpush.msra.mxu0 0.0
    %2769 = vmatpush.msra.mxu0 %v2721
    %2770 = vmatpush.msra.mxu0 %v2720
    %2771 = vmatmul.f32.gmra.mxu0 %v2732
    %v2772 = vpop.f32.mrf.mxu0
    %v2773 = vadd.f32 0.0, %v2772
    %2774 = vmatmul.f32.gmra.mxu0 %v2735
    %v2775 = vpop.f32.mrf.mxu0
    %v2776 = vadd.f32 0.0, %v2775
    %2777 = vmatmul.f32.gmra.mxu0 %v2738
    %v2778 = vpop.f32.mrf.mxu0
    %v2779 = vadd.f32 0.0, %v2778
    %2780 = vmatmul.f32.gmra.mxu0 %v2741
    %v2781 = vpop.f32.mrf.mxu0
    %v2782 = vadd.f32 0.0, %v2781
    %2783 = vmatmul.f32.gmra.mxu0 %v2744
    %v2784 = vpop.f32.mrf.mxu0
    %v2785 = vadd.f32 0.0, %v2784
    %2786 = vmatmul.f32.gmra.mxu0 %v2747
    %v2787 = vpop.f32.mrf.mxu0
    %v2788 = vadd.f32 0.0, %v2787
    %2789 = vmatmul.f32.gmra.mxu0 %v2750
    %v2790 = vpop.f32.mrf.mxu0
    %v2791 = vadd.f32 0.0, %v2790
    %2792 = vmatmul.f32.gmra.mxu0 %v2753
    %v2793 = vpop.f32.mrf.mxu0
    %v2794 = vadd.f32 0.0, %v2793
    %2795 = vdwg.mxu0
    %v2796 = vld [vmem:[%s7] sm:$0xff]
    %v2797 = vld [vmem:[%s7 + $0x8] sm:$0xff]
    %v2798 = vld [vmem:[%s7 + $0x10] sm:$0xff]
    %v2799 = vld [vmem:[%s7 + $0x18] sm:$0xff]
    %v2800 = vld [vmem:[%s5] sm:$0xff]
    %v2801 = vld [vmem:[%s5 + $0x8] sm:$0xff]
    %v2802 = vld [vmem:[%s5 + $0x10] sm:$0xff]
    %v2803 = vld [vmem:[%s5 + $0x18] sm:$0xff]
    %v2804 = vld [vmem:[%s5 + $0x20] sm:$0xff]
    %v2805 = vld [vmem:[%s5 + $0x28] sm:$0xff]
    %v2806 = vld [vmem:[%s5 + $0x30] sm:$0xff]
    %v2807 = vld [vmem:[%s5 + $0x38] sm:$0xff]
    %v2808 = vld [vmem:[%s8] sm:$0x3]
    %vm2809 = vcmask 15360
    %v2811 = vsel %vm2809, %v2800, 0
    %v2814 = vsel %vm2809, %v2801, 0
    %v2817 = vsel %vm2809, %v2802, 0
    %v2820 = vsel %vm2809, %v2803, 0
    %v2823 = vsel %vm2809, %v2804, 0
    %v2826 = vsel %vm2809, %v2805, 0
    %v2829 = vsel %vm2809, %v2806, 0
    %v2832 = vsel %vm2809, %v2807, 0
    %vm2834 = vcmask 1041408
    %v2836 = vsel %vm2834, %v2808, 0
    %2838 = vmatpush.msra.mxu0 0.0
    %2839 = vmatpush.msra.mxu0 0.0
    %2840 = vmatpush.msra.mxu0 0.0
    %2841 = vmatpush.msra.mxu0 0.0
    %2842 = vmatpush.msra.mxu0 0.0
    %2843 = vmatpush.msra.mxu0 0.0
    %2844 = vmatpush.msra.mxu0 0.0
    %2845 = vmatpush.msra.mxu0 0.0
    %2846 = vmatpush.msra.mxu0 0.0
    %2847 = vmatpush.msra.mxu0 0.0
    %2848 = vmatpush.msra.mxu0 0.0
    %2849 = vmatpush.msra.mxu0 0.0
    %2850 = vmatpush.msra.mxu0 0.0
    %2851 = vmatpush.msra.mxu0 0.0
    %2852 = vmatpush.msra.mxu0 0.0
    %2853 = vmatpush.msra.mxu0 %v2836
    %2854 = vmatmul.f32.gmra.mxu0 %v2811
    %v2855 = vpop.f32.mrf.mxu0
    %v2856 = vadd.f32 0.0, %v2855
    %2857 = vmatmul.f32.gmra.mxu0 %v2814
    %v2858 = vpop.f32.mrf.mxu0
    %v2859 = vadd.f32 0.0, %v2858
    %2860 = vmatmul.f32.gmra.mxu0 %v2817
    %v2861 = vpop.f32.mrf.mxu0
    %v2862 = vadd.f32 0.0, %v2861
    %2863 = vmatmul.f32.gmra.mxu0 %v2820
    %v2864 = vpop.f32.mrf.mxu0
    %v2865 = vadd.f32 0.0, %v2864
    %2866 = vmatmul.f32.gmra.mxu0 %v2823
    %v2867 = vpop.f32.mrf.mxu0
    %v2868 = vadd.f32 0.0, %v2867
    %2869 = vmatmul.f32.gmra.mxu0 %v2826
    %v2870 = vpop.f32.mrf.mxu0
    %v2871 = vadd.f32 0.0, %v2870
    %2872 = vmatmul.f32.gmra.mxu0 %v2829
    %v2873 = vpop.f32.mrf.mxu0
    %v2874 = vadd.f32 0.0, %v2873
    %2875 = vmatmul.f32.gmra.mxu0 %v2832
    %v2876 = vpop.f32.mrf.mxu0
    %v2877 = vadd.f32 0.0, %v2876
    %2878 = vdwg.mxu0
    %vm2879 = vcmask 261120
    %v2881 = vsel %vm2879, %v2773, 0
    %v2884 = vsel %vm2879, %v2776, 0
    %v2887 = vsel %vm2879, %v2779, 0
    %v2890 = vsel %vm2879, %v2782, 0
    %v2893 = vsel %vm2879, %v2785, 0
    %v2896 = vsel %vm2879, %v2788, 0
    %v2899 = vsel %vm2879, %v2791, 0
    %v2902 = vsel %vm2879, %v2794, 0
    %2904 = vmatpush.msra.mxu0 0.0
    %2905 = vmatpush.msra.mxu0 0.0
    %2906 = vmatpush.msra.mxu0 0.0
    %2907 = vmatpush.msra.mxu0 0.0
    %2908 = vmatpush.msra.mxu0 0.0
    %2909 = vmatpush.msra.mxu0 0.0
    %2910 = vmatpush.msra.mxu0 0.0
    %2911 = vmatpush.msra.mxu0 0.0
    %2912 = vmatpush.msra.mxu0 0.0
    %2913 = vmatpush.msra.mxu0 0.0
    %2914 = vmatpush.msra.mxu0 0.0
    %2915 = vmatpush.msra.mxu0 0.0
    %2916 = vmatpush.msra.mxu0 %v2799
    %2917 = vmatpush.msra.mxu0 %v2798
    %2918 = vmatpush.msra.mxu0 %v2797
    %2919 = vmatpush.msra.mxu0 %v2796
    %2920 = vmatmul.f32.gmra.mxu0 %v2881
    %v2921 = vpop.f32.mrf.mxu0
    %v2922 = vadd.f32 %v2856, %v2921
    %2923 = vmatmul.f32.gmra.mxu0 %v2884
    %v2924 = vpop.f32.mrf.mxu0
    %v2925 = vadd.f32 %v2859, %v2924
    %2926 = vmatmul.f32.gmra.mxu0 %v2887
    %v2927 = vpop.f32.mrf.mxu0
    %v2928 = vadd.f32 %v2862, %v2927
    %2929 = vmatmul.f32.gmra.mxu0 %v2890
    %v2930 = vpop.f32.mrf.mxu0
    %v2931 = vadd.f32 %v2865, %v2930
    %2932 = vmatmul.f32.gmra.mxu0 %v2893
    %v2933 = vpop.f32.mrf.mxu0
    %v2934 = vadd.f32 %v2868, %v2933
    %2935 = vmatmul.f32.gmra.mxu0 %v2896
    %v2936 = vpop.f32.mrf.mxu0
    %v2937 = vadd.f32 %v2871, %v2936
    %2938 = vmatmul.f32.gmra.mxu0 %v2899
    %v2939 = vpop.f32.mrf.mxu0
    %v2940 = vadd.f32 %v2874, %v2939
    %2941 = vmatmul.f32.gmra.mxu0 %v2902
    %v2942 = vpop.f32.mrf.mxu0
    %v2943 = vadd.f32 %v2877, %v2942
    %2944 = vdwg.mxu0
    %v2945 = vld [vmem:[%s9] sm:$0x1]
    %v2947 = vperm.slane %v2945, 0
    %v2949 = vadd.f32 %v2922, %v2947
    %v2950 = vadd.f32 %v2925, %v2947
    %v2951 = vadd.f32 %v2928, %v2947
    %v2952 = vadd.f32 %v2931, %v2947
    %v2953 = vadd.f32 %v2934, %v2947
    %v2954 = vadd.f32 %v2937, %v2947
    %v2955 = vadd.f32 %v2940, %v2947
    %v2956 = vadd.f32 %v2943, %v2947
    %v2957 = vld [vmem:[%s10] sm:$0xff]
    %v2958 = vld [vmem:[%s10 + $0x8] sm:$0xff]
    %v2959 = vld [vmem:[%s10 + $0x10] sm:$0xff]
    %v2960 = vld [vmem:[%s10 + $0x18] sm:$0xff]
    %v2961 = vld [vmem:[%s11] sm:$0x1]
    %v2963 = vperm.slane %v2961, 0
    %v2965 = vsel %vm2879, 0.0, 0
    %2967 = vmatpush.msra.mxu0 0.0
    %2968 = vmatpush.msra.mxu0 0.0
    %2969 = vmatpush.msra.mxu0 0.0
    %2970 = vmatpush.msra.mxu0 0.0
    %2971 = vmatpush.msra.mxu0 0.0
    %2972 = vmatpush.msra.mxu0 0.0
    %2973 = vmatpush.msra.mxu0 0.0
    %2974 = vmatpush.msra.mxu0 0.0
    %2975 = vmatpush.msra.mxu0 0.0
    %2976 = vmatpush.msra.mxu0 0.0
    %2977 = vmatpush.msra.mxu0 0.0
    %2978 = vmatpush.msra.mxu0 0.0
    %2979 = vmatpush.msra.mxu0 %v2960
    %2980 = vmatpush.msra.mxu0 %v2959
    %2981 = vmatpush.msra.mxu0 %v2958
    %2982 = vmatpush.msra.mxu0 %v2957
    %2983 = vmatmul.f32.gmra.mxu0 %v2965
    %v2984 = vpop.f32.mrf.mxu0
    %v2985 = vadd.f32 0.0, %v2984
    %2986 = vdwg.mxu0
    %v2987 = vadd.f32 %v2956, %v2985
    %v2988 = vxor.u32 %v2987, 2147483648
    %v2989 = vmul.f32 %v2988, 1.442695
    %v2990 = vpow.pop %v2989
    %v2991 = vadd.f32 %v2990, 1.0
    %v2992 = vrcp.pop %v2991
    %v2993 = vmul.f32 %v2991, %v2992
    %v2994 = vsub.f32 1.0, %v2993
    %v2995 = vmul.f32 %v2992, %v2994
    %v2996 = vadd.f32 %v2992, %v2995
    %vm2997 = vweird.f32 %v2991
    %vm2998 = vweird.f32 %v2992
    %vm2999 = vmor %vm2997, %vm2998
    %v3000 = vsel %vm2999, %v2992, %v2996
    %v3001 = vand.u32 2147483647, %v2991
    %vm3002 = vcmp.eq.f32.partialorder %v3001, 8.507059e+37
    %v3003 = vand.u32 %v2991, 2147483648
    %v3004 = vor.u32 1.1754944e-38, %v3003
    %v3005 = vsel %vm3002, %v3004, %v3000
    %v3006 = vmul.f32 1.0, %v3005
    %3007 = vrot.lane.b32.xlu0 %v2963, 64
    %v3008 = vpop.permute.xlu0 %3007
    %v3010 = vadd.f32 %v2985, %v3008
    %3012 = vrot.lane.b32.xlu0 %v3010, 64
    %v3013 = vpop.permute.xlu0 %3012
    %v3015 = vmul.f32 %v3006, %v3013
    %3017 = vrot.lane.b32.xlu0 %v3015, 64
    %v3018 = vpop.permute.xlu0 %3017
    %v3020 = vadd.f32 %v2956, %v3018
    %v3021 = vtanh.pop %v3020
    %v3022 = vsub.f32 1.0, %v3006
    %3024 = vrot.lane.b32.xlu0 %v3021, 96
    %v3025 = vpop.permute.xlu0 %3024
    %v3027 = vmul.f32 %v3022, %v3025
    %v3028 = vmul.f32 %v3006, 0.0
    %v3029 = vadd.f32 %v3027, %v3028
    %3031 = vrot.lane.b32.xlu0 %v3029, 96
    %v3032 = vpop.permute.xlu0 %3031
    %v3033 = vsel %vm2879, %v3032, 0
    %3035 = vmatpush.msra.mxu0 0.0
    %3036 = vmatpush.msra.mxu0 0.0
    %3037 = vmatpush.msra.mxu0 0.0
    %3038 = vmatpush.msra.mxu0 0.0
    %3039 = vmatpush.msra.mxu0 0.0
    %3040 = vmatpush.msra.mxu0 0.0
    %3041 = vmatpush.msra.mxu0 0.0
    %3042 = vmatpush.msra.mxu0 0.0
    %3043 = vmatpush.msra.mxu0 0.0
    %3044 = vmatpush.msra.mxu0 0.0
    %3045 = vmatpush.msra.mxu0 0.0
    %3046 = vmatpush.msra.mxu0 0.0
    %3047 = vmatpush.msra.mxu0 %v2960
    %3048 = vmatpush.msra.mxu0 %v2959
    %3049 = vmatpush.msra.mxu0 %v2958
    %3050 = vmatpush.msra.mxu0 %v2957
    %3051 = vmatmul.f32.gmra.mxu0 %v3033
    %v3052 = vpop.f32.mrf.mxu0
    %v3053 = vadd.f32 0.0, %v3052
    %3054 = vdwg.mxu0
    %v3055 = vadd.f32 %v2955, %v3053
    %v3056 = vxor.u32 %v3055, 2147483648
    %v3057 = vmul.f32 %v3056, 1.442695
    %v3058 = vpow.pop %v3057
    %v3059 = vadd.f32 %v3058, 1.0
    %v3060 = vrcp.pop %v3059
    %v3061 = vmul.f32 %v3059, %v3060
    %v3062 = vsub.f32 1.0, %v3061
    %v3063 = vmul.f32 %v3060, %v3062
    %v3064 = vadd.f32 %v3060, %v3063
    %vm3065 = vweird.f32 %v3059
    %vm3066 = vweird.f32 %v3060
    %vm3067 = vmor %vm3065, %vm3066
    %v3068 = vsel %vm3067, %v3060, %v3064
    %v3069 = vand.u32 2147483647, %v3059
    %vm3070 = vcmp.eq.f32.partialorder %v3069, 8.507059e+37
    %v3071 = vand.u32 %v3059, 2147483648
    %v3072 = vor.u32 1.1754944e-38, %v3071
    %v3073 = vsel %vm3070, %v3072, %v3068
    %v3074 = vmul.f32 1.0, %v3073
    %v3075 = vadd.f32 %v3053, %v3008
    %3077 = vrot.lane.b32.xlu0 %v3075, 64
    %v3078 = vpop.permute.xlu0 %3077
    %v3080 = vmul.f32 %v3074, %v3078
    %3082 = vrot.lane.b32.xlu0 %v3080, 64
    %v3083 = vpop.permute.xlu0 %3082
    %v3085 = vadd.f32 %v2955, %v3083
    %v3086 = vtanh.pop %v3085
    %v3087 = vsub.f32 1.0, %v3074
    %3089 = vrot.lane.b32.xlu0 %v3086, 96
    %v3090 = vpop.permute.xlu0 %3089
    %v3092 = vmul.f32 %v3087, %v3090
    %v3093 = vmul.f32 %v3074, %v3029
    %v3094 = vadd.f32 %v3092, %v3093
    %3096 = vrot.lane.b32.xlu0 %v3094, 96
    %v3097 = vpop.permute.xlu0 %3096
    %v3098 = vsel %vm2879, %v3097, 0
    %3100 = vmatpush.msra.mxu0 0.0
    %3101 = vmatpush.msra.mxu0 0.0
    %3102 = vmatpush.msra.mxu0 0.0
    %3103 = vmatpush.msra.mxu0 0.0
    %3104 = vmatpush.msra.mxu0 0.0
    %3105 = vmatpush.msra.mxu0 0.0
    %3106 = vmatpush.msra.mxu0 0.0
    %3107 = vmatpush.msra.mxu0 0.0
    %3108 = vmatpush.msra.mxu0 0.0
    %3109 = vmatpush.msra.mxu0 0.0
    %3110 = vmatpush.msra.mxu0 0.0
    %3111 = vmatpush.msra.mxu0 0.0
    %3112 = vmatpush.msra.mxu0 %v2960
    %3113 = vmatpush.msra.mxu0 %v2959
    %3114 = vmatpush.msra.mxu0 %v2958
    %3115 = vmatpush.msra.mxu0 %v2957
    %3116 = vmatmul.f32.gmra.mxu0 %v3098
    %v3117 = vpop.f32.mrf.mxu0
    %v3118 = vadd.f32 0.0, %v3117
    %3119 = vdwg.mxu0
    %v3120 = vadd.f32 %v2954, %v3118
    %v3121 = vxor.u32 %v3120, 2147483648
    %v3122 = vmul.f32 %v3121, 1.442695
    %v3123 = vpow.pop %v3122
    %v3124 = vadd.f32 %v3123, 1.0
    %v3125 = vrcp.pop %v3124
    %v3126 = vmul.f32 %v3124, %v3125
    %v3127 = vsub.f32 1.0, %v3126
    %v3128 = vmul.f32 %v3125, %v3127
    %v3129 = vadd.f32 %v3125, %v3128
    %vm3130 = vweird.f32 %v3124
    %vm3131 = vweird.f32 %v3125
    %vm3132 = vmor %vm3130, %vm3131
    %v3133 = vsel %vm3132, %v3125, %v3129
    %v3134 = vand.u32 2147483647, %v3124
    %vm3135 = vcmp.eq.f32.partialorder %v3134, 8.507059e+37
    %v3136 = vand.u32 %v3124, 2147483648
    %v3137 = vor.u32 1.1754944e-38, %v3136
    %v3138 = vsel %vm3135, %v3137, %v3133
    %v3139 = vmul.f32 1.0, %v3138
    %v3140 = vadd.f32 %v3118, %v3008
    %3142 = vrot.lane.b32.xlu0 %v3140, 64
    %v3143 = vpop.permute.xlu0 %3142
    %v3145 = vmul.f32 %v3139, %v3143
    %3147 = vrot.lane.b32.xlu0 %v3145, 64
    %v3148 = vpop.permute.xlu0 %3147
    %v3150 = vadd.f32 %v2954, %v3148
    %v3151 = vtanh.pop %v3150
    %v3152 = vsub.f32 1.0, %v3139
    %3154 = vrot.lane.b32.xlu0 %v3151, 96
    %v3155 = vpop.permute.xlu0 %3154
    %v3157 = vmul.f32 %v3152, %v3155
    %v3158 = vmul.f32 %v3139, %v3094
    %v3159 = vadd.f32 %v3157, %v3158
    %3161 = vrot.lane.b32.xlu0 %v3159, 96
    %v3162 = vpop.permute.xlu0 %3161
    %v3163 = vsel %vm2879, %v3162, 0
    %3165 = vmatpush.msra.mxu0 0.0
    %3166 = vmatpush.msra.mxu0 0.0
    %3167 = vmatpush.msra.mxu0 0.0
    %3168 = vmatpush.msra.mxu0 0.0
    %3169 = vmatpush.msra.mxu0 0.0
    %3170 = vmatpush.msra.mxu0 0.0
    %3171 = vmatpush.msra.mxu0 0.0
    %3172 = vmatpush.msra.mxu0 0.0
    %3173 = vmatpush.msra.mxu0 0.0
    %3174 = vmatpush.msra.mxu0 0.0
    %3175 = vmatpush.msra.mxu0 0.0
    %3176 = vmatpush.msra.mxu0 0.0
    %3177 = vmatpush.msra.mxu0 %v2960
    %3178 = vmatpush.msra.mxu0 %v2959
    %3179 = vmatpush.msra.mxu0 %v2958
    %3180 = vmatpush.msra.mxu0 %v2957
    %3181 = vmatmul.f32.gmra.mxu0 %v3163
    %v3182 = vpop.f32.mrf.mxu0
    %v3183 = vadd.f32 0.0, %v3182
    %3184 = vdwg.mxu0
    %v3185 = vadd.f32 %v2953, %v3183
    %v3186 = vxor.u32 %v3185, 2147483648
    %v3187 = vmul.f32 %v3186, 1.442695
    %v3188 = vpow.pop %v3187
    %v3189 = vadd.f32 %v3188, 1.0
    %v3190 = vrcp.pop %v3189
    %v3191 = vmul.f32 %v3189, %v3190
    %v3192 = vsub.f32 1.0, %v3191
    %v3193 = vmul.f32 %v3190, %v3192
    %v3194 = vadd.f32 %v3190, %v3193
    %vm3195 = vweird.f32 %v3189
    %vm3196 = vweird.f32 %v3190
    %vm3197 = vmor %vm3195, %vm3196
    %v3198 = vsel %vm3197, %v3190, %v3194
    %v3199 = vand.u32 2147483647, %v3189
    %vm3200 = vcmp.eq.f32.partialorder %v3199, 8.507059e+37
    %v3201 = vand.u32 %v3189, 2147483648
    %v3202 = vor.u32 1.1754944e-38, %v3201
    %v3203 = vsel %vm3200, %v3202, %v3198
    %v3204 = vmul.f32 1.0, %v3203
    %v3205 = vadd.f32 %v3183, %v3008
    %3207 = vrot.lane.b32.xlu0 %v3205, 64
    %v3208 = vpop.permute.xlu0 %3207
    %v3210 = vmul.f32 %v3204, %v3208
    %3212 = vrot.lane.b32.xlu0 %v3210, 64
    %v3213 = vpop.permute.xlu0 %3212
    %v3215 = vadd.f32 %v2953, %v3213
    %v3216 = vtanh.pop %v3215
    %v3217 = vsub.f32 1.0, %v3204
    %3219 = vrot.lane.b32.xlu0 %v3216, 96
    %v3220 = vpop.permute.xlu0 %3219
    %v3222 = vmul.f32 %v3217, %v3220
    %v3223 = vmul.f32 %v3204, %v3159
    %v3224 = vadd.f32 %v3222, %v3223
    %3226 = vrot.lane.b32.xlu0 %v3224, 96
    %v3227 = vpop.permute.xlu0 %3226
    %v3228 = vsel %vm2879, %v3227, 0
    %3230 = vmatpush.msra.mxu0 0.0
    %3231 = vmatpush.msra.mxu0 0.0
    %3232 = vmatpush.msra.mxu0 0.0
    %3233 = vmatpush.msra.mxu0 0.0
    %3234 = vmatpush.msra.mxu0 0.0
    %3235 = vmatpush.msra.mxu0 0.0
    %3236 = vmatpush.msra.mxu0 0.0
    %3237 = vmatpush.msra.mxu0 0.0
    %3238 = vmatpush.msra.mxu0 0.0
    %3239 = vmatpush.msra.mxu0 0.0
    %3240 = vmatpush.msra.mxu0 0.0
    %3241 = vmatpush.msra.mxu0 0.0
    %3242 = vmatpush.msra.mxu0 %v2960
    %3243 = vmatpush.msra.mxu0 %v2959
    %3244 = vmatpush.msra.mxu0 %v2958
    %3245 = vmatpush.msra.mxu0 %v2957
    %3246 = vmatmul.f32.gmra.mxu0 %v3228
    %v3247 = vpop.f32.mrf.mxu0
    %v3248 = vadd.f32 0.0, %v3247
    %3249 = vdwg.mxu0
    %v3250 = vadd.f32 %v2952, %v3248
    %v3251 = vxor.u32 %v3250, 2147483648
    %v3252 = vmul.f32 %v3251, 1.442695
    %v3253 = vpow.pop %v3252
    %v3254 = vadd.f32 %v3253, 1.0
    %v3255 = vrcp.pop %v3254
    %v3256 = vmul.f32 %v3254, %v3255
    %v3257 = vsub.f32 1.0, %v3256
    %v3258 = vmul.f32 %v3255, %v3257
    %v3259 = vadd.f32 %v3255, %v3258
    %vm3260 = vweird.f32 %v3254
    %vm3261 = vweird.f32 %v3255
    %vm3262 = vmor %vm3260, %vm3261
    %v3263 = vsel %vm3262, %v3255, %v3259
    %v3264 = vand.u32 2147483647, %v3254
    %vm3265 = vcmp.eq.f32.partialorder %v3264, 8.507059e+37
    %v3266 = vand.u32 %v3254, 2147483648
    %v3267 = vor.u32 1.1754944e-38, %v3266
    %v3268 = vsel %vm3265, %v3267, %v3263
    %v3269 = vmul.f32 1.0, %v3268
    %v3270 = vadd.f32 %v3248, %v3008
    %3272 = vrot.lane.b32.xlu0 %v3270, 64
    %v3273 = vpop.permute.xlu0 %3272
    %v3275 = vmul.f32 %v3269, %v3273
    %3277 = vrot.lane.b32.xlu0 %v3275, 64
    %v3278 = vpop.permute.xlu0 %3277
    %v3280 = vadd.f32 %v2952, %v3278
    %v3281 = vtanh.pop %v3280
    %v3282 = vsub.f32 1.0, %v3269
    %3284 = vrot.lane.b32.xlu0 %v3281, 96
    %v3285 = vpop.permute.xlu0 %3284
    %v3287 = vmul.f32 %v3282, %v3285
    %v3288 = vmul.f32 %v3269, %v3224
    %v3289 = vadd.f32 %v3287, %v3288
    %3291 = vrot.lane.b32.xlu0 %v3289, 96
    %v3292 = vpop.permute.xlu0 %3291
    %v3293 = vsel %vm2879, %v3292, 0
    %3295 = vmatpush.msra.mxu0 0.0
    %3296 = vmatpush.msra.mxu0 0.0
    %3297 = vmatpush.msra.mxu0 0.0
    %3298 = vmatpush.msra.mxu0 0.0
    %3299 = vmatpush.msra.mxu0 0.0
    %3300 = vmatpush.msra.mxu0 0.0
    %3301 = vmatpush.msra.mxu0 0.0
    %3302 = vmatpush.msra.mxu0 0.0
    %3303 = vmatpush.msra.mxu0 0.0
    %3304 = vmatpush.msra.mxu0 0.0
    %3305 = vmatpush.msra.mxu0 0.0
    %3306 = vmatpush.msra.mxu0 0.0
    %3307 = vmatpush.msra.mxu0 %v2960
    %3308 = vmatpush.msra.mxu0 %v2959
    %3309 = vmatpush.msra.mxu0 %v2958
    %3310 = vmatpush.msra.mxu0 %v2957
    %3311 = vmatmul.f32.gmra.mxu0 %v3293
    %v3312 = vpop.f32.mrf.mxu0
    %v3313 = vadd.f32 0.0, %v3312
    %3314 = vdwg.mxu0
    %v3315 = vadd.f32 %v2951, %v3313
    %v3316 = vxor.u32 %v3315, 2147483648
    %v3317 = vmul.f32 %v3316, 1.442695
    %v3318 = vpow.pop %v3317
    %v3319 = vadd.f32 %v3318, 1.0
    %v3320 = vrcp.pop %v3319
    %v3321 = vmul.f32 %v3319, %v3320
    %v3322 = vsub.f32 1.0, %v3321
    %v3323 = vmul.f32 %v3320, %v3322
    %v3324 = vadd.f32 %v3320, %v3323
    %vm3325 = vweird.f32 %v3319
    %vm3326 = vweird.f32 %v3320
    %vm3327 = vmor %vm3325, %vm3326
    %v3328 = vsel %vm3327, %v3320, %v3324
    %v3329 = vand.u32 2147483647, %v3319
    %vm3330 = vcmp.eq.f32.partialorder %v3329, 8.507059e+37
    %v3331 = vand.u32 %v3319, 2147483648
    %v3332 = vor.u32 1.1754944e-38, %v3331
    %v3333 = vsel %vm3330, %v3332, %v3328
    %v3334 = vmul.f32 1.0, %v3333
    %v3335 = vadd.f32 %v3313, %v3008
    %3337 = vrot.lane.b32.xlu0 %v3335, 64
    %v3338 = vpop.permute.xlu0 %3337
    %v3340 = vmul.f32 %v3334, %v3338
    %3342 = vrot.lane.b32.xlu0 %v3340, 64
    %v3343 = vpop.permute.xlu0 %3342
    %v3345 = vadd.f32 %v2951, %v3343
    %v3346 = vtanh.pop %v3345
    %v3347 = vsub.f32 1.0, %v3334
    %3349 = vrot.lane.b32.xlu0 %v3346, 96
    %v3350 = vpop.permute.xlu0 %3349
    %v3352 = vmul.f32 %v3347, %v3350
    %v3353 = vmul.f32 %v3334, %v3289
    %v3354 = vadd.f32 %v3352, %v3353
    %3356 = vrot.lane.b32.xlu0 %v3354, 96
    %v3357 = vpop.permute.xlu0 %3356
    %v3358 = vsel %vm2879, %v3357, 0
    %3360 = vmatpush.msra.mxu0 0.0
    %3361 = vmatpush.msra.mxu0 0.0
    %3362 = vmatpush.msra.mxu0 0.0
    %3363 = vmatpush.msra.mxu0 0.0
    %3364 = vmatpush.msra.mxu0 0.0
    %3365 = vmatpush.msra.mxu0 0.0
    %3366 = vmatpush.msra.mxu0 0.0
    %3367 = vmatpush.msra.mxu0 0.0
    %3368 = vmatpush.msra.mxu0 0.0
    %3369 = vmatpush.msra.mxu0 0.0
    %3370 = vmatpush.msra.mxu0 0.0
    %3371 = vmatpush.msra.mxu0 0.0
    %3372 = vmatpush.msra.mxu0 %v2960
    %3373 = vmatpush.msra.mxu0 %v2959
    %3374 = vmatpush.msra.mxu0 %v2958
    %3375 = vmatpush.msra.mxu0 %v2957
    %3376 = vmatmul.f32.gmra.mxu0 %v3358
    %v3377 = vpop.f32.mrf.mxu0
    %v3378 = vadd.f32 0.0, %v3377
    %3379 = vdwg.mxu0
    %v3380 = vadd.f32 %v2950, %v3378
    %v3381 = vxor.u32 %v3380, 2147483648
    %v3382 = vmul.f32 %v3381, 1.442695
    %v3383 = vpow.pop %v3382
    %v3384 = vadd.f32 %v3383, 1.0
    %v3385 = vrcp.pop %v3384
    %v3386 = vmul.f32 %v3384, %v3385
    %v3387 = vsub.f32 1.0, %v3386
    %v3388 = vmul.f32 %v3385, %v3387
    %v3389 = vadd.f32 %v3385, %v3388
    %vm3390 = vweird.f32 %v3384
    %vm3391 = vweird.f32 %v3385
    %vm3392 = vmor %vm3390, %vm3391
    %v3393 = vsel %vm3392, %v3385, %v3389
    %v3394 = vand.u32 2147483647, %v3384
    %vm3395 = vcmp.eq.f32.partialorder %v3394, 8.507059e+37
    %v3396 = vand.u32 %v3384, 2147483648
    %v3397 = vor.u32 1.1754944e-38, %v3396
    %v3398 = vsel %vm3395, %v3397, %v3393
    %v3399 = vmul.f32 1.0, %v3398
    %v3400 = vadd.f32 %v3378, %v3008
    %3402 = vrot.lane.b32.xlu0 %v3400, 64
    %v3403 = vpop.permute.xlu0 %3402
    %v3405 = vmul.f32 %v3399, %v3403
    %3407 = vrot.lane.b32.xlu0 %v3405, 64
    %v3408 = vpop.permute.xlu0 %3407
    %v3410 = vadd.f32 %v2950, %v3408
    %v3411 = vtanh.pop %v3410
    %v3412 = vsub.f32 1.0, %v3399
    %3414 = vrot.lane.b32.xlu0 %v3411, 96
    %v3415 = vpop.permute.xlu0 %3414
    %v3417 = vmul.f32 %v3412, %v3415
    %v3418 = vmul.f32 %v3399, %v3354
    %v3419 = vadd.f32 %v3417, %v3418
    %3421 = vrot.lane.b32.xlu0 %v3419, 96
    %v3422 = vpop.permute.xlu0 %3421
    %v3423 = vsel %vm2879, %v3422, 0
    %3425 = vmatpush.msra.mxu0 0.0
    %3426 = vmatpush.msra.mxu0 0.0
    %3427 = vmatpush.msra.mxu0 0.0
    %3428 = vmatpush.msra.mxu0 0.0
    %3429 = vmatpush.msra.mxu0 0.0
    %3430 = vmatpush.msra.mxu0 0.0
    %3431 = vmatpush.msra.mxu0 0.0
    %3432 = vmatpush.msra.mxu0 0.0
    %3433 = vmatpush.msra.mxu0 0.0
    %3434 = vmatpush.msra.mxu0 0.0
    %3435 = vmatpush.msra.mxu0 0.0
    %3436 = vmatpush.msra.mxu0 0.0
    %3437 = vmatpush.msra.mxu0 %v2960
    %3438 = vmatpush.msra.mxu0 %v2959
    %3439 = vmatpush.msra.mxu0 %v2958
    %3440 = vmatpush.msra.mxu0 %v2957
    %3441 = vmatmul.f32.gmra.mxu0 %v3423
    %v3442 = vpop.f32.mrf.mxu0
    %v3443 = vadd.f32 0.0, %v3442
    %3444 = vdwg.mxu0
    %v3445 = vadd.f32 %v2949, %v3443
    %v3446 = vxor.u32 %v3445, 2147483648
    %v3447 = vmul.f32 %v3446, 1.442695
    %v3448 = vpow.pop %v3447
    %v3449 = vadd.f32 %v3448, 1.0
    %v3450 = vrcp.pop %v3449
    %v3451 = vmul.f32 %v3449, %v3450
    %v3452 = vsub.f32 1.0, %v3451
    %v3453 = vmul.f32 %v3450, %v3452
    %v3454 = vadd.f32 %v3450, %v3453
    %vm3455 = vweird.f32 %v3449
    %vm3456 = vweird.f32 %v3450
    %vm3457 = vmor %vm3455, %vm3456
    %v3458 = vsel %vm3457, %v3450, %v3454
    %v3459 = vand.u32 2147483647, %v3449
    %vm3460 = vcmp.eq.f32.partialorder %v3459, 8.507059e+37
    %v3461 = vand.u32 %v3449, 2147483648
    %v3462 = vor.u32 1.1754944e-38, %v3461
    %v3463 = vsel %vm3460, %v3462, %v3458
    %v3464 = vmul.f32 1.0, %v3463
    %v3465 = vadd.f32 %v3443, %v3008
    %3467 = vrot.lane.b32.xlu0 %v3465, 64
    %v3468 = vpop.permute.xlu0 %3467
    %v3470 = vmul.f32 %v3464, %v3468
    %3472 = vrot.lane.b32.xlu0 %v3470, 64
    %v3473 = vpop.permute.xlu0 %3472
    %v3475 = vadd.f32 %v2949, %v3473
    %v3476 = vtanh.pop %v3475
    %v3477 = vsub.f32 1.0, %v3464
    %3479 = vrot.lane.b32.xlu0 %v3476, 96
    %v3480 = vpop.permute.xlu0 %3479
    %v3482 = vmul.f32 %v3477, %v3480
    %v3483 = vmul.f32 %v3464, %v3419
    %v3484 = vadd.f32 %v3482, %v3483
    %v3485 = vld [vmem:[%s12] sm:$0xff]
    %v3486 = vld [vmem:[%s12 + $0x8] sm:$0xff]
    %v3487 = vld [vmem:[%s12 + $0x10] sm:$0xff]
    %v3488 = vld [vmem:[%s12 + $0x18] sm:$0xff]
    %v3489 = vld [vmem:[%s13] sm:$0x1]
    %v3491 = vperm.slane %v3489, 0
    %3494 = vrot.lane.b32.xlu0 %v3484, 96
    %v3495 = vpop.permute.xlu0 %3494
    %v3496 = vsel %vm2879, %v3495, 0
    %3498 = vmatpush.msra.mxu0 0.0
    %3499 = vmatpush.msra.mxu0 0.0
    %3500 = vmatpush.msra.mxu0 0.0
    %3501 = vmatpush.msra.mxu0 0.0
    %3502 = vmatpush.msra.mxu0 0.0
    %3503 = vmatpush.msra.mxu0 0.0
    %3504 = vmatpush.msra.mxu0 0.0
    %3505 = vmatpush.msra.mxu0 0.0
    %3506 = vmatpush.msra.mxu0 0.0
    %3507 = vmatpush.msra.mxu0 0.0
    %3508 = vmatpush.msra.mxu0 0.0
    %3509 = vmatpush.msra.mxu0 0.0
    %3510 = vmatpush.msra.mxu0 %v3488
    %3511 = vmatpush.msra.mxu0 %v3487
    %3512 = vmatpush.msra.mxu0 %v3486
    %3513 = vmatpush.msra.mxu0 %v3485
    %3514 = vmatmul.f32.gmra.mxu0 %v3496
    %v3515 = vpop.f32.mrf.mxu0
    %v3516 = vadd.f32 %v3491, %v3515
    %3517 = vdwg.mxu0
    %vm3518 = vcmask 254976
    %3519 = vst.msk [vmem:[#allocation2] sm:$0x3] %vm3518, %v3516
    // Predicated region
    $region58: #{rollout_encoder_forward.1} parent=1 // pred_check
      _
    $region59: #{rollout_encoder_forward.1} parent=1 // pred_check_branch
      %3521 = sbr.rel (0) target = $region61
    $region60: #{rollout_encoder_forward.1} parent=1 // pred_region
      %3523 = vsyncadd [#allocation3], 0
      %s3525 = sshll.u32 [#allocation2], 4
      %s3526 = int_to_ptr.vmem [resolvable:$true] %s3525
      %s3527 = sshll.u32 %s14, 4
      %s3528 = int_to_ptr.hbm [resolvable:$true] %s3527
      %3530 = dma.vmem_to_hbm [thread:$0]  %s3526, 32, %s3528, [#allocation3]
    $region61: #{rollout_encoder_forward.1} parent=1 // pred_fallthru
      _
    // Predicated region
    $region62: #{rollout_encoder_forward.1} parent=1 // pred_check
      _
    $region63: #{rollout_encoder_forward.1} parent=1 // pred_check_branch
      %3532 = sbr.rel (0) target = $region65
    $region64: #{rollout_encoder_forward.1} parent=1 // pred_region
      %3534 = dma.done [#allocation3], 32
    $region65: #{rollout_encoder_forward.1} parent=1 // pred_fallthru
      _
    %3535 = vsyncpa [#allocation3], 1

</llo_original>
